<compile_context>
chip_gen: v7x
topology: tpu7x:2x2x1
jax: 0.10.0
libtpu: 0.0.40
codegen_flags: <defaults>
</compile_context>

<pallas_src>
import functools

import jax
import jax.numpy as jnp
from jax.experimental import pallas as pl
from jax.experimental.pallas import tpu as pltpu


# tile targets (clamped to actual dims).  Double-buffered inputs + f32
# accumulator stay well under the default scoped VMEM on every generation
# (v5e 16 MiB, v6e 32 MiB, v7x 32 MiB of 64 MiB physical).
TM, TN, TK = 256, 256, 512
LN_EPS = 1e-5


def _round_up(x, m):
    return ((x + m - 1) // m) * m


def _pick_tile(dim, target, align):
    """Largest tile <= target that is a multiple of `align`, preferring tiles
    that divide `dim` exactly (no padding).  Returns (tile, padded_dim)."""
    if dim <= target:
        return dim, dim                       # single full-extent block
    best = None
    for t in range(target, align - 1, -align):
        if dim % t == 0:
            best = t
            break
    if best is not None and best * 4 >= target:
        return best, dim
    return target, _round_up(dim, target)


def _pad_to(x, rows, cols):
    pr, pc = rows - x.shape[0], cols - x.shape[1]
    if pr or pc:
        x = jnp.pad(x, ((0, pr), (0, pc)))
    return x


# ----------------------------- fused linear kernels -----------------------------

def _make_plain_kernel(has_bias, has_res, act):
    """Tiled y = act(x @ w + b) + res with K-axis accumulation (3-D grid)."""
    def kernel(*refs):
        idx = 0
        x_ref = refs[idx]; idx += 1
        w_ref = refs[idx]; idx += 1
        b_ref = refs[idx] if has_bias else None; idx += int(has_bias)
        r_ref = refs[idx] if has_res else None; idx += int(has_res)
        o_ref, acc_ref = refs[idx], refs[idx + 1]

        @pl.when(pl.program_id(2) == 0)
        def _init():
            acc_ref[...] = jnp.zeros_like(acc_ref)

        acc_ref[...] += jnp.dot(x_ref[...].astype(jnp.bfloat16), w_ref[...],
                                preferred_element_type=jnp.float32)

        @pl.when(pl.program_id(2) == pl.num_programs(2) - 1)
        def _finalize():
            y = acc_ref[...]
            if has_bias:
                y = y + b_ref[...]
            if act == "quick_gelu":
                y = y * jax.nn.sigmoid(1.702 * y)
            if has_res:
                y = y + r_ref[...]
            o_ref[...] = y

    return kernel


def _make_ln_kernel(has_bias, has_res, act, eps):
    """Tiled y = act(LN(x) @ w + b) + res; LN needs full rows so K is a single
    full-extent block (2-D grid over M and N tiles)."""
    def kernel(*refs):
        idx = 0
        x_ref = refs[idx]; idx += 1
        g_ref = refs[idx]; idx += 1
        beta_ref = refs[idx]; idx += 1
        w_ref = refs[idx]; idx += 1
        b_ref = refs[idx] if has_bias else None; idx += int(has_bias)
        r_ref = refs[idx] if has_res else None; idx += int(has_res)
        o_ref = refs[idx]

        x = x_ref[...]                                        # (tm, K) f32
        mean = jnp.mean(x, axis=-1, keepdims=True)
        var = jnp.mean(jnp.square(x - mean), axis=-1, keepdims=True)
        xn = (x - mean) * jax.lax.rsqrt(var + eps) * g_ref[...] + beta_ref[...]
        y = jnp.dot(xn.astype(jnp.bfloat16), w_ref[...],
                    preferred_element_type=jnp.float32)
        if has_bias:
            y = y + b_ref[...]
        if act == "quick_gelu":
            y = y * jax.nn.sigmoid(1.702 * y)
        if has_res:
            y = y + r_ref[...]
        o_ref[...] = y

    return kernel


def fused_linear(x, w, b=None, ln=None, residual=None, act=None):
    """y = act(LN(x) @ w + b) + residual.  x, b, residual f32; w stored bf16."""
    M, K = x.shape
    N = w.shape[1]
    has_bias = b is not None
    has_res = residual is not None
    tm, Mp = _pick_tile(M, TM, 8)
    tn, Np = _pick_tile(N, TN, 128)

    if ln is not None:
        # LayerNorm fused -> full-K block per M tile.
        g, beta = ln
        xp = _pad_to(x, Mp, K)
        wp = _pad_to(w, K, Np)
        in_specs = [
            pl.BlockSpec((tm, K), lambda i, j: (i, 0)),
            pl.BlockSpec((1, K), lambda i, j: (0, 0)),
            pl.BlockSpec((1, K), lambda i, j: (0, 0)),
            pl.BlockSpec((K, tn), lambda i, j: (0, j)),
        ]
        args = [xp, g.reshape(1, K).astype(jnp.float32),
                beta.reshape(1, K).astype(jnp.float32), wp]
        if has_bias:
            in_specs.append(pl.BlockSpec((1, tn), lambda i, j: (0, j)))
            args.append(_pad_to(b.reshape(1, N).astype(jnp.float32), 1, Np))
        if has_res:
            in_specs.append(pl.BlockSpec((tm, tn), lambda i, j: (i, j)))
            args.append(_pad_to(residual, Mp, Np))
        out = pl.pallas_call(
            _make_ln_kernel(has_bias, has_res, act, LN_EPS),
            grid=(Mp // tm, Np // tn),
            in_specs=in_specs,
            out_specs=pl.BlockSpec((tm, tn), lambda i, j: (i, j)),
            out_shape=jax.ShapeDtypeStruct((Mp, Np), jnp.float32),
            compiler_params=pltpu.CompilerParams(
                dimension_semantics=("parallel", "parallel")),
        )(*args)
        return out[:M, :N]

    tk, Kp = _pick_tile(K, TK, 128)
    xp = _pad_to(x, Mp, Kp)
    wp = _pad_to(w, Kp, Np)
    in_specs = [
        pl.BlockSpec((tm, tk), lambda i, j, k: (i, k)),
        pl.BlockSpec((tk, tn), lambda i, j, k: (k, j)),
    ]
    args = [xp, wp]
    if has_bias:
        in_specs.append(pl.BlockSpec((1, tn), lambda i, j, k: (0, j)))
        args.append(_pad_to(b.reshape(1, N).astype(jnp.float32), 1, Np))
    if has_res:
        in_specs.append(pl.BlockSpec((tm, tn), lambda i, j, k: (i, j)))
        args.append(_pad_to(residual, Mp, Np))
    out = pl.pallas_call(
        _make_plain_kernel(has_bias, has_res, act),
        grid=(Mp // tm, Np // tn, Kp // tk),
        in_specs=in_specs,
        out_specs=pl.BlockSpec((tm, tn), lambda i, j, k: (i, j)),
        out_shape=jax.ShapeDtypeStruct((Mp, Np), jnp.float32),
        scratch_shapes=[pltpu.VMEM((tm, tn), jnp.float32)],
        compiler_params=pltpu.CompilerParams(
            dimension_semantics=("parallel", "parallel", "arbitrary")),
    )(*args)
    return out[:M, :N]


# ----------------------------- standalone LayerNorm (ln_pre) -----------------------------

def _ln_only_kernel(x_ref, g_ref, b_ref, o_ref, *, eps):
    x = x_ref[...]
    mean = jnp.mean(x, axis=-1, keepdims=True)
    var = jnp.mean(jnp.square(x - mean), axis=-1, keepdims=True)
    o_ref[...] = (x - mean) * jax.lax.rsqrt(var + eps) * g_ref[...] + b_ref[...]


def pallas_layernorm(x, g, b, eps=LN_EPS):
    shape = x.shape
    D = shape[-1]
    x2 = x.reshape(-1, D)
    M = x2.shape[0]
    tm, Mp = _pick_tile(M, TM, 8)
    xp = x2 if Mp == M else jnp.pad(x2, ((0, Mp - M), (0, 0)))
    out = pl.pallas_call(
        functools.partial(_ln_only_kernel, eps=eps),
        grid=(Mp // tm,),
        in_specs=[pl.BlockSpec((tm, D), lambda i: (i, 0)),
                  pl.BlockSpec((1, D), lambda i: (0, 0)),
                  pl.BlockSpec((1, D), lambda i: (0, 0))],
        out_specs=pl.BlockSpec((tm, D), lambda i: (i, 0)),
        out_shape=jax.ShapeDtypeStruct((Mp, D), jnp.float32),
        compiler_params=pltpu.CompilerParams(dimension_semantics=("parallel",)),
    )(xp, g.reshape(1, D), b.reshape(1, D))
    return out[:M].reshape(shape)


# ----------------------------- attention -----------------------------

def _make_attn_kernel(heads, Dh, scale, causal):
    D = heads * Dh

    def kernel(*refs):
        if causal:
            mask_ref, qkv_ref, o_ref = refs
            mask = mask_ref[...]
        else:
            qkv_ref, o_ref = refs
            mask = None
        qkv = qkv_ref[0]                           # (S, 3D) f32
        outs = []
        for h in range(heads):                     # static lane slices per head
            q = qkv[:, h * Dh:(h + 1) * Dh].astype(jnp.bfloat16)
            k = qkv[:, D + h * Dh:D + (h + 1) * Dh].astype(jnp.bfloat16)
            v = qkv[:, 2 * D + h * Dh:2 * D + (h + 1) * Dh].astype(jnp.bfloat16)
            s = jax.lax.dot_general(q, k, (((1,), (1,)), ((), ())),
                                    preferred_element_type=jnp.float32) * scale
            if mask is not None:
                s = s + mask
            s = s - jnp.max(s, axis=-1, keepdims=True)
            p = jnp.exp(s)
            p = p * pl.reciprocal(jnp.sum(p, axis=-1, keepdims=True), approx=True)
            outs.append(jnp.dot(p.astype(jnp.bfloat16), v,
                                preferred_element_type=jnp.float32))
        o_ref[0] = jnp.concatenate(outs, axis=-1)  # single lane-dense (S, D) store

    return kernel


def pallas_attention(qkv, heads, causal):
    """qkv: (B, S, 3D) packed slab -> (B, S, D)."""
    B, S, threeD = qkv.shape
    D = threeD // 3
    Dh = D // heads
    in_specs = []
    args = []
    if causal:
        row = jax.lax.broadcasted_iota(jnp.int32, (S, S), 0)
        col = jax.lax.broadcasted_iota(jnp.int32, (S, S), 1)
        mask = jnp.where(col <= row, 0.0, -1e30).astype(jnp.float32)
        in_specs.append(pl.BlockSpec((S, S), lambda b: (0, 0)))
        args.append(mask)
    in_specs.append(pl.BlockSpec((1, S, threeD), lambda b: (b, 0, 0)))
    args.append(qkv)
    return pl.pallas_call(
        _make_attn_kernel(heads, Dh, 1.0 / (Dh ** 0.5), causal),
        grid=(B,),
        in_specs=in_specs,
        out_specs=pl.BlockSpec((1, S, D), lambda b: (b, 0, 0)),
        out_shape=jax.ShapeDtypeStruct((B, S, D), jnp.float32),
        compiler_params=pltpu.CompilerParams(dimension_semantics=("parallel",)),
    )(*args)


# ----------------------------- patch embed (conv1 + cls + pos fused) -----------------------------

def _embed_kernel(p_ref, w_ref, cls_ref, pos_ref, o_ref):
    x = jnp.dot(p_ref[0].astype(jnp.bfloat16), w_ref[...],
                preferred_element_type=jnp.float32)           # (npatch, Dv)
    o_ref[0] = jnp.concatenate([cls_ref[...], x], axis=0) + pos_ref[...]


def patch_embed(cfg, params, image):
    # conv1 has stride == kernel == P and no bias -> patchify + matmul.
    B, C, H, W = image.shape
    P, Dv = cfg["P"], cfg["Dv"]
    gh, gw = H // P, W // P
    npatch = gh * gw
    cpp = C * P * P
    patches = image.reshape(B, C, gh, P, gw, P).transpose(0, 2, 4, 1, 3, 5)
    patches = patches.reshape(B, npatch, cpp)
    cls = params["class_emb"].reshape(1, Dv).astype(jnp.float32)
    pos = params["pos_emb_v"].astype(jnp.float32)             # (1+npatch, Dv)
    return pl.pallas_call(
        _embed_kernel,
        grid=(B,),
        in_specs=[pl.BlockSpec((1, npatch, cpp), lambda b: (b, 0, 0)),
                  pl.BlockSpec((cpp, Dv), lambda b: (0, 0)),
                  pl.BlockSpec((1, Dv), lambda b: (0, 0)),
                  pl.BlockSpec((1 + npatch, Dv), lambda b: (0, 0))],
        out_specs=pl.BlockSpec((1, 1 + npatch, Dv), lambda b: (b, 0, 0)),
        out_shape=jax.ShapeDtypeStruct((B, 1 + npatch, Dv), jnp.float32),
        compiler_params=pltpu.CompilerParams(dimension_semantics=("parallel",)),
    )(patches, params["conv1_w_mat"], cls, pos)


# ----------------------------- CLIP logits -----------------------------

def _logits_kernel(img_ref, txt_ref, scale_ref, o_ref):
    img = img_ref[...]
    txt = txt_ref[...]
    img = img * jax.lax.rsqrt(jnp.sum(img * img, axis=-1, keepdims=True))
    txt = txt * jax.lax.rsqrt(jnp.sum(txt * txt, axis=-1, keepdims=True))
    o_ref[...] = scale_ref[0, 0] * jax.lax.dot_general(
        img, txt, (((1,), (1,)), ((), ())), preferred_element_type=jnp.float32)


def pallas_clip_logits(img_feat, txt_feat, logit_scale):
    B = img_feat.shape[0]
    C = txt_feat.shape[0]
    return pl.pallas_call(
        _logits_kernel,
        out_shape=jax.ShapeDtypeStruct((B, C), jnp.float32),
        in_specs=[pl.BlockSpec(memory_space=pltpu.MemorySpace.VMEM),
                  pl.BlockSpec(memory_space=pltpu.MemorySpace.VMEM),
                  pl.BlockSpec(memory_space=pltpu.MemorySpace.SMEM)],
        out_specs=pl.BlockSpec(memory_space=pltpu.MemorySpace.VMEM),
    )(img_feat, txt_feat, jnp.reshape(logit_scale.astype(jnp.float32), (1, 1)))


# ----------------------------- model glue (JAX) -----------------------------

def transformer_block(x, p, heads, causal):
    B, S, D = x.shape
    x2 = x.reshape(B * S, D)
    # ln1 fused into the QKV projection; QKV consumed as a single packed slab.
    qkv = fused_linear(x2, p["in_w"], p["in_b"], ln=(p["ln1_g"], p["ln1_b"]))
    attn = pallas_attention(qkv.reshape(B, S, 3 * D), heads, causal)
    # out-projection with the residual add fused in.
    x2 = fused_linear(attn.reshape(B * S, D), p["out_w"], p["out_b"], residual=x2)
    # MLP: ln2 fused into fc1 (+QuickGELU); residual fused into fc2.
    h = fused_linear(x2, p["fc1_w"], p["fc1_b"],
                     ln=(p["ln2_g"], p["ln2_b"]), act="quick_gelu")
    x2 = fused_linear(h, p["fc2_w"], p["fc2_b"], residual=x2)
    return x2.reshape(B, S, D)


def prompt_learner(ctx, prefix, suffix):
    # prompts = cat([prefix, ctx, suffix], dim=1)
    n_cls = prefix.shape[0]
    ctx_e = jnp.broadcast_to(ctx[None], (n_cls,) + ctx.shape)
    return jnp.concatenate([prefix, ctx_e, suffix], axis=1)


def encode_text(cfg, params, prompts, tokenized):
    x = prompts + params["pos_emb_t"][None]                    # (n_cls, seq, Dt)
    for p in params["text_layers"]:
        x = transformer_block(x, p, cfg["heads_t"], causal=True)
    eot = jnp.argmax(tokenized, axis=-1)
    feats = x[jnp.arange(x.shape[0]), eot]                      # (n_cls, Dt)
    # ln_final fused into the text projection (LN is per-position, so
    # gather-then-normalize == normalize-then-gather).
    return fused_linear(feats, params["text_proj"],
                        ln=(params["ln_final_g"], params["ln_final_b"]))


def vision_prompt_learner(cfg, params, x_emb):
    B = x_emb.shape[0]
    ctx = jnp.broadcast_to(params["ctx_v"][None], (B,) + params["ctx_v"].shape)
    return x_emb, ctx


def vision_encoder(cfg, params, x, ctx_v):
    n_pro, layer_p = cfg["n_pro"], cfg["layer_p"]
    x = jnp.concatenate([x, ctx_v[:, 0]], axis=1)
    x = pallas_layernorm(x, params["ln_pre_g"], params["ln_pre_b"])
    for i, p in enumerate(params["vision_layers"]):
        if 1 <= i < layer_p:
            x = jnp.concatenate([x[:, :-n_pro], ctx_v[:, i]], axis=1)
        x = transformer_block(x, p, cfg["heads_v"], causal=False)
    # ln_post fused into the visual projection, applied to the CLS token only.
    return fused_linear(x[:, 0], params["visual_proj"],
                        ln=(params["ln_post_g"], params["ln_post_b"]))


def custom_clip_forward(cfg, params, image, compute_domain_text=False):
    # eval-mode branch of CustomCLIP.forward
    prompts = prompt_learner(params["ctx_cls"], params["prefix_cls"], params["suffix_cls"])
    text_features = encode_text(cfg, params, prompts, params["tokenized_cls"])
    if compute_domain_text:
        # The reference eval branch computes domain text features but never
        # uses them in the returned logits -> skipped by default (perf).
        prompts_dom = prompt_learner(params["ctx_dom"], params["prefix_dom"],
                                     params["suffix_dom"])
        _ = encode_text(cfg, params, prompts_dom, params["tokenized_dom"])

    x_emb = patch_embed(cfg, params, image)          # conv1 + cls token + pos-emb fused
    x, ctx_v = vision_prompt_learner(cfg, params, x_emb)
    image_features = vision_encoder(cfg, params, x, ctx_v)

    logit_scale = jnp.exp(params["logit_scale"])
    # feature normalization of both sides fused inside the logits kernel
    return pallas_clip_logits(image_features, text_features, logit_scale)


# ----------------------------- parameter init -----------------------------

def _make_layer(key, D):
    ks = jax.random.split(key, 4)
    s = 0.02
    return dict(
        ln1_g=jnp.ones((D,), jnp.float32), ln1_b=jnp.zeros((D,), jnp.float32),
        in_w=(jax.random.normal(ks[0], (D, 3 * D)) * s).astype(jnp.bfloat16),
        in_b=jnp.zeros((3 * D,), jnp.float32),
        out_w=(jax.random.normal(ks[1], (D, D)) * s).astype(jnp.bfloat16),
        out_b=jnp.zeros((D,), jnp.float32),
        ln2_g=jnp.ones((D,), jnp.float32), ln2_b=jnp.zeros((D,), jnp.float32),
        fc1_w=(jax.random.normal(ks[2], (D, 4 * D)) * s).astype(jnp.bfloat16),
        fc1_b=jnp.zeros((4 * D,), jnp.float32),
        fc2_w=(jax.random.normal(ks[3], (4 * D, D)) * s).astype(jnp.bfloat16),
        fc2_b=jnp.zeros((D,), jnp.float32),
    )


def _make_tokenized(n, seq, eot_positions):
    t = jnp.zeros((n, seq), dtype=jnp.int32)
    t = t.at[:, 0].set(49406)
    for i, e in enumerate(eot_positions):
        t = t.at[i, e].set(49407)
    return t


def init_model(key):
    cfg = dict(B=2, C=3, H=16, W=16, P=8, Dv=32, heads_v=4, Dt=32, heads_t=4,
               E=32, Lv=2, Lt=2, n_cls=3, n_dom=2, n_ctx=4, seq_t=8,
               n_pro=12, layer_p=12)
    ks = iter(jax.random.split(key, 32))
    s = 0.02
    Dv, Dt, E = cfg["Dv"], cfg["Dt"], cfg["E"]
    n_patches = (cfg["H"] // cfg["P"]) * (cfg["W"] // cfg["P"])
    suffix_len = cfg["seq_t"] - 1 - cfg["n_ctx"]

    conv1_w = (jax.random.normal(next(ks), (Dv, cfg["C"], cfg["P"], cfg["P"])) * s)
    params = dict(
        # vision
        conv1_w_mat=conv1_w.reshape(Dv, cfg["C"] * cfg["P"] * cfg["P"]).T.astype(jnp.bfloat16),
        class_emb=(jax.random.normal(next(ks), (Dv,)) * s).astype(jnp.float32),
        pos_emb_v=(jax.random.normal(next(ks), (1 + n_patches, Dv)) * s).astype(jnp.float32),
        ln_pre_g=jnp.ones((Dv,), jnp.float32), ln_pre_b=jnp.zeros((Dv,), jnp.float32),
        vision_layers=[_make_layer(next(ks), Dv) for _ in range(cfg["Lv"])],
        ln_post_g=jnp.ones((Dv,), jnp.float32), ln_post_b=jnp.zeros((Dv,), jnp.float32),
        visual_proj=(jax.random.normal(next(ks), (Dv, E)) * s).astype(jnp.bfloat16),
        ctx_v=(jax.random.normal(next(ks), (cfg["layer_p"], cfg["n_pro"], Dv)) * s).astype(jnp.float32),
        # text
        pos_emb_t=(jax.random.normal(next(ks), (cfg["seq_t"], Dt)) * s).astype(jnp.float32),
        text_layers=[_make_layer(next(ks), Dt) for _ in range(cfg["Lt"])],
        ln_final_g=jnp.ones((Dt,), jnp.float32), ln_final_b=jnp.zeros((Dt,), jnp.float32),
        text_proj=(jax.random.normal(next(ks), (Dt, E)) * s).astype(jnp.bfloat16),
        # class prompt learner
        ctx_cls=(jax.random.normal(next(ks), (cfg["n_ctx"], Dt)) * s).astype(jnp.float32),
        prefix_cls=(jax.random.normal(next(ks), (cfg["n_cls"], 1, Dt)) * s).astype(jnp.float32),
        suffix_cls=(jax.random.normal(next(ks), (cfg["n_cls"], suffix_len, Dt)) * s).astype(jnp.float32),
        tokenized_cls=_make_tokenized(cfg["n_cls"], cfg["seq_t"], [6, 7, 6]),
        # domain prompt learner (kept for completeness; unused in eval output)
        ctx_dom=(jax.random.normal(next(ks), (cfg["n_ctx"], Dt)) * s).astype(jnp.float32),
        prefix_dom=(jax.random.normal(next(ks), (cfg["n_dom"], 1, Dt)) * s).astype(jnp.float32),
        suffix_dom=(jax.random.normal(next(ks), (cfg["n_dom"], suffix_len, Dt)) * s).astype(jnp.float32),
        tokenized_dom=_make_tokenized(cfg["n_dom"], cfg["seq_t"], [6, 7]),
        # logit scale (CLIP init: ln(1/0.07))
        logit_scale=jnp.asarray(4.6052, jnp.float32),
    )
    return cfg, params


# ----------------------------- main -----------------------------

if __name__ == "__main__":
    key = jax.random.PRNGKey(0)
    kp, kx = jax.random.split(key)
    cfg, params = init_model(kp)
    image = jax.random.normal(kx, (cfg["B"], cfg["C"], cfg["H"], cfg["W"]),
                              dtype=jnp.float32)
    forward = jax.jit(functools.partial(custom_clip_forward, cfg))
    logits = forward(params, image)
    logits = jax.block_until_ready(logits)
    assert logits.shape == (cfg["B"], cfg["n_cls"])
    assert bool(jnp.all(jnp.isfinite(logits)))
    print("KERNEL_OK")
</pallas_src>

<mosaic_0001>
module attributes {stable_mosaic.version = 11 : i64} {
  func.func @_embed_kernel(%arg0: i32, %arg1: memref<1x4x192xf32, #tpu.memory_space<vmem>>, %arg2: memref<192x32xbf16, #tpu.memory_space<vmem>>, %arg3: memref<1x32xf32, #tpu.memory_space<vmem>>, %arg4: memref<5x32xf32, #tpu.memory_space<vmem>>, %arg5: memref<1x5x32xf32, #tpu.memory_space<vmem>>) attributes {dimension_semantics = [#tpu.dimension_semantics<parallel>], iteration_bounds = array<i64: 2>, scalar_prefetch = 0 : i64, scratch_operands = 0 : i64, tpu.core_type = #tpu.core_type<tc>, window_params = [{transform_indices = @transform_0, window_bounds = array<i64: 1, 4, 192>}, {pipeline_mode = #tpu.pipeline_mode<synchronous>, transform_indices = @transform_1, window_bounds = array<i64: 192, 32>}, {pipeline_mode = #tpu.pipeline_mode<synchronous>, transform_indices = @transform_2, window_bounds = array<i64: 1, 32>}, {pipeline_mode = #tpu.pipeline_mode<synchronous>, transform_indices = @transform_3, window_bounds = array<i64: 5, 32>}, {transform_indices = @transform_4, window_bounds = array<i64: 1, 5, 32>}]} {
    %c0 = arith.constant 0 : index
    %c0_0 = arith.constant 0 : index
    %c0_1 = arith.constant 0 : index
    %0 = vector.load %arg1[%c0, %c0_0, %c0_1] : memref<1x4x192xf32, #tpu.memory_space<vmem>>, vector<1x4x192xf32>
    %1 = vector.shape_cast %0 : vector<1x4x192xf32> to vector<4x192xf32>
    %2 = arith.truncf %1 : vector<4x192xf32> to vector<4x192xbf16>
    %c0_2 = arith.constant 0 : index
    %c0_3 = arith.constant 0 : index
    %3 = vector.load %arg2[%c0_2, %c0_3] : memref<192x32xbf16, #tpu.memory_space<vmem>>, vector<192x32xbf16>
    %cst = arith.constant dense<0.000000e+00> : vector<4x32xf32>
    %4 = tpu.matmul %2, %3, %cst {dimension_numbers = #tpu.dot_dimension_numbers<[1], [0], [0], [1], [0, 0, 1, 1], [], []>} : vector<4x192xbf16>, vector<192x32xbf16>, vector<4x32xf32> -> vector<4x32xf32>
    %c0_4 = arith.constant 0 : index
    %c0_5 = arith.constant 0 : index
    %5 = vector.load %arg3[%c0_4, %c0_5] : memref<1x32xf32, #tpu.memory_space<vmem>>, vector<1x32xf32>
    %6 = tpu.concatenate %5, %4 in 0 : vector<1x32xf32>, vector<4x32xf32> -> vector<5x32xf32>
    %c0_6 = arith.constant 0 : index
    %c0_7 = arith.constant 0 : index
    %7 = vector.load %arg4[%c0_6, %c0_7] : memref<5x32xf32, #tpu.memory_space<vmem>>, vector<5x32xf32>
    %8 = arith.addf %6, %7 : vector<5x32xf32>
    %c0_8 = arith.constant 0 : index
    %c0_9 = arith.constant 0 : index
    %c0_10 = arith.constant 0 : index
    %9 = vector.load %arg5[%c0_8, %c0_9, %c0_10] : memref<1x5x32xf32, #tpu.memory_space<vmem>>, vector<1x5x32xf32>
    %10 = vector.shape_cast %9 : vector<1x5x32xf32> to vector<5x32xf32>
    %11 = vector.shape_cast %8 : vector<5x32xf32> to vector<1x5x32xf32>
    tpu.vector_store %arg5[%c0_8, %c0_9, %c0_10], %11 {strides = array<i32>} : memref<1x5x32xf32, #tpu.memory_space<vmem>>, vector<1x5x32xf32>,
    return
  }
  func.func @transform_0(%arg0: i32) -> (i32, i32, i32) {
    %c0_i32 = arith.constant 0 : i32
    %c0_i32_0 = arith.constant 0 : i32
    %c0_i32_1 = arith.constant 0 : i32
    return %arg0, %c0_i32, %c0_i32_0 : i32, i32, i32
  }
  func.func @transform_1(%arg0: i32) -> (i32, i32) {
    %c0_i32 = arith.constant 0 : i32
    %c0_i32_0 = arith.constant 0 : i32
    %c0_i32_1 = arith.constant 0 : i32
    return %c0_i32, %c0_i32_0 : i32, i32
  }
  func.func @transform_2(%arg0: i32) -> (i32, i32) {
    %c0_i32 = arith.constant 0 : i32
    %c0_i32_0 = arith.constant 0 : i32
    %c0_i32_1 = arith.constant 0 : i32
    return %c0_i32, %c0_i32_0 : i32, i32
  }
  func.func @transform_3(%arg0: i32) -> (i32, i32) {
    %c0_i32 = arith.constant 0 : i32
    %c0_i32_0 = arith.constant 0 : i32
    %c0_i32_1 = arith.constant 0 : i32
    return %c0_i32, %c0_i32_0 : i32, i32
  }
  func.func @transform_4(%arg0: i32) -> (i32, i32, i32) {
    %c0_i32 = arith.constant 0 : i32
    %c0_i32_0 = arith.constant 0 : i32
    %c0_i32_1 = arith.constant 0 : i32
    return %arg0, %c0_i32, %c0_i32_0 : i32, i32, i32
  }
}

module attributes {stable_mosaic.version = 11 : i64} {
  func.func @_ln_only_kernel(%arg0: i32, %arg1: memref<34x32xf32, #tpu.memory_space<vmem>>, %arg2: memref<1x32xf32, #tpu.memory_space<vmem>>, %arg3: memref<1x32xf32, #tpu.memory_space<vmem>>, %arg4: memref<34x32xf32, #tpu.memory_space<vmem>>) attributes {dimension_semantics = [#tpu.dimension_semantics<parallel>], iteration_bounds = array<i64: 1>, scalar_prefetch = 0 : i64, scratch_operands = 0 : i64, tpu.core_type = #tpu.core_type<tc>, window_params = [{transform_indices = @transform_0, window_bounds = array<i64: 34, 32>}, {pipeline_mode = #tpu.pipeline_mode<synchronous>, transform_indices = @transform_1, window_bounds = array<i64: 1, 32>}, {pipeline_mode = #tpu.pipeline_mode<synchronous>, transform_indices = @transform_2, window_bounds = array<i64: 1, 32>}, {transform_indices = @transform_3, window_bounds = array<i64: 34, 32>}]} {
    %c0 = arith.constant 0 : index
    %c0_0 = arith.constant 0 : index
    %0 = vector.load %arg1[%c0, %c0_0] : memref<34x32xf32, #tpu.memory_space<vmem>>, vector<34x32xf32>
    %cst = arith.constant dense<0.000000e+00> : vector<34xf32>
    %1 = vector.multi_reduction <add>, %0, %cst [1] : vector<34x32xf32> to vector<34xf32>
    %2 = vector.shape_cast %1 : vector<34xf32> to vector<34x1xf32>
    %cst_1 = arith.constant 3.200000e+01 : f32
    %3 = vector.broadcast %cst_1 : f32 to vector<34x1xf32>
    %4 = arith.divf %2, %3 : vector<34x1xf32>
    %5 = vector.broadcast %4 : vector<34x1xf32> to vector<34x32xf32>
    %6 = arith.subf %0, %5 : vector<34x32xf32>
    %7 = arith.mulf %6, %6 : vector<34x32xf32>
    %cst_2 = arith.constant dense<0.000000e+00> : vector<34xf32>
    %8 = vector.multi_reduction <add>, %7, %cst_2 [1] : vector<34x32xf32> to vector<34xf32>
    %9 = vector.shape_cast %8 : vector<34xf32> to vector<34x1xf32>
    %cst_3 = arith.constant 3.200000e+01 : f32
    %10 = vector.broadcast %cst_3 : f32 to vector<34x1xf32>
    %11 = arith.divf %9, %10 : vector<34x1xf32>
    %12 = vector.broadcast %4 : vector<34x1xf32> to vector<34x32xf32>
    %13 = arith.subf %0, %12 : vector<34x32xf32>
    %cst_4 = arith.constant 9.99999974E-6 : f32
    %14 = vector.broadcast %cst_4 : f32 to vector<34x1xf32>
    %15 = arith.addf %11, %14 : vector<34x1xf32>
    %16 = math.rsqrt %15 : vector<34x1xf32>
    %17 = vector.broadcast %16 : vector<34x1xf32> to vector<34x32xf32>
    %18 = arith.mulf %13, %17 : vector<34x32xf32>
    %c0_5 = arith.constant 0 : index
    %c0_6 = arith.constant 0 : index
    %19 = vector.load %arg2[%c0_5, %c0_6] : memref<1x32xf32, #tpu.memory_space<vmem>>, vector<1x32xf32>
    %20 = vector.broadcast %19 : vector<1x32xf32> to vector<34x32xf32>
    %21 = arith.mulf %18, %20 : vector<34x32xf32>
    %c0_7 = arith.constant 0 : index
    %c0_8 = arith.constant 0 : index
    %22 = vector.load %arg3[%c0_7, %c0_8] : memref<1x32xf32, #tpu.memory_space<vmem>>, vector<1x32xf32>
    %23 = vector.broadcast %22 : vector<1x32xf32> to vector<34x32xf32>
    %24 = arith.addf %21, %23 : vector<34x32xf32>
    %c0_9 = arith.constant 0 : index
    %c0_10 = arith.constant 0 : index
    %25 = vector.load %arg4[%c0_9, %c0_10] : memref<34x32xf32, #tpu.memory_space<vmem>>, vector<34x32xf32>
    tpu.vector_store %arg4[%c0_9, %c0_10], %24 {strides = array<i32>} : memref<34x32xf32, #tpu.memory_space<vmem>>, vector<34x32xf32>,
    return
  }
  func.func @transform_0(%arg0: i32) -> (i32, i32) {
    %c0_i32 = arith.constant 0 : i32
    %c0_i32_0 = arith.constant 0 : i32
    return %arg0, %c0_i32 : i32, i32
  }
  func.func @transform_1(%arg0: i32) -> (i32, i32) {
    %c0_i32 = arith.constant 0 : i32
    %c0_i32_0 = arith.constant 0 : i32
    %c0_i32_1 = arith.constant 0 : i32
    return %c0_i32, %c0_i32_0 : i32, i32
  }
  func.func @transform_2(%arg0: i32) -> (i32, i32) {
    %c0_i32 = arith.constant 0 : i32
    %c0_i32_0 = arith.constant 0 : i32
    %c0_i32_1 = arith.constant 0 : i32
    return %c0_i32, %c0_i32_0 : i32, i32
  }
  func.func @transform_3(%arg0: i32) -> (i32, i32) {
    %c0_i32 = arith.constant 0 : i32
    %c0_i32_0 = arith.constant 0 : i32
    return %arg0, %c0_i32 : i32, i32
  }
}

module attributes {stable_mosaic.version = 11 : i64} {
  func.func @kernel(%arg0: i32, %arg1: i32, %arg2: memref<34x32xf32, #tpu.memory_space<vmem>>, %arg3: memref<1x32xf32, #tpu.memory_space<vmem>>, %arg4: memref<1x32xf32, #tpu.memory_space<vmem>>, %arg5: memref<32x96xbf16, #tpu.memory_space<vmem>>, %arg6: memref<1x96xf32, #tpu.memory_space<vmem>>, %arg7: memref<34x96xf32, #tpu.memory_space<vmem>>) attributes {dimension_semantics = [#tpu.dimension_semantics<parallel>, #tpu.dimension_semantics<parallel>], iteration_bounds = array<i64: 1, 1>, scalar_prefetch = 0 : i64, scratch_operands = 0 : i64, tpu.core_type = #tpu.core_type<tc>, window_params = [{transform_indices = @transform_0, window_bounds = array<i64: 34, 32>}, {pipeline_mode = #tpu.pipeline_mode<synchronous>, transform_indices = @transform_1, window_bounds = array<i64: 1, 32>}, {pipeline_mode = #tpu.pipeline_mode<synchronous>, transform_indices = @transform_2, window_bounds = array<i64: 1, 32>}, {transform_indices = @transform_3, window_bounds = array<i64: 32, 96>}, {transform_indices = @transform_4, window_bounds = array<i64: 1, 96>}, {transform_indices = @transform_5, window_bounds = array<i64: 34, 96>}]} {
    %c0 = arith.constant 0 : index
    %c0_0 = arith.constant 0 : index
    %0 = vector.load %arg2[%c0, %c0_0] : memref<34x32xf32, #tpu.memory_space<vmem>>, vector<34x32xf32>
    %cst = arith.constant dense<0.000000e+00> : vector<34xf32>
    %1 = vector.multi_reduction <add>, %0, %cst [1] : vector<34x32xf32> to vector<34xf32>
    %2 = vector.shape_cast %1 : vector<34xf32> to vector<34x1xf32>
    %cst_1 = arith.constant 3.200000e+01 : f32
    %3 = vector.broadcast %cst_1 : f32 to vector<34x1xf32>
    %4 = arith.divf %2, %3 : vector<34x1xf32>
    %5 = vector.broadcast %4 : vector<34x1xf32> to vector<34x32xf32>
    %6 = arith.subf %0, %5 : vector<34x32xf32>
    %7 = arith.mulf %6, %6 : vector<34x32xf32>
    %cst_2 = arith.constant dense<0.000000e+00> : vector<34xf32>
    %8 = vector.multi_reduction <add>, %7, %cst_2 [1] : vector<34x32xf32> to vector<34xf32>
    %9 = vector.shape_cast %8 : vector<34xf32> to vector<34x1xf32>
    %cst_3 = arith.constant 3.200000e+01 : f32
    %10 = vector.broadcast %cst_3 : f32 to vector<34x1xf32>
    %11 = arith.divf %9, %10 : vector<34x1xf32>
    %12 = vector.broadcast %4 : vector<34x1xf32> to vector<34x32xf32>
    %13 = arith.subf %0, %12 : vector<34x32xf32>
    %cst_4 = arith.constant 9.99999974E-6 : f32
    %14 = vector.broadcast %cst_4 : f32 to vector<34x1xf32>
    %15 = arith.addf %11, %14 : vector<34x1xf32>
    %16 = math.rsqrt %15 : vector<34x1xf32>
    %17 = vector.broadcast %16 : vector<34x1xf32> to vector<34x32xf32>
    %18 = arith.mulf %13, %17 : vector<34x32xf32>
    %c0_5 = arith.constant 0 : index
    %c0_6 = arith.constant 0 : index
    %19 = vector.load %arg3[%c0_5, %c0_6] : memref<1x32xf32, #tpu.memory_space<vmem>>, vector<1x32xf32>
    %20 = vector.broadcast %19 : vector<1x32xf32> to vector<34x32xf32>
    %21 = arith.mulf %18, %20 : vector<34x32xf32>
    %c0_7 = arith.constant 0 : index
    %c0_8 = arith.constant 0 : index
    %22 = vector.load %arg4[%c0_7, %c0_8] : memref<1x32xf32, #tpu.memory_space<vmem>>, vector<1x32xf32>
    %23 = vector.broadcast %22 : vector<1x32xf32> to vector<34x32xf32>
    %24 = arith.addf %21, %23 : vector<34x32xf32>
    %25 = arith.truncf %24 : vector<34x32xf32> to vector<34x32xbf16>
    %c0_9 = arith.constant 0 : index
    %c0_10 = arith.constant 0 : index
    %26 = vector.load %arg5[%c0_9, %c0_10] : memref<32x96xbf16, #tpu.memory_space<vmem>>, vector<32x96xbf16>
    %cst_11 = arith.constant dense<0.000000e+00> : vector<34x96xf32>
    %27 = tpu.matmul %25, %26, %cst_11 {dimension_numbers = #tpu.dot_dimension_numbers<[1], [0], [0], [1], [0, 0, 1, 1], [], []>} : vector<34x32xbf16>, vector<32x96xbf16>, vector<34x96xf32> -> vector<34x96xf32>
    %c0_12 = arith.constant 0 : index
    %c0_13 = arith.constant 0 : index
    %28 = vector.load %arg6[%c0_12, %c0_13] : memref<1x96xf32, #tpu.memory_space<vmem>>, vector<1x96xf32>
    %29 = vector.broadcast %28 : vector<1x96xf32> to vector<34x96xf32>
    %30 = arith.addf %27, %29 : vector<34x96xf32>
    %c0_14 = arith.constant 0 : index
    %c0_15 = arith.constant 0 : index
    %31 = vector.load %arg7[%c0_14, %c0_15] : memref<34x96xf32, #tpu.memory_space<vmem>>, vector<34x96xf32>
    tpu.vector_store %arg7[%c0_14, %c0_15], %30 {strides = array<i32>} : memref<34x96xf32, #tpu.memory_space<vmem>>, vector<34x96xf32>,
    return
  }
  func.func @transform_0(%arg0: i32, %arg1: i32) -> (i32, i32) {
    %c0_i32 = arith.constant 0 : i32
    %c0_i32_0 = arith.constant 0 : i32
    return %arg0, %c0_i32 : i32, i32
  }
  func.func @transform_1(%arg0: i32, %arg1: i32) -> (i32, i32) {
    %c0_i32 = arith.constant 0 : i32
    %c0_i32_0 = arith.constant 0 : i32
    %c0_i32_1 = arith.constant 0 : i32
    return %c0_i32, %c0_i32_0 : i32, i32
  }
  func.func @transform_2(%arg0: i32, %arg1: i32) -> (i32, i32) {
    %c0_i32 = arith.constant 0 : i32
    %c0_i32_0 = arith.constant 0 : i32
    %c0_i32_1 = arith.constant 0 : i32
    return %c0_i32, %c0_i32_0 : i32, i32
  }
  func.func @transform_3(%arg0: i32, %arg1: i32) -> (i32, i32) {
    %c0_i32 = arith.constant 0 : i32
    %c0_i32_0 = arith.constant 0 : i32
    return %c0_i32, %arg1 : i32, i32
  }
  func.func @transform_4(%arg0: i32, %arg1: i32) -> (i32, i32) {
    %c0_i32 = arith.constant 0 : i32
    %c0_i32_0 = arith.constant 0 : i32
    return %c0_i32, %arg1 : i32, i32
  }
  func.func @transform_5(%arg0: i32, %arg1: i32) -> (i32, i32) {
    %c0_i32 = arith.constant 0 : i32
    return %arg0, %arg1 : i32, i32
  }
}

module attributes {stable_mosaic.version = 11 : i64} {
  func.func @kernel(%arg0: i32, %arg1: memref<1x17x96xf32, #tpu.memory_space<vmem>>, %arg2: memref<1x17x32xf32, #tpu.memory_space<vmem>>) attributes {dimension_semantics = [#tpu.dimension_semantics<parallel>], iteration_bounds = array<i64: 2>, scalar_prefetch = 0 : i64, scratch_operands = 0 : i64, tpu.core_type = #tpu.core_type<tc>, window_params = [{transform_indices = @transform_0, window_bounds = array<i64: 1, 17, 96>}, {transform_indices = @transform_1, window_bounds = array<i64: 1, 17, 32>}]} {
    %c0 = arith.constant 0 : index
    %c0_0 = arith.constant 0 : index
    %c0_1 = arith.constant 0 : index
    %0 = vector.load %arg1[%c0, %c0_0, %c0_1] : memref<1x17x96xf32, #tpu.memory_space<vmem>>, vector<1x17x96xf32>
    %1 = vector.shape_cast %0 : vector<1x17x96xf32> to vector<17x96xf32>
    %2 = vector.extract_strided_slice %1 {offsets = [0, 0], sizes = [17, 8], strides = [1, 1]} : vector<17x96xf32> to vector<17x8xf32>
    %3 = arith.truncf %2 : vector<17x8xf32> to vector<17x8xbf16>
    %4 = vector.extract_strided_slice %1 {offsets = [0, 32], sizes = [17, 8], strides = [1, 1]} : vector<17x96xf32> to vector<17x8xf32>
    %5 = arith.truncf %4 : vector<17x8xf32> to vector<17x8xbf16>
    %6 = vector.extract_strided_slice %1 {offsets = [0, 64], sizes = [17, 8], strides = [1, 1]} : vector<17x96xf32> to vector<17x8xf32>
    %7 = arith.truncf %6 : vector<17x8xf32> to vector<17x8xbf16>
    %cst = arith.constant dense<0.000000e+00> : vector<17x17xf32>
    %8 = tpu.matmul %3, %5, %cst {dimension_numbers = #tpu.dot_dimension_numbers<[1], [1], [0], [0], [0, 0, 1, 0], [], []>} : vector<17x8xbf16>, vector<17x8xbf16>, vector<17x17xf32> -> vector<17x17xf32>
    %cst_2 = arith.constant 0.353553385 : f32
    %9 = vector.broadcast %cst_2 : f32 to vector<17x17xf32>
    %10 = arith.mulf %8, %9 : vector<17x17xf32>
    %cst_3 = arith.constant dense<0xFF800000> : vector<17xf32>
    %11 = vector.multi_reduction <maximumf>, %10, %cst_3 [1] : vector<17x17xf32> to vector<17xf32>
    %12 = vector.shape_cast %11 : vector<17xf32> to vector<17x1xf32>
    %13 = vector.broadcast %12 : vector<17x1xf32> to vector<17x17xf32>
    %14 = arith.subf %10, %13 : vector<17x17xf32>
    %15 = math.exp %14 : vector<17x17xf32>
    %cst_4 = arith.constant dense<0.000000e+00> : vector<17xf32>
    %16 = vector.multi_reduction <add>, %15, %cst_4 [1] : vector<17x17xf32> to vector<17xf32>
    %17 = vector.shape_cast %16 : vector<17xf32> to vector<17x1xf32>
    %18 = tpu.reciprocal %17 {approx = true} : vector<17x1xf32> -> vector<17x1xf32>
    %19 = vector.broadcast %18 : vector<17x1xf32> to vector<17x17xf32>
    %20 = arith.mulf %15, %19 : vector<17x17xf32>
    %21 = arith.truncf %20 : vector<17x17xf32> to vector<17x17xbf16>
    %cst_5 = arith.constant dense<0.000000e+00> : vector<17x8xf32>
    %22 = tpu.matmul %21, %7, %cst_5 {dimension_numbers = #tpu.dot_dimension_numbers<[1], [0], [0], [1], [0, 0, 1, 1], [], []>} : vector<17x17xbf16>, vector<17x8xbf16>, vector<17x8xf32> -> vector<17x8xf32>
    %23 = vector.extract_strided_slice %1 {offsets = [0, 8], sizes = [17, 8], strides = [1, 1]} : vector<17x96xf32> to vector<17x8xf32>
    %24 = arith.truncf %23 : vector<17x8xf32> to vector<17x8xbf16>
    %25 = vector.extract_strided_slice %1 {offsets = [0, 40], sizes = [17, 8], strides = [1, 1]} : vector<17x96xf32> to vector<17x8xf32>
    %26 = arith.truncf %25 : vector<17x8xf32> to vector<17x8xbf16>
    %27 = vector.extract_strided_slice %1 {offsets = [0, 72], sizes = [17, 8], strides = [1, 1]} : vector<17x96xf32> to vector<17x8xf32>
    %28 = arith.truncf %27 : vector<17x8xf32> to vector<17x8xbf16>
    %cst_6 = arith.constant dense<0.000000e+00> : vector<17x17xf32>
    %29 = tpu.matmul %24, %26, %cst_6 {dimension_numbers = #tpu.dot_dimension_numbers<[1], [1], [0], [0], [0, 0, 1, 0], [], []>} : vector<17x8xbf16>, vector<17x8xbf16>, vector<17x17xf32> -> vector<17x17xf32>
    %cst_7 = arith.constant 0.353553385 : f32
    %30 = vector.broadcast %cst_7 : f32 to vector<17x17xf32>
    %31 = arith.mulf %29, %30 : vector<17x17xf32>
    %cst_8 = arith.constant dense<0xFF800000> : vector<17xf32>
    %32 = vector.multi_reduction <maximumf>, %31, %cst_8 [1] : vector<17x17xf32> to vector<17xf32>
    %33 = vector.shape_cast %32 : vector<17xf32> to vector<17x1xf32>
    %34 = vector.broadcast %33 : vector<17x1xf32> to vector<17x17xf32>
    %35 = arith.subf %31, %34 : vector<17x17xf32>
    %36 = math.exp %35 : vector<17x17xf32>
    %cst_9 = arith.constant dense<0.000000e+00> : vector<17xf32>
    %37 = vector.multi_reduction <add>, %36, %cst_9 [1] : vector<17x17xf32> to vector<17xf32>
    %38 = vector.shape_cast %37 : vector<17xf32> to vector<17x1xf32>
    %39 = tpu.reciprocal %38 {approx = true} : vector<17x1xf32> -> vector<17x1xf32>
    %40 = vector.broadcast %39 : vector<17x1xf32> to vector<17x17xf32>
    %41 = arith.mulf %36, %40 : vector<17x17xf32>
    %42 = arith.truncf %41 : vector<17x17xf32> to vector<17x17xbf16>
    %cst_10 = arith.constant dense<0.000000e+00> : vector<17x8xf32>
    %43 = tpu.matmul %42, %28, %cst_10 {dimension_numbers = #tpu.dot_dimension_numbers<[1], [0], [0], [1], [0, 0, 1, 1], [], []>} : vector<17x17xbf16>, vector<17x8xbf16>, vector<17x8xf32> -> vector<17x8xf32>
    %44 = vector.extract_strided_slice %1 {offsets = [0, 16], sizes = [17, 8], strides = [1, 1]} : vector<17x96xf32> to vector<17x8xf32>
    %45 = arith.truncf %44 : vector<17x8xf32> to vector<17x8xbf16>
    %46 = vector.extract_strided_slice %1 {offsets = [0, 48], sizes = [17, 8], strides = [1, 1]} : vector<17x96xf32> to vector<17x8xf32>
    %47 = arith.truncf %46 : vector<17x8xf32> to vector<17x8xbf16>
    %48 = vector.extract_strided_slice %1 {offsets = [0, 80], sizes = [17, 8], strides = [1, 1]} : vector<17x96xf32> to vector<17x8xf32>
    %49 = arith.truncf %48 : vector<17x8xf32> to vector<17x8xbf16>
    %cst_11 = arith.constant dense<0.000000e+00> : vector<17x17xf32>
    %50 = tpu.matmul %45, %47, %cst_11 {dimension_numbers = #tpu.dot_dimension_numbers<[1], [1], [0], [0], [0, 0, 1, 0], [], []>} : vector<17x8xbf16>, vector<17x8xbf16>, vector<17x17xf32> -> vector<17x17xf32>
    %cst_12 = arith.constant 0.353553385 : f32
    %51 = vector.broadcast %cst_12 : f32 to vector<17x17xf32>
    %52 = arith.mulf %50, %51 : vector<17x17xf32>
    %cst_13 = arith.constant dense<0xFF800000> : vector<17xf32>
    %53 = vector.multi_reduction <maximumf>, %52, %cst_13 [1] : vector<17x17xf32> to vector<17xf32>
    %54 = vector.shape_cast %53 : vector<17xf32> to vector<17x1xf32>
    %55 = vector.broadcast %54 : vector<17x1xf32> to vector<17x17xf32>
    %56 = arith.subf %52, %55 : vector<17x17xf32>
    %57 = math.exp %56 : vector<17x17xf32>
    %cst_14 = arith.constant dense<0.000000e+00> : vector<17xf32>
    %58 = vector.multi_reduction <add>, %57, %cst_14 [1] : vector<17x17xf32> to vector<17xf32>
    %59 = vector.shape_cast %58 : vector<17xf32> to vector<17x1xf32>
    %60 = tpu.reciprocal %59 {approx = true} : vector<17x1xf32> -> vector<17x1xf32>
    %61 = vector.broadcast %60 : vector<17x1xf32> to vector<17x17xf32>
    %62 = arith.mulf %57, %61 : vector<17x17xf32>
    %63 = arith.truncf %62 : vector<17x17xf32> to vector<17x17xbf16>
    %cst_15 = arith.constant dense<0.000000e+00> : vector<17x8xf32>
    %64 = tpu.matmul %63, %49, %cst_15 {dimension_numbers = #tpu.dot_dimension_numbers<[1], [0], [0], [1], [0, 0, 1, 1], [], []>} : vector<17x17xbf16>, vector<17x8xbf16>, vector<17x8xf32> -> vector<17x8xf32>
    %65 = vector.extract_strided_slice %1 {offsets = [0, 24], sizes = [17, 8], strides = [1, 1]} : vector<17x96xf32> to vector<17x8xf32>
    %66 = arith.truncf %65 : vector<17x8xf32> to vector<17x8xbf16>
    %67 = vector.extract_strided_slice %1 {offsets = [0, 56], sizes = [17, 8], strides = [1, 1]} : vector<17x96xf32> to vector<17x8xf32>
    %68 = arith.truncf %67 : vector<17x8xf32> to vector<17x8xbf16>
    %69 = vector.extract_strided_slice %1 {offsets = [0, 88], sizes = [17, 8], strides = [1, 1]} : vector<17x96xf32> to vector<17x8xf32>
    %70 = arith.truncf %69 : vector<17x8xf32> to vector<17x8xbf16>
    %cst_16 = arith.constant dense<0.000000e+00> : vector<17x17xf32>
    %71 = tpu.matmul %66, %68, %cst_16 {dimension_numbers = #tpu.dot_dimension_numbers<[1], [1], [0], [0], [0, 0, 1, 0], [], []>} : vector<17x8xbf16>, vector<17x8xbf16>, vector<17x17xf32> -> vector<17x17xf32>
    %cst_17 = arith.constant 0.353553385 : f32
    %72 = vector.broadcast %cst_17 : f32 to vector<17x17xf32>
    %73 = arith.mulf %71, %72 : vector<17x17xf32>
    %cst_18 = arith.constant dense<0xFF800000> : vector<17xf32>
    %74 = vector.multi_reduction <maximumf>, %73, %cst_18 [1] : vector<17x17xf32> to vector<17xf32>
    %75 = vector.shape_cast %74 : vector<17xf32> to vector<17x1xf32>
    %76 = vector.broadcast %75 : vector<17x1xf32> to vector<17x17xf32>
    %77 = arith.subf %73, %76 : vector<17x17xf32>
    %78 = math.exp %77 : vector<17x17xf32>
    %cst_19 = arith.constant dense<0.000000e+00> : vector<17xf32>
    %79 = vector.multi_reduction <add>, %78, %cst_19 [1] : vector<17x17xf32> to vector<17xf32>
    %80 = vector.shape_cast %79 : vector<17xf32> to vector<17x1xf32>
    %81 = tpu.reciprocal %80 {approx = true} : vector<17x1xf32> -> vector<17x1xf32>
    %82 = vector.broadcast %81 : vector<17x1xf32> to vector<17x17xf32>
    %83 = arith.mulf %78, %82 : vector<17x17xf32>
    %84 = arith.truncf %83 : vector<17x17xf32> to vector<17x17xbf16>
    %cst_20 = arith.constant dense<0.000000e+00> : vector<17x8xf32>
    %85 = tpu.matmul %84, %70, %cst_20 {dimension_numbers = #tpu.dot_dimension_numbers<[1], [0], [0], [1], [0, 0, 1, 1], [], []>} : vector<17x17xbf16>, vector<17x8xbf16>, vector<17x8xf32> -> vector<17x8xf32>
    %86 = tpu.concatenate %22, %43, %64, %85 in 1 : vector<17x8xf32>, vector<17x8xf32>, vector<17x8xf32>, vector<17x8xf32> -> vector<17x32xf32>
    %c0_21 = arith.constant 0 : index
    %c0_22 = arith.constant 0 : index
    %c0_23 = arith.constant 0 : index
    %87 = vector.load %arg2[%c0_21, %c0_22, %c0_23] : memref<1x17x32xf32, #tpu.memory_space<vmem>>, vector<1x17x32xf32>
    %88 = vector.shape_cast %87 : vector<1x17x32xf32> to vector<17x32xf32>
    %89 = vector.shape_cast %86 : vector<17x32xf32> to vector<1x17x32xf32>
    tpu.vector_store %arg2[%c0_21, %c0_22, %c0_23], %89 {strides = array<i32>} : memref<1x17x32xf32, #tpu.memory_space<vmem>>, vector<1x17x32xf32>,
    return
  }
  func.func @transform_0(%arg0: i32) -> (i32, i32, i32) {
    %c0_i32 = arith.constant 0 : i32
    %c0_i32_0 = arith.constant 0 : i32
    %c0_i32_1 = arith.constant 0 : i32
    return %arg0, %c0_i32, %c0_i32_0 : i32, i32, i32
  }
  func.func @transform_1(%arg0: i32) -> (i32, i32, i32) {
    %c0_i32 = arith.constant 0 : i32
    %c0_i32_0 = arith.constant 0 : i32
    %c0_i32_1 = arith.constant 0 : i32
    return %arg0, %c0_i32, %c0_i32_0 : i32, i32, i32
  }
}

module attributes {stable_mosaic.version = 11 : i64} {
  func.func @kernel(%arg0: i32, %arg1: i32, %arg2: i32, %arg3: memref<34x32xf32, #tpu.memory_space<vmem>>, %arg4: memref<32x32xbf16, #tpu.memory_space<vmem>>, %arg5: memref<1x32xf32, #tpu.memory_space<vmem>>, %arg6: memref<34x32xf32, #tpu.memory_space<vmem>>, %arg7: memref<34x32xf32, #tpu.memory_space<vmem>>, %arg8: memref<34x32xf32, #tpu.memory_space<vmem>>) attributes {dimension_semantics = [#tpu.dimension_semantics<parallel>, #tpu.dimension_semantics<parallel>, #tpu.dimension_semantics<arbitrary>], iteration_bounds = array<i64: 1, 1, 1>, scalar_prefetch = 0 : i64, scratch_operands = 1 : i64, tpu.core_type = #tpu.core_type<tc>, window_params = [{transform_indices = @transform_0, window_bounds = array<i64: 34, 32>}, {transform_indices = @transform_1, window_bounds = array<i64: 32, 32>}, {transform_indices = @transform_2, window_bounds = array<i64: 1, 32>}, {transform_indices = @transform_3, window_bounds = array<i64: 34, 32>}, {transform_indices = @transform_4, window_bounds = array<i64: 34, 32>}]} {
    %c0_i32 = arith.constant 0 : i32
    %0 = arith.cmpi eq, %arg2, %c0_i32 : i32
    %1 = arith.extui %0 : i1 to i32
    %c0_i32_0 = arith.constant 0 : i32
    %2 = arith.cmpi ne, %1, %c0_i32_0 : i32
    scf.if %2 {
      %cst_10 = arith.constant 0.000000e+00 : f32
      %13 = vector.broadcast %cst_10 : f32 to vector<34x32xf32>
      %c0_11 = arith.constant 0 : index
      %c0_12 = arith.constant 0 : index
      %14 = vector.load %arg8[%c0_11, %c0_12] : memref<34x32xf32, #tpu.memory_space<vmem>>, vector<34x32xf32>
      tpu.vector_store %arg8[%c0_11, %c0_12], %13 {strides = array<i32>} : memref<34x32xf32, #tpu.memory_space<vmem>>, vector<34x32xf32>,
    } else {
    }
    %c0 = arith.constant 0 : index
    %c0_1 = arith.constant 0 : index
    %3 = vector.load %arg8[%c0, %c0_1] : memref<34x32xf32, #tpu.memory_space<vmem>>, vector<34x32xf32>
    %c0_2 = arith.constant 0 : index
    %c0_3 = arith.constant 0 : index
    %4 = vector.load %arg3[%c0_2, %c0_3] : memref<34x32xf32, #tpu.memory_space<vmem>>, vector<34x32xf32>
    %5 = arith.truncf %4 : vector<34x32xf32> to vector<34x32xbf16>
    %c0_4 = arith.constant 0 : index
    %c0_5 = arith.constant 0 : index
    %6 = vector.load %arg4[%c0_4, %c0_5] : memref<32x32xbf16, #tpu.memory_space<vmem>>, vector<32x32xbf16>
    %cst = arith.constant dense<0.000000e+00> : vector<34x32xf32>
    %7 = tpu.matmul %5, %6, %cst {dimension_numbers = #tpu.dot_dimension_numbers<[1], [0], [0], [1], [0, 0, 1, 1], [], []>} : vector<34x32xbf16>, vector<32x32xbf16>, vector<34x32xf32> -> vector<34x32xf32>
    %8 = arith.addf %3, %7 : vector<34x32xf32>
    %c0_6 = arith.constant 0 : index
    %c0_7 = arith.constant 0 : index
    %9 = vector.load %arg8[%c0_6, %c0_7] : memref<34x32xf32, #tpu.memory_space<vmem>>, vector<34x32xf32>
    tpu.vector_store %arg8[%c0_6, %c0_7], %8 {strides = array<i32>} : memref<34x32xf32, #tpu.memory_space<vmem>>, vector<34x32xf32>,
    %c0_i32_8 = arith.constant 0 : i32
    %10 = arith.cmpi eq, %arg2, %c0_i32_8 : i32
    %11 = arith.extui %10 : i1 to i32
    %c0_i32_9 = arith.constant 0 : i32
    %12 = arith.cmpi ne, %11, %c0_i32_9 : i32
    scf.if %12 {
      %c0_10 = arith.constant 0 : index
      %c0_11 = arith.constant 0 : index
      %13 = vector.load %arg8[%c0_10, %c0_11] : memref<34x32xf32, #tpu.memory_space<vmem>>, vector<34x32xf32>
      %c0_12 = arith.constant 0 : index
      %c0_13 = arith.constant 0 : index
      %14 = vector.load %arg5[%c0_12, %c0_13] : memref<1x32xf32, #tpu.memory_space<vmem>>, vector<1x32xf32>
      %15 = vector.broadcast %14 : vector<1x32xf32> to vector<34x32xf32>
      %16 = arith.addf %13, %15 : vector<34x32xf32>
      %c0_14 = arith.constant 0 : index
      %c0_15 = arith.constant 0 : index
      %17 = vector.load %arg6[%c0_14, %c0_15] : memref<34x32xf32, #tpu.memory_space<vmem>>, vector<34x32xf32>
      %18 = arith.addf %16, %17 : vector<34x32xf32>
      %c0_16 = arith.constant 0 : index
      %c0_17 = arith.constant 0 : index
      %19 = vector.load %arg7[%c0_16, %c0_17] : memref<34x32xf32, #tpu.memory_space<vmem>>, vector<34x32xf32>
      tpu.vector_store %arg7[%c0_16, %c0_17], %18 {strides = array<i32>} : memref<34x32xf32, #tpu.memory_space<vmem>>, vector<34x32xf32>,
    } else {
    }
    return
  }
  func.func @transform_0(%arg0: i32, %arg1: i32, %arg2: i32) -> (i32, i32) {
    %c0_i32 = arith.constant 0 : i32
    return %arg0, %arg2 : i32, i32
  }
  func.func @transform_1(%arg0: i32, %arg1: i32, %arg2: i32) -> (i32, i32) {
    %c0_i32 = arith.constant 0 : i32
    return %arg2, %arg1 : i32, i32
  }
  func.func @transform_2(%arg0: i32, %arg1: i32, %arg2: i32) -> (i32, i32) {
    %c0_i32 = arith.constant 0 : i32
    %c0_i32_0 = arith.constant 0 : i32
    return %c0_i32, %arg1 : i32, i32
  }
  func.func @transform_3(%arg0: i32, %arg1: i32, %arg2: i32) -> (i32, i32) {
    %c0_i32 = arith.constant 0 : i32
    return %arg0, %arg1 : i32, i32
  }
  func.func @transform_4(%arg0: i32, %arg1: i32, %arg2: i32) -> (i32, i32) {
    %c0_i32 = arith.constant 0 : i32
    return %arg0, %arg1 : i32, i32
  }
}

module attributes {stable_mosaic.version = 11 : i64} {
  func.func @kernel(%arg0: i32, %arg1: i32, %arg2: memref<34x32xf32, #tpu.memory_space<vmem>>, %arg3: memref<1x32xf32, #tpu.memory_space<vmem>>, %arg4: memref<1x32xf32, #tpu.memory_space<vmem>>, %arg5: memref<32x128xbf16, #tpu.memory_space<vmem>>, %arg6: memref<1x128xf32, #tpu.memory_space<vmem>>, %arg7: memref<34x128xf32, #tpu.memory_space<vmem>>) attributes {dimension_semantics = [#tpu.dimension_semantics<parallel>, #tpu.dimension_semantics<parallel>], iteration_bounds = array<i64: 1, 1>, scalar_prefetch = 0 : i64, scratch_operands = 0 : i64, tpu.core_type = #tpu.core_type<tc>, window_params = [{transform_indices = @transform_0, window_bounds = array<i64: 34, 32>}, {pipeline_mode = #tpu.pipeline_mode<synchronous>, transform_indices = @transform_1, window_bounds = array<i64: 1, 32>}, {pipeline_mode = #tpu.pipeline_mode<synchronous>, transform_indices = @transform_2, window_bounds = array<i64: 1, 32>}, {transform_indices = @transform_3, window_bounds = array<i64: 32, 128>}, {transform_indices = @transform_4, window_bounds = array<i64: 1, 128>}, {transform_indices = @transform_5, window_bounds = array<i64: 34, 128>}]} {
    %c0 = arith.constant 0 : index
    %c0_0 = arith.constant 0 : index
    %0 = vector.load %arg2[%c0, %c0_0] : memref<34x32xf32, #tpu.memory_space<vmem>>, vector<34x32xf32>
    %cst = arith.constant dense<0.000000e+00> : vector<34xf32>
    %1 = vector.multi_reduction <add>, %0, %cst [1] : vector<34x32xf32> to vector<34xf32>
    %2 = vector.shape_cast %1 : vector<34xf32> to vector<34x1xf32>
    %cst_1 = arith.constant 3.200000e+01 : f32
    %3 = vector.broadcast %cst_1 : f32 to vector<34x1xf32>
    %4 = arith.divf %2, %3 : vector<34x1xf32>
    %5 = vector.broadcast %4 : vector<34x1xf32> to vector<34x32xf32>
    %6 = arith.subf %0, %5 : vector<34x32xf32>
    %7 = arith.mulf %6, %6 : vector<34x32xf32>
    %cst_2 = arith.constant dense<0.000000e+00> : vector<34xf32>
    %8 = vector.multi_reduction <add>, %7, %cst_2 [1] : vector<34x32xf32> to vector<34xf32>
    %9 = vector.shape_cast %8 : vector<34xf32> to vector<34x1xf32>
    %cst_3 = arith.constant 3.200000e+01 : f32
    %10 = vector.broadcast %cst_3 : f32 to vector<34x1xf32>
    %11 = arith.divf %9, %10 : vector<34x1xf32>
    %12 = vector.broadcast %4 : vector<34x1xf32> to vector<34x32xf32>
    %13 = arith.subf %0, %12 : vector<34x32xf32>
    %cst_4 = arith.constant 9.99999974E-6 : f32
    %14 = vector.broadcast %cst_4 : f32 to vector<34x1xf32>
    %15 = arith.addf %11, %14 : vector<34x1xf32>
    %16 = math.rsqrt %15 : vector<34x1xf32>
    %17 = vector.broadcast %16 : vector<34x1xf32> to vector<34x32xf32>
    %18 = arith.mulf %13, %17 : vector<34x32xf32>
    %c0_5 = arith.constant 0 : index
    %c0_6 = arith.constant 0 : index
    %19 = vector.load %arg3[%c0_5, %c0_6] : memref<1x32xf32, #tpu.memory_space<vmem>>, vector<1x32xf32>
    %20 = vector.broadcast %19 : vector<1x32xf32> to vector<34x32xf32>
    %21 = arith.mulf %18, %20 : vector<34x32xf32>
    %c0_7 = arith.constant 0 : index
    %c0_8 = arith.constant 0 : index
    %22 = vector.load %arg4[%c0_7, %c0_8] : memref<1x32xf32, #tpu.memory_space<vmem>>, vector<1x32xf32>
    %23 = vector.broadcast %22 : vector<1x32xf32> to vector<34x32xf32>
    %24 = arith.addf %21, %23 : vector<34x32xf32>
    %25 = arith.truncf %24 : vector<34x32xf32> to vector<34x32xbf16>
    %c0_9 = arith.constant 0 : index
    %c0_10 = arith.constant 0 : index
    %26 = vector.load %arg5[%c0_9, %c0_10] : memref<32x128xbf16, #tpu.memory_space<vmem>>, vector<32x128xbf16>
    %cst_11 = arith.constant dense<0.000000e+00> : vector<34x128xf32>
    %27 = tpu.matmul %25, %26, %cst_11 {dimension_numbers = #tpu.dot_dimension_numbers<[1], [0], [0], [1], [0, 0, 1, 1], [], []>} : vector<34x32xbf16>, vector<32x128xbf16>, vector<34x128xf32> -> vector<34x128xf32>
    %c0_12 = arith.constant 0 : index
    %c0_13 = arith.constant 0 : index
    %28 = vector.load %arg6[%c0_12, %c0_13] : memref<1x128xf32, #tpu.memory_space<vmem>>, vector<1x128xf32>
    %29 = vector.broadcast %28 : vector<1x128xf32> to vector<34x128xf32>
    %30 = arith.addf %27, %29 : vector<34x128xf32>
    %cst_14 = arith.constant 1.702000e+00 : f32
    %31 = vector.broadcast %cst_14 : f32 to vector<34x128xf32>
    %32 = arith.mulf %31, %30 : vector<34x128xf32>
    %33 = arith.negf %32 : vector<34x128xf32>
    %34 = math.exp %33 : vector<34x128xf32>
    %cst_15 = arith.constant 1.000000e+00 : f32
    %35 = vector.broadcast %cst_15 : f32 to vector<34x128xf32>
    %36 = arith.addf %35, %34 : vector<34x128xf32>
    %37 = arith.divf %35, %36 : vector<34x128xf32>
    %38 = arith.mulf %30, %37 : vector<34x128xf32>
    %c0_16 = arith.constant 0 : index
    %c0_17 = arith.constant 0 : index
    %39 = vector.load %arg7[%c0_16, %c0_17] : memref<34x128xf32, #tpu.memory_space<vmem>>, vector<34x128xf32>
    tpu.vector_store %arg7[%c0_16, %c0_17], %38 {strides = array<i32>} : memref<34x128xf32, #tpu.memory_space<vmem>>, vector<34x128xf32>,
    return
  }
  func.func @transform_0(%arg0: i32, %arg1: i32) -> (i32, i32) {
    %c0_i32 = arith.constant 0 : i32
    %c0_i32_0 = arith.constant 0 : i32
    return %arg0, %c0_i32 : i32, i32
  }
  func.func @transform_1(%arg0: i32, %arg1: i32) -> (i32, i32) {
    %c0_i32 = arith.constant 0 : i32
    %c0_i32_0 = arith.constant 0 : i32
    %c0_i32_1 = arith.constant 0 : i32
    return %c0_i32, %c0_i32_0 : i32, i32
  }
  func.func @transform_2(%arg0: i32, %arg1: i32) -> (i32, i32) {
    %c0_i32 = arith.constant 0 : i32
    %c0_i32_0 = arith.constant 0 : i32
    %c0_i32_1 = arith.constant 0 : i32
    return %c0_i32, %c0_i32_0 : i32, i32
  }
  func.func @transform_3(%arg0: i32, %arg1: i32) -> (i32, i32) {
    %c0_i32 = arith.constant 0 : i32
    %c0_i32_0 = arith.constant 0 : i32
    return %c0_i32, %arg1 : i32, i32
  }
  func.func @transform_4(%arg0: i32, %arg1: i32) -> (i32, i32) {
    %c0_i32 = arith.constant 0 : i32
    %c0_i32_0 = arith.constant 0 : i32
    return %c0_i32, %arg1 : i32, i32
  }
  func.func @transform_5(%arg0: i32, %arg1: i32) -> (i32, i32) {
    %c0_i32 = arith.constant 0 : i32
    return %arg0, %arg1 : i32, i32
  }
}

module attributes {stable_mosaic.version = 11 : i64} {
  func.func @kernel(%arg0: i32, %arg1: i32, %arg2: i32, %arg3: memref<34x128xf32, #tpu.memory_space<vmem>>, %arg4: memref<128x32xbf16, #tpu.memory_space<vmem>>, %arg5: memref<1x32xf32, #tpu.memory_space<vmem>>, %arg6: memref<34x32xf32, #tpu.memory_space<vmem>>, %arg7: memref<34x32xf32, #tpu.memory_space<vmem>>, %arg8: memref<34x32xf32, #tpu.memory_space<vmem>>) attributes {dimension_semantics = [#tpu.dimension_semantics<parallel>, #tpu.dimension_semantics<parallel>, #tpu.dimension_semantics<arbitrary>], iteration_bounds = array<i64: 1, 1, 1>, scalar_prefetch = 0 : i64, scratch_operands = 1 : i64, tpu.core_type = #tpu.core_type<tc>, window_params = [{transform_indices = @transform_0, window_bounds = array<i64: 34, 128>}, {transform_indices = @transform_1, window_bounds = array<i64: 128, 32>}, {transform_indices = @transform_2, window_bounds = array<i64: 1, 32>}, {transform_indices = @transform_3, window_bounds = array<i64: 34, 32>}, {transform_indices = @transform_4, window_bounds = array<i64: 34, 32>}]} {
    %c0_i32 = arith.constant 0 : i32
    %0 = arith.cmpi eq, %arg2, %c0_i32 : i32
    %1 = arith.extui %0 : i1 to i32
    %c0_i32_0 = arith.constant 0 : i32
    %2 = arith.cmpi ne, %1, %c0_i32_0 : i32
    scf.if %2 {
      %cst_10 = arith.constant 0.000000e+00 : f32
      %13 = vector.broadcast %cst_10 : f32 to vector<34x32xf32>
      %c0_11 = arith.constant 0 : index
      %c0_12 = arith.constant 0 : index
      %14 = vector.load %arg8[%c0_11, %c0_12] : memref<34x32xf32, #tpu.memory_space<vmem>>, vector<34x32xf32>
      tpu.vector_store %arg8[%c0_11, %c0_12], %13 {strides = array<i32>} : memref<34x32xf32, #tpu.memory_space<vmem>>, vector<34x32xf32>,
    } else {
    }
    %c0 = arith.constant 0 : index
    %c0_1 = arith.constant 0 : index
    %3 = vector.load %arg8[%c0, %c0_1] : memref<34x32xf32, #tpu.memory_space<vmem>>, vector<34x32xf32>
    %c0_2 = arith.constant 0 : index
    %c0_3 = arith.constant 0 : index
    %4 = vector.load %arg3[%c0_2, %c0_3] : memref<34x128xf32, #tpu.memory_space<vmem>>, vector<34x128xf32>
    %5 = arith.truncf %4 : vector<34x128xf32> to vector<34x128xbf16>
    %c0_4 = arith.constant 0 : index
    %c0_5 = arith.constant 0 : index
    %6 = vector.load %arg4[%c0_4, %c0_5] : memref<128x32xbf16, #tpu.memory_space<vmem>>, vector<128x32xbf16>
    %cst = arith.constant dense<0.000000e+00> : vector<34x32xf32>
    %7 = tpu.matmul %5, %6, %cst {dimension_numbers = #tpu.dot_dimension_numbers<[1], [0], [0], [1], [0, 0, 1, 1], [], []>} : vector<34x128xbf16>, vector<128x32xbf16>, vector<34x32xf32> -> vector<34x32xf32>
    %8 = arith.addf %3, %7 : vector<34x32xf32>
    %c0_6 = arith.constant 0 : index
    %c0_7 = arith.constant 0 : index
    %9 = vector.load %arg8[%c0_6, %c0_7] : memref<34x32xf32, #tpu.memory_space<vmem>>, vector<34x32xf32>
    tpu.vector_store %arg8[%c0_6, %c0_7], %8 {strides = array<i32>} : memref<34x32xf32, #tpu.memory_space<vmem>>, vector<34x32xf32>,
    %c0_i32_8 = arith.constant 0 : i32
    %10 = arith.cmpi eq, %arg2, %c0_i32_8 : i32
    %11 = arith.extui %10 : i1 to i32
    %c0_i32_9 = arith.constant 0 : i32
    %12 = arith.cmpi ne, %11, %c0_i32_9 : i32
    scf.if %12 {
      %c0_10 = arith.constant 0 : index
      %c0_11 = arith.constant 0 : index
      %13 = vector.load %arg8[%c0_10, %c0_11] : memref<34x32xf32, #tpu.memory_space<vmem>>, vector<34x32xf32>
      %c0_12 = arith.constant 0 : index
      %c0_13 = arith.constant 0 : index
      %14 = vector.load %arg5[%c0_12, %c0_13] : memref<1x32xf32, #tpu.memory_space<vmem>>, vector<1x32xf32>
      %15 = vector.broadcast %14 : vector<1x32xf32> to vector<34x32xf32>
      %16 = arith.addf %13, %15 : vector<34x32xf32>
      %c0_14 = arith.constant 0 : index
      %c0_15 = arith.constant 0 : index
      %17 = vector.load %arg6[%c0_14, %c0_15] : memref<34x32xf32, #tpu.memory_space<vmem>>, vector<34x32xf32>
      %18 = arith.addf %16, %17 : vector<34x32xf32>
      %c0_16 = arith.constant 0 : index
      %c0_17 = arith.constant 0 : index
      %19 = vector.load %arg7[%c0_16, %c0_17] : memref<34x32xf32, #tpu.memory_space<vmem>>, vector<34x32xf32>
      tpu.vector_store %arg7[%c0_16, %c0_17], %18 {strides = array<i32>} : memref<34x32xf32, #tpu.memory_space<vmem>>, vector<34x32xf32>,
    } else {
    }
    return
  }
  func.func @transform_0(%arg0: i32, %arg1: i32, %arg2: i32) -> (i32, i32) {
    %c0_i32 = arith.constant 0 : i32
    return %arg0, %arg2 : i32, i32
  }
  func.func @transform_1(%arg0: i32, %arg1: i32, %arg2: i32) -> (i32, i32) {
    %c0_i32 = arith.constant 0 : i32
    return %arg2, %arg1 : i32, i32
  }
  func.func @transform_2(%arg0: i32, %arg1: i32, %arg2: i32) -> (i32, i32) {
    %c0_i32 = arith.constant 0 : i32
    %c0_i32_0 = arith.constant 0 : i32
    return %c0_i32, %arg1 : i32, i32
  }
  func.func @transform_3(%arg0: i32, %arg1: i32, %arg2: i32) -> (i32, i32) {
    %c0_i32 = arith.constant 0 : i32
    return %arg0, %arg1 : i32, i32
  }
  func.func @transform_4(%arg0: i32, %arg1: i32, %arg2: i32) -> (i32, i32) {
    %c0_i32 = arith.constant 0 : i32
    return %arg0, %arg1 : i32, i32
  }
}

module attributes {stable_mosaic.version = 11 : i64} {
  func.func @kernel(%arg0: i32, %arg1: i32, %arg2: memref<2x32xf32, #tpu.memory_space<vmem>>, %arg3: memref<1x32xf32, #tpu.memory_space<vmem>>, %arg4: memref<1x32xf32, #tpu.memory_space<vmem>>, %arg5: memref<32x32xbf16, #tpu.memory_space<vmem>>, %arg6: memref<2x32xf32, #tpu.memory_space<vmem>>) attributes {dimension_semantics = [#tpu.dimension_semantics<parallel>, #tpu.dimension_semantics<parallel>], iteration_bounds = array<i64: 1, 1>, scalar_prefetch = 0 : i64, scratch_operands = 0 : i64, tpu.core_type = #tpu.core_type<tc>, window_params = [{transform_indices = @transform_0, window_bounds = array<i64: 2, 32>}, {pipeline_mode = #tpu.pipeline_mode<synchronous>, transform_indices = @transform_1, window_bounds = array<i64: 1, 32>}, {pipeline_mode = #tpu.pipeline_mode<synchronous>, transform_indices = @transform_2, window_bounds = array<i64: 1, 32>}, {transform_indices = @transform_3, window_bounds = array<i64: 32, 32>}, {transform_indices = @transform_4, window_bounds = array<i64: 2, 32>}]} {
    %c0 = arith.constant 0 : index
    %c0_0 = arith.constant 0 : index
    %0 = vector.load %arg2[%c0, %c0_0] : memref<2x32xf32, #tpu.memory_space<vmem>>, vector<2x32xf32>
    %cst = arith.constant dense<0.000000e+00> : vector<2xf32>
    %1 = vector.multi_reduction <add>, %0, %cst [1] : vector<2x32xf32> to vector<2xf32>
    %2 = vector.shape_cast %1 : vector<2xf32> to vector<2x1xf32>
    %cst_1 = arith.constant 3.200000e+01 : f32
    %3 = vector.broadcast %cst_1 : f32 to vector<2x1xf32>
    %4 = arith.divf %2, %3 : vector<2x1xf32>
    %5 = vector.broadcast %4 : vector<2x1xf32> to vector<2x32xf32>
    %6 = arith.subf %0, %5 : vector<2x32xf32>
    %7 = arith.mulf %6, %6 : vector<2x32xf32>
    %cst_2 = arith.constant dense<0.000000e+00> : vector<2xf32>
    %8 = vector.multi_reduction <add>, %7, %cst_2 [1] : vector<2x32xf32> to vector<2xf32>
    %9 = vector.shape_cast %8 : vector<2xf32> to vector<2x1xf32>
    %cst_3 = arith.constant 3.200000e+01 : f32
    %10 = vector.broadcast %cst_3 : f32 to vector<2x1xf32>
    %11 = arith.divf %9, %10 : vector<2x1xf32>
    %12 = vector.broadcast %4 : vector<2x1xf32> to vector<2x32xf32>
    %13 = arith.subf %0, %12 : vector<2x32xf32>
    %cst_4 = arith.constant 9.99999974E-6 : f32
    %14 = vector.broadcast %cst_4 : f32 to vector<2x1xf32>
    %15 = arith.addf %11, %14 : vector<2x1xf32>
    %16 = math.rsqrt %15 : vector<2x1xf32>
    %17 = vector.broadcast %16 : vector<2x1xf32> to vector<2x32xf32>
    %18 = arith.mulf %13, %17 : vector<2x32xf32>
    %c0_5 = arith.constant 0 : index
    %c0_6 = arith.constant 0 : index
    %19 = vector.load %arg3[%c0_5, %c0_6] : memref<1x32xf32, #tpu.memory_space<vmem>>, vector<1x32xf32>
    %20 = vector.broadcast %19 : vector<1x32xf32> to vector<2x32xf32>
    %21 = arith.mulf %18, %20 : vector<2x32xf32>
    %c0_7 = arith.constant 0 : index
    %c0_8 = arith.constant 0 : index
    %22 = vector.load %arg4[%c0_7, %c0_8] : memref<1x32xf32, #tpu.memory_space<vmem>>, vector<1x32xf32>
    %23 = vector.broadcast %22 : vector<1x32xf32> to vector<2x32xf32>
    %24 = arith.addf %21, %23 : vector<2x32xf32>
    %25 = arith.truncf %24 : vector<2x32xf32> to vector<2x32xbf16>
    %c0_9 = arith.constant 0 : index
    %c0_10 = arith.constant 0 : index
    %26 = vector.load %arg5[%c0_9, %c0_10] : memref<32x32xbf16, #tpu.memory_space<vmem>>, vector<32x32xbf16>
    %cst_11 = arith.constant dense<0.000000e+00> : vector<2x32xf32>
    %27 = tpu.matmul %25, %26, %cst_11 {dimension_numbers = #tpu.dot_dimension_numbers<[1], [0], [0], [1], [0, 0, 1, 1], [], []>} : vector<2x32xbf16>, vector<32x32xbf16>, vector<2x32xf32> -> vector<2x32xf32>
    %c0_12 = arith.constant 0 : index
    %c0_13 = arith.constant 0 : index
    %28 = vector.load %arg6[%c0_12, %c0_13] : memref<2x32xf32, #tpu.memory_space<vmem>>, vector<2x32xf32>
    tpu.vector_store %arg6[%c0_12, %c0_13], %27 {strides = array<i32>} : memref<2x32xf32, #tpu.memory_space<vmem>>, vector<2x32xf32>,
    return
  }
  func.func @transform_0(%arg0: i32, %arg1: i32) -> (i32, i32) {
    %c0_i32 = arith.constant 0 : i32
    %c0_i32_0 = arith.constant 0 : i32
    return %arg0, %c0_i32 : i32, i32
  }
  func.func @transform_1(%arg0: i32, %arg1: i32) -> (i32, i32) {
    %c0_i32 = arith.constant 0 : i32
    %c0_i32_0 = arith.constant 0 : i32
    %c0_i32_1 = arith.constant 0 : i32
    return %c0_i32, %c0_i32_0 : i32, i32
  }
  func.func @transform_2(%arg0: i32, %arg1: i32) -> (i32, i32) {
    %c0_i32 = arith.constant 0 : i32
    %c0_i32_0 = arith.constant 0 : i32
    %c0_i32_1 = arith.constant 0 : i32
    return %c0_i32, %c0_i32_0 : i32, i32
  }
  func.func @transform_3(%arg0: i32, %arg1: i32) -> (i32, i32) {
    %c0_i32 = arith.constant 0 : i32
    %c0_i32_0 = arith.constant 0 : i32
    return %c0_i32, %arg1 : i32, i32
  }
  func.func @transform_4(%arg0: i32, %arg1: i32) -> (i32, i32) {
    %c0_i32 = arith.constant 0 : i32
    return %arg0, %arg1 : i32, i32
  }
}

module attributes {stable_mosaic.version = 11 : i64} {
  func.func @kernel(%arg0: i32, %arg1: i32, %arg2: memref<24x32xf32, #tpu.memory_space<vmem>>, %arg3: memref<1x32xf32, #tpu.memory_space<vmem>>, %arg4: memref<1x32xf32, #tpu.memory_space<vmem>>, %arg5: memref<32x96xbf16, #tpu.memory_space<vmem>>, %arg6: memref<1x96xf32, #tpu.memory_space<vmem>>, %arg7: memref<24x96xf32, #tpu.memory_space<vmem>>) attributes {dimension_semantics = [#tpu.dimension_semantics<parallel>, #tpu.dimension_semantics<parallel>], iteration_bounds = array<i64: 1, 1>, scalar_prefetch = 0 : i64, scratch_operands = 0 : i64, tpu.core_type = #tpu.core_type<tc>, window_params = [{transform_indices = @transform_0, window_bounds = array<i64: 24, 32>}, {pipeline_mode = #tpu.pipeline_mode<synchronous>, transform_indices = @transform_1, window_bounds = array<i64: 1, 32>}, {pipeline_mode = #tpu.pipeline_mode<synchronous>, transform_indices = @transform_2, window_bounds = array<i64: 1, 32>}, {transform_indices = @transform_3, window_bounds = array<i64: 32, 96>}, {transform_indices = @transform_4, window_bounds = array<i64: 1, 96>}, {transform_indices = @transform_5, window_bounds = array<i64: 24, 96>}]} {
    %c0 = arith.constant 0 : index
    %c0_0 = arith.constant 0 : index
    %0 = vector.load %arg2[%c0, %c0_0] : memref<24x32xf32, #tpu.memory_space<vmem>>, vector<24x32xf32>
    %cst = arith.constant dense<0.000000e+00> : vector<24xf32>
    %1 = vector.multi_reduction <add>, %0, %cst [1] : vector<24x32xf32> to vector<24xf32>
    %2 = vector.shape_cast %1 : vector<24xf32> to vector<24x1xf32>
    %cst_1 = arith.constant 3.200000e+01 : f32
    %3 = vector.broadcast %cst_1 : f32 to vector<24x1xf32>
    %4 = arith.divf %2, %3 : vector<24x1xf32>
    %5 = vector.broadcast %4 : vector<24x1xf32> to vector<24x32xf32>
    %6 = arith.subf %0, %5 : vector<24x32xf32>
    %7 = arith.mulf %6, %6 : vector<24x32xf32>
    %cst_2 = arith.constant dense<0.000000e+00> : vector<24xf32>
    %8 = vector.multi_reduction <add>, %7, %cst_2 [1] : vector<24x32xf32> to vector<24xf32>
    %9 = vector.shape_cast %8 : vector<24xf32> to vector<24x1xf32>
    %cst_3 = arith.constant 3.200000e+01 : f32
    %10 = vector.broadcast %cst_3 : f32 to vector<24x1xf32>
    %11 = arith.divf %9, %10 : vector<24x1xf32>
    %12 = vector.broadcast %4 : vector<24x1xf32> to vector<24x32xf32>
    %13 = arith.subf %0, %12 : vector<24x32xf32>
    %cst_4 = arith.constant 9.99999974E-6 : f32
    %14 = vector.broadcast %cst_4 : f32 to vector<24x1xf32>
    %15 = arith.addf %11, %14 : vector<24x1xf32>
    %16 = math.rsqrt %15 : vector<24x1xf32>
    %17 = vector.broadcast %16 : vector<24x1xf32> to vector<24x32xf32>
    %18 = arith.mulf %13, %17 : vector<24x32xf32>
    %c0_5 = arith.constant 0 : index
    %c0_6 = arith.constant 0 : index
    %19 = vector.load %arg3[%c0_5, %c0_6] : memref<1x32xf32, #tpu.memory_space<vmem>>, vector<1x32xf32>
    %20 = vector.broadcast %19 : vector<1x32xf32> to vector<24x32xf32>
    %21 = arith.mulf %18, %20 : vector<24x32xf32>
    %c0_7 = arith.constant 0 : index
    %c0_8 = arith.constant 0 : index
    %22 = vector.load %arg4[%c0_7, %c0_8] : memref<1x32xf32, #tpu.memory_space<vmem>>, vector<1x32xf32>
    %23 = vector.broadcast %22 : vector<1x32xf32> to vector<24x32xf32>
    %24 = arith.addf %21, %23 : vector<24x32xf32>
    %25 = arith.truncf %24 : vector<24x32xf32> to vector<24x32xbf16>
    %c0_9 = arith.constant 0 : index
    %c0_10 = arith.constant 0 : index
    %26 = vector.load %arg5[%c0_9, %c0_10] : memref<32x96xbf16, #tpu.memory_space<vmem>>, vector<32x96xbf16>
    %cst_11 = arith.constant dense<0.000000e+00> : vector<24x96xf32>
    %27 = tpu.matmul %25, %26, %cst_11 {dimension_numbers = #tpu.dot_dimension_numbers<[1], [0], [0], [1], [0, 0, 1, 1], [], []>} : vector<24x32xbf16>, vector<32x96xbf16>, vector<24x96xf32> -> vector<24x96xf32>
    %c0_12 = arith.constant 0 : index
    %c0_13 = arith.constant 0 : index
    %28 = vector.load %arg6[%c0_12, %c0_13] : memref<1x96xf32, #tpu.memory_space<vmem>>, vector<1x96xf32>
    %29 = vector.broadcast %28 : vector<1x96xf32> to vector<24x96xf32>
    %30 = arith.addf %27, %29 : vector<24x96xf32>
    %c0_14 = arith.constant 0 : index
    %c0_15 = arith.constant 0 : index
    %31 = vector.load %arg7[%c0_14, %c0_15] : memref<24x96xf32, #tpu.memory_space<vmem>>, vector<24x96xf32>
    tpu.vector_store %arg7[%c0_14, %c0_15], %30 {strides = array<i32>} : memref<24x96xf32, #tpu.memory_space<vmem>>, vector<24x96xf32>,
    return
  }
  func.func @transform_0(%arg0: i32, %arg1: i32) -> (i32, i32) {
    %c0_i32 = arith.constant 0 : i32
    %c0_i32_0 = arith.constant 0 : i32
    return %arg0, %c0_i32 : i32, i32
  }
  func.func @transform_1(%arg0: i32, %arg1: i32) -> (i32, i32) {
    %c0_i32 = arith.constant 0 : i32
    %c0_i32_0 = arith.constant 0 : i32
    %c0_i32_1 = arith.constant 0 : i32
    return %c0_i32, %c0_i32_0 : i32, i32
  }
  func.func @transform_2(%arg0: i32, %arg1: i32) -> (i32, i32) {
    %c0_i32 = arith.constant 0 : i32
    %c0_i32_0 = arith.constant 0 : i32
    %c0_i32_1 = arith.constant 0 : i32
    return %c0_i32, %c0_i32_0 : i32, i32
  }
  func.func @transform_3(%arg0: i32, %arg1: i32) -> (i32, i32) {
    %c0_i32 = arith.constant 0 : i32
    %c0_i32_0 = arith.constant 0 : i32
    return %c0_i32, %arg1 : i32, i32
  }
  func.func @transform_4(%arg0: i32, %arg1: i32) -> (i32, i32) {
    %c0_i32 = arith.constant 0 : i32
    %c0_i32_0 = arith.constant 0 : i32
    return %c0_i32, %arg1 : i32, i32
  }
  func.func @transform_5(%arg0: i32, %arg1: i32) -> (i32, i32) {
    %c0_i32 = arith.constant 0 : i32
    return %arg0, %arg1 : i32, i32
  }
}

module attributes {stable_mosaic.version = 11 : i64} {
  func.func @kernel(%arg0: i32, %arg1: i32, %arg2: i32, %arg3: memref<24x32xf32, #tpu.memory_space<vmem>>, %arg4: memref<32x32xbf16, #tpu.memory_space<vmem>>, %arg5: memref<1x32xf32, #tpu.memory_space<vmem>>, %arg6: memref<24x32xf32, #tpu.memory_space<vmem>>, %arg7: memref<24x32xf32, #tpu.memory_space<vmem>>, %arg8: memref<24x32xf32, #tpu.memory_space<vmem>>) attributes {dimension_semantics = [#tpu.dimension_semantics<parallel>, #tpu.dimension_semantics<parallel>, #tpu.dimension_semantics<arbitrary>], iteration_bounds = array<i64: 1, 1, 1>, scalar_prefetch = 0 : i64, scratch_operands = 1 : i64, tpu.core_type = #tpu.core_type<tc>, window_params = [{transform_indices = @transform_0, window_bounds = array<i64: 24, 32>}, {transform_indices = @transform_1, window_bounds = array<i64: 32, 32>}, {transform_indices = @transform_2, window_bounds = array<i64: 1, 32>}, {transform_indices = @transform_3, window_bounds = array<i64: 24, 32>}, {transform_indices = @transform_4, window_bounds = array<i64: 24, 32>}]} {
    %c0_i32 = arith.constant 0 : i32
    %0 = arith.cmpi eq, %arg2, %c0_i32 : i32
    %1 = arith.extui %0 : i1 to i32
    %c0_i32_0 = arith.constant 0 : i32
    %2 = arith.cmpi ne, %1, %c0_i32_0 : i32
    scf.if %2 {
      %cst_10 = arith.constant 0.000000e+00 : f32
      %13 = vector.broadcast %cst_10 : f32 to vector<24x32xf32>
      %c0_11 = arith.constant 0 : index
      %c0_12 = arith.constant 0 : index
      %14 = vector.load %arg8[%c0_11, %c0_12] : memref<24x32xf32, #tpu.memory_space<vmem>>, vector<24x32xf32>
      tpu.vector_store %arg8[%c0_11, %c0_12], %13 {strides = array<i32>} : memref<24x32xf32, #tpu.memory_space<vmem>>, vector<24x32xf32>,
    } else {
    }
    %c0 = arith.constant 0 : index
    %c0_1 = arith.constant 0 : index
    %3 = vector.load %arg8[%c0, %c0_1] : memref<24x32xf32, #tpu.memory_space<vmem>>, vector<24x32xf32>
    %c0_2 = arith.constant 0 : index
    %c0_3 = arith.constant 0 : index
    %4 = vector.load %arg3[%c0_2, %c0_3] : memref<24x32xf32, #tpu.memory_space<vmem>>, vector<24x32xf32>
    %5 = arith.truncf %4 : vector<24x32xf32> to vector<24x32xbf16>
    %c0_4 = arith.constant 0 : index
    %c0_5 = arith.constant 0 : index
    %6 = vector.load %arg4[%c0_4, %c0_5] : memref<32x32xbf16, #tpu.memory_space<vmem>>, vector<32x32xbf16>
    %cst = arith.constant dense<0.000000e+00> : vector<24x32xf32>
    %7 = tpu.matmul %5, %6, %cst {dimension_numbers = #tpu.dot_dimension_numbers<[1], [0], [0], [1], [0, 0, 1, 1], [], []>} : vector<24x32xbf16>, vector<32x32xbf16>, vector<24x32xf32> -> vector<24x32xf32>
    %8 = arith.addf %3, %7 : vector<24x32xf32>
    %c0_6 = arith.constant 0 : index
    %c0_7 = arith.constant 0 : index
    %9 = vector.load %arg8[%c0_6, %c0_7] : memref<24x32xf32, #tpu.memory_space<vmem>>, vector<24x32xf32>
    tpu.vector_store %arg8[%c0_6, %c0_7], %8 {strides = array<i32>} : memref<24x32xf32, #tpu.memory_space<vmem>>, vector<24x32xf32>,
    %c0_i32_8 = arith.constant 0 : i32
    %10 = arith.cmpi eq, %arg2, %c0_i32_8 : i32
    %11 = arith.extui %10 : i1 to i32
    %c0_i32_9 = arith.constant 0 : i32
    %12 = arith.cmpi ne, %11, %c0_i32_9 : i32
    scf.if %12 {
      %c0_10 = arith.constant 0 : index
      %c0_11 = arith.constant 0 : index
      %13 = vector.load %arg8[%c0_10, %c0_11] : memref<24x32xf32, #tpu.memory_space<vmem>>, vector<24x32xf32>
      %c0_12 = arith.constant 0 : index
      %c0_13 = arith.constant 0 : index
      %14 = vector.load %arg5[%c0_12, %c0_13] : memref<1x32xf32, #tpu.memory_space<vmem>>, vector<1x32xf32>
      %15 = vector.broadcast %14 : vector<1x32xf32> to vector<24x32xf32>
      %16 = arith.addf %13, %15 : vector<24x32xf32>
      %c0_14 = arith.constant 0 : index
      %c0_15 = arith.constant 0 : index
      %17 = vector.load %arg6[%c0_14, %c0_15] : memref<24x32xf32, #tpu.memory_space<vmem>>, vector<24x32xf32>
      %18 = arith.addf %16, %17 : vector<24x32xf32>
      %c0_16 = arith.constant 0 : index
      %c0_17 = arith.constant 0 : index
      %19 = vector.load %arg7[%c0_16, %c0_17] : memref<24x32xf32, #tpu.memory_space<vmem>>, vector<24x32xf32>
      tpu.vector_store %arg7[%c0_16, %c0_17], %18 {strides = array<i32>} : memref<24x32xf32, #tpu.memory_space<vmem>>, vector<24x32xf32>,
    } else {
    }
    return
  }
  func.func @transform_0(%arg0: i32, %arg1: i32, %arg2: i32) -> (i32, i32) {
    %c0_i32 = arith.constant 0 : i32
    return %arg0, %arg2 : i32, i32
  }
  func.func @transform_1(%arg0: i32, %arg1: i32, %arg2: i32) -> (i32, i32) {
    %c0_i32 = arith.constant 0 : i32
    return %arg2, %arg1 : i32, i32
  }
  func.func @transform_2(%arg0: i32, %arg1: i32, %arg2: i32) -> (i32, i32) {
    %c0_i32 = arith.constant 0 : i32
    %c0_i32_0 = arith.constant 0 : i32
    return %c0_i32, %arg1 : i32, i32
  }
  func.func @transform_3(%arg0: i32, %arg1: i32, %arg2: i32) -> (i32, i32) {
    %c0_i32 = arith.constant 0 : i32
    return %arg0, %arg1 : i32, i32
  }
  func.func @transform_4(%arg0: i32, %arg1: i32, %arg2: i32) -> (i32, i32) {
    %c0_i32 = arith.constant 0 : i32
    return %arg0, %arg1 : i32, i32
  }
}

module attributes {stable_mosaic.version = 11 : i64} {
  func.func @kernel(%arg0: i32, %arg1: memref<8x8xf32, #tpu.memory_space<vmem>>, %arg2: memref<1x8x96xf32, #tpu.memory_space<vmem>>, %arg3: memref<1x8x32xf32, #tpu.memory_space<vmem>>) attributes {dimension_semantics = [#tpu.dimension_semantics<parallel>], iteration_bounds = array<i64: 3>, scalar_prefetch = 0 : i64, scratch_operands = 0 : i64, tpu.core_type = #tpu.core_type<tc>, window_params = [{pipeline_mode = #tpu.pipeline_mode<synchronous>, transform_indices = @transform_0, window_bounds = array<i64: 8, 8>}, {transform_indices = @transform_1, window_bounds = array<i64: 1, 8, 96>}, {transform_indices = @transform_2, window_bounds = array<i64: 1, 8, 32>}]} {
    %c0 = arith.constant 0 : index
    %c0_0 = arith.constant 0 : index
    %0 = vector.load %arg1[%c0, %c0_0] : memref<8x8xf32, #tpu.memory_space<vmem>>, vector<8x8xf32>
    %c0_1 = arith.constant 0 : index
    %c0_2 = arith.constant 0 : index
    %c0_3 = arith.constant 0 : index
    %1 = vector.load %arg2[%c0_1, %c0_2, %c0_3] : memref<1x8x96xf32, #tpu.memory_space<vmem>>, vector<1x8x96xf32>
    %2 = vector.shape_cast %1 : vector<1x8x96xf32> to vector<8x96xf32>
    %3 = vector.extract_strided_slice %2 {offsets = [0, 0], sizes = [8, 8], strides = [1, 1]} : vector<8x96xf32> to vector<8x8xf32>
    %4 = arith.truncf %3 : vector<8x8xf32> to vector<8x8xbf16>
    %5 = vector.extract_strided_slice %2 {offsets = [0, 32], sizes = [8, 8], strides = [1, 1]} : vector<8x96xf32> to vector<8x8xf32>
    %6 = arith.truncf %5 : vector<8x8xf32> to vector<8x8xbf16>
    %7 = vector.extract_strided_slice %2 {offsets = [0, 64], sizes = [8, 8], strides = [1, 1]} : vector<8x96xf32> to vector<8x8xf32>
    %8 = arith.truncf %7 : vector<8x8xf32> to vector<8x8xbf16>
    %cst = arith.constant dense<0.000000e+00> : vector<8x8xf32>
    %9 = tpu.matmul %4, %6, %cst {dimension_numbers = #tpu.dot_dimension_numbers<[1], [1], [0], [0], [0, 0, 1, 0], [], []>} : vector<8x8xbf16>, vector<8x8xbf16>, vector<8x8xf32> -> vector<8x8xf32>
    %cst_4 = arith.constant 0.353553385 : f32
    %10 = vector.broadcast %cst_4 : f32 to vector<8x8xf32>
    %11 = arith.mulf %9, %10 : vector<8x8xf32>
    %12 = arith.addf %11, %0 : vector<8x8xf32>
    %cst_5 = arith.constant dense<0xFF800000> : vector<8xf32>
    %13 = vector.multi_reduction <maximumf>, %12, %cst_5 [1] : vector<8x8xf32> to vector<8xf32>
    %14 = vector.shape_cast %13 : vector<8xf32> to vector<8x1xf32>
    %15 = vector.broadcast %14 : vector<8x1xf32> to vector<8x8xf32>
    %16 = arith.subf %12, %15 : vector<8x8xf32>
    %17 = math.exp %16 : vector<8x8xf32>
    %cst_6 = arith.constant dense<0.000000e+00> : vector<8xf32>
    %18 = vector.multi_reduction <add>, %17, %cst_6 [1] : vector<8x8xf32> to vector<8xf32>
    %19 = vector.shape_cast %18 : vector<8xf32> to vector<8x1xf32>
    %20 = tpu.reciprocal %19 {approx = true} : vector<8x1xf32> -> vector<8x1xf32>
    %21 = vector.broadcast %20 : vector<8x1xf32> to vector<8x8xf32>
    %22 = arith.mulf %17, %21 : vector<8x8xf32>
    %23 = arith.truncf %22 : vector<8x8xf32> to vector<8x8xbf16>
    %cst_7 = arith.constant dense<0.000000e+00> : vector<8x8xf32>
    %24 = tpu.matmul %23, %8, %cst_7 {dimension_numbers = #tpu.dot_dimension_numbers<[1], [0], [0], [1], [0, 0, 1, 1], [], []>} : vector<8x8xbf16>, vector<8x8xbf16>, vector<8x8xf32> -> vector<8x8xf32>
    %25 = vector.extract_strided_slice %2 {offsets = [0, 8], sizes = [8, 8], strides = [1, 1]} : vector<8x96xf32> to vector<8x8xf32>
    %26 = arith.truncf %25 : vector<8x8xf32> to vector<8x8xbf16>
    %27 = vector.extract_strided_slice %2 {offsets = [0, 40], sizes = [8, 8], strides = [1, 1]} : vector<8x96xf32> to vector<8x8xf32>
    %28 = arith.truncf %27 : vector<8x8xf32> to vector<8x8xbf16>
    %29 = vector.extract_strided_slice %2 {offsets = [0, 72], sizes = [8, 8], strides = [1, 1]} : vector<8x96xf32> to vector<8x8xf32>
    %30 = arith.truncf %29 : vector<8x8xf32> to vector<8x8xbf16>
    %cst_8 = arith.constant dense<0.000000e+00> : vector<8x8xf32>
    %31 = tpu.matmul %26, %28, %cst_8 {dimension_numbers = #tpu.dot_dimension_numbers<[1], [1], [0], [0], [0, 0, 1, 0], [], []>} : vector<8x8xbf16>, vector<8x8xbf16>, vector<8x8xf32> -> vector<8x8xf32>
    %cst_9 = arith.constant 0.353553385 : f32
    %32 = vector.broadcast %cst_9 : f32 to vector<8x8xf32>
    %33 = arith.mulf %31, %32 : vector<8x8xf32>
    %34 = arith.addf %33, %0 : vector<8x8xf32>
    %cst_10 = arith.constant dense<0xFF800000> : vector<8xf32>
    %35 = vector.multi_reduction <maximumf>, %34, %cst_10 [1] : vector<8x8xf32> to vector<8xf32>
    %36 = vector.shape_cast %35 : vector<8xf32> to vector<8x1xf32>
    %37 = vector.broadcast %36 : vector<8x1xf32> to vector<8x8xf32>
    %38 = arith.subf %34, %37 : vector<8x8xf32>
    %39 = math.exp %38 : vector<8x8xf32>
    %cst_11 = arith.constant dense<0.000000e+00> : vector<8xf32>
    %40 = vector.multi_reduction <add>, %39, %cst_11 [1] : vector<8x8xf32> to vector<8xf32>
    %41 = vector.shape_cast %40 : vector<8xf32> to vector<8x1xf32>
    %42 = tpu.reciprocal %41 {approx = true} : vector<8x1xf32> -> vector<8x1xf32>
    %43 = vector.broadcast %42 : vector<8x1xf32> to vector<8x8xf32>
    %44 = arith.mulf %39, %43 : vector<8x8xf32>
    %45 = arith.truncf %44 : vector<8x8xf32> to vector<8x8xbf16>
    %cst_12 = arith.constant dense<0.000000e+00> : vector<8x8xf32>
    %46 = tpu.matmul %45, %30, %cst_12 {dimension_numbers = #tpu.dot_dimension_numbers<[1], [0], [0], [1], [0, 0, 1, 1], [], []>} : vector<8x8xbf16>, vector<8x8xbf16>, vector<8x8xf32> -> vector<8x8xf32>
    %47 = vector.extract_strided_slice %2 {offsets = [0, 16], sizes = [8, 8], strides = [1, 1]} : vector<8x96xf32> to vector<8x8xf32>
    %48 = arith.truncf %47 : vector<8x8xf32> to vector<8x8xbf16>
    %49 = vector.extract_strided_slice %2 {offsets = [0, 48], sizes = [8, 8], strides = [1, 1]} : vector<8x96xf32> to vector<8x8xf32>
    %50 = arith.truncf %49 : vector<8x8xf32> to vector<8x8xbf16>
    %51 = vector.extract_strided_slice %2 {offsets = [0, 80], sizes = [8, 8], strides = [1, 1]} : vector<8x96xf32> to vector<8x8xf32>
    %52 = arith.truncf %51 : vector<8x8xf32> to vector<8x8xbf16>
    %cst_13 = arith.constant dense<0.000000e+00> : vector<8x8xf32>
    %53 = tpu.matmul %48, %50, %cst_13 {dimension_numbers = #tpu.dot_dimension_numbers<[1], [1], [0], [0], [0, 0, 1, 0], [], []>} : vector<8x8xbf16>, vector<8x8xbf16>, vector<8x8xf32> -> vector<8x8xf32>
    %cst_14 = arith.constant 0.353553385 : f32
    %54 = vector.broadcast %cst_14 : f32 to vector<8x8xf32>
    %55 = arith.mulf %53, %54 : vector<8x8xf32>
    %56 = arith.addf %55, %0 : vector<8x8xf32>
    %cst_15 = arith.constant dense<0xFF800000> : vector<8xf32>
    %57 = vector.multi_reduction <maximumf>, %56, %cst_15 [1] : vector<8x8xf32> to vector<8xf32>
    %58 = vector.shape_cast %57 : vector<8xf32> to vector<8x1xf32>
    %59 = vector.broadcast %58 : vector<8x1xf32> to vector<8x8xf32>
    %60 = arith.subf %56, %59 : vector<8x8xf32>
    %61 = math.exp %60 : vector<8x8xf32>
    %cst_16 = arith.constant dense<0.000000e+00> : vector<8xf32>
    %62 = vector.multi_reduction <add>, %61, %cst_16 [1] : vector<8x8xf32> to vector<8xf32>
    %63 = vector.shape_cast %62 : vector<8xf32> to vector<8x1xf32>
    %64 = tpu.reciprocal %63 {approx = true} : vector<8x1xf32> -> vector<8x1xf32>
    %65 = vector.broadcast %64 : vector<8x1xf32> to vector<8x8xf32>
    %66 = arith.mulf %61, %65 : vector<8x8xf32>
    %67 = arith.truncf %66 : vector<8x8xf32> to vector<8x8xbf16>
    %cst_17 = arith.constant dense<0.000000e+00> : vector<8x8xf32>
    %68 = tpu.matmul %67, %52, %cst_17 {dimension_numbers = #tpu.dot_dimension_numbers<[1], [0], [0], [1], [0, 0, 1, 1], [], []>} : vector<8x8xbf16>, vector<8x8xbf16>, vector<8x8xf32> -> vector<8x8xf32>
    %69 = vector.extract_strided_slice %2 {offsets = [0, 24], sizes = [8, 8], strides = [1, 1]} : vector<8x96xf32> to vector<8x8xf32>
    %70 = arith.truncf %69 : vector<8x8xf32> to vector<8x8xbf16>
    %71 = vector.extract_strided_slice %2 {offsets = [0, 56], sizes = [8, 8], strides = [1, 1]} : vector<8x96xf32> to vector<8x8xf32>
    %72 = arith.truncf %71 : vector<8x8xf32> to vector<8x8xbf16>
    %73 = vector.extract_strided_slice %2 {offsets = [0, 88], sizes = [8, 8], strides = [1, 1]} : vector<8x96xf32> to vector<8x8xf32>
    %74 = arith.truncf %73 : vector<8x8xf32> to vector<8x8xbf16>
    %cst_18 = arith.constant dense<0.000000e+00> : vector<8x8xf32>
    %75 = tpu.matmul %70, %72, %cst_18 {dimension_numbers = #tpu.dot_dimension_numbers<[1], [1], [0], [0], [0, 0, 1, 0], [], []>} : vector<8x8xbf16>, vector<8x8xbf16>, vector<8x8xf32> -> vector<8x8xf32>
    %cst_19 = arith.constant 0.353553385 : f32
    %76 = vector.broadcast %cst_19 : f32 to vector<8x8xf32>
    %77 = arith.mulf %75, %76 : vector<8x8xf32>
    %78 = arith.addf %77, %0 : vector<8x8xf32>
    %cst_20 = arith.constant dense<0xFF800000> : vector<8xf32>
    %79 = vector.multi_reduction <maximumf>, %78, %cst_20 [1] : vector<8x8xf32> to vector<8xf32>
    %80 = vector.shape_cast %79 : vector<8xf32> to vector<8x1xf32>
    %81 = vector.broadcast %80 : vector<8x1xf32> to vector<8x8xf32>
    %82 = arith.subf %78, %81 : vector<8x8xf32>
    %83 = math.exp %82 : vector<8x8xf32>
    %cst_21 = arith.constant dense<0.000000e+00> : vector<8xf32>
    %84 = vector.multi_reduction <add>, %83, %cst_21 [1] : vector<8x8xf32> to vector<8xf32>
    %85 = vector.shape_cast %84 : vector<8xf32> to vector<8x1xf32>
    %86 = tpu.reciprocal %85 {approx = true} : vector<8x1xf32> -> vector<8x1xf32>
    %87 = vector.broadcast %86 : vector<8x1xf32> to vector<8x8xf32>
    %88 = arith.mulf %83, %87 : vector<8x8xf32>
    %89 = arith.truncf %88 : vector<8x8xf32> to vector<8x8xbf16>
    %cst_22 = arith.constant dense<0.000000e+00> : vector<8x8xf32>
    %90 = tpu.matmul %89, %74, %cst_22 {dimension_numbers = #tpu.dot_dimension_numbers<[1], [0], [0], [1], [0, 0, 1, 1], [], []>} : vector<8x8xbf16>, vector<8x8xbf16>, vector<8x8xf32> -> vector<8x8xf32>
    %91 = tpu.concatenate %24, %46, %68, %90 in 1 : vector<8x8xf32>, vector<8x8xf32>, vector<8x8xf32>, vector<8x8xf32> -> vector<8x32xf32>
    %c0_23 = arith.constant 0 : index
    %c0_24 = arith.constant 0 : index
    %c0_25 = arith.constant 0 : index
    %92 = vector.load %arg3[%c0_23, %c0_24, %c0_25] : memref<1x8x32xf32, #tpu.memory_space<vmem>>, vector<1x8x32xf32>
    %93 = vector.shape_cast %92 : vector<1x8x32xf32> to vector<8x32xf32>
    %94 = vector.shape_cast %91 : vector<8x32xf32> to vector<1x8x32xf32>
    tpu.vector_store %arg3[%c0_23, %c0_24, %c0_25], %94 {strides = array<i32>} : memref<1x8x32xf32, #tpu.memory_space<vmem>>, vector<1x8x32xf32>,
    return
  }
  func.func @transform_0(%arg0: i32) -> (i32, i32) {
    %c0_i32 = arith.constant 0 : i32
    %c0_i32_0 = arith.constant 0 : i32
    %c0_i32_1 = arith.constant 0 : i32
    return %c0_i32, %c0_i32_0 : i32, i32
  }
  func.func @transform_1(%arg0: i32) -> (i32, i32, i32) {
    %c0_i32 = arith.constant 0 : i32
    %c0_i32_0 = arith.constant 0 : i32
    %c0_i32_1 = arith.constant 0 : i32
    return %arg0, %c0_i32, %c0_i32_0 : i32, i32, i32
  }
  func.func @transform_2(%arg0: i32) -> (i32, i32, i32) {
    %c0_i32 = arith.constant 0 : i32
    %c0_i32_0 = arith.constant 0 : i32
    %c0_i32_1 = arith.constant 0 : i32
    return %arg0, %c0_i32, %c0_i32_0 : i32, i32, i32
  }
}

module attributes {stable_mosaic.version = 11 : i64} {
  func.func @kernel(%arg0: i32, %arg1: i32, %arg2: memref<24x32xf32, #tpu.memory_space<vmem>>, %arg3: memref<1x32xf32, #tpu.memory_space<vmem>>, %arg4: memref<1x32xf32, #tpu.memory_space<vmem>>, %arg5: memref<32x128xbf16, #tpu.memory_space<vmem>>, %arg6: memref<1x128xf32, #tpu.memory_space<vmem>>, %arg7: memref<24x128xf32, #tpu.memory_space<vmem>>) attributes {dimension_semantics = [#tpu.dimension_semantics<parallel>, #tpu.dimension_semantics<parallel>], iteration_bounds = array<i64: 1, 1>, scalar_prefetch = 0 : i64, scratch_operands = 0 : i64, tpu.core_type = #tpu.core_type<tc>, window_params = [{transform_indices = @transform_0, window_bounds = array<i64: 24, 32>}, {pipeline_mode = #tpu.pipeline_mode<synchronous>, transform_indices = @transform_1, window_bounds = array<i64: 1, 32>}, {pipeline_mode = #tpu.pipeline_mode<synchronous>, transform_indices = @transform_2, window_bounds = array<i64: 1, 32>}, {transform_indices = @transform_3, window_bounds = array<i64: 32, 128>}, {transform_indices = @transform_4, window_bounds = array<i64: 1, 128>}, {transform_indices = @transform_5, window_bounds = array<i64: 24, 128>}]} {
    %c0 = arith.constant 0 : index
    %c0_0 = arith.constant 0 : index
    %0 = vector.load %arg2[%c0, %c0_0] : memref<24x32xf32, #tpu.memory_space<vmem>>, vector<24x32xf32>
    %cst = arith.constant dense<0.000000e+00> : vector<24xf32>
    %1 = vector.multi_reduction <add>, %0, %cst [1] : vector<24x32xf32> to vector<24xf32>
    %2 = vector.shape_cast %1 : vector<24xf32> to vector<24x1xf32>
    %cst_1 = arith.constant 3.200000e+01 : f32
    %3 = vector.broadcast %cst_1 : f32 to vector<24x1xf32>
    %4 = arith.divf %2, %3 : vector<24x1xf32>
    %5 = vector.broadcast %4 : vector<24x1xf32> to vector<24x32xf32>
    %6 = arith.subf %0, %5 : vector<24x32xf32>
    %7 = arith.mulf %6, %6 : vector<24x32xf32>
    %cst_2 = arith.constant dense<0.000000e+00> : vector<24xf32>
    %8 = vector.multi_reduction <add>, %7, %cst_2 [1] : vector<24x32xf32> to vector<24xf32>
    %9 = vector.shape_cast %8 : vector<24xf32> to vector<24x1xf32>
    %cst_3 = arith.constant 3.200000e+01 : f32
    %10 = vector.broadcast %cst_3 : f32 to vector<24x1xf32>
    %11 = arith.divf %9, %10 : vector<24x1xf32>
    %12 = vector.broadcast %4 : vector<24x1xf32> to vector<24x32xf32>
    %13 = arith.subf %0, %12 : vector<24x32xf32>
    %cst_4 = arith.constant 9.99999974E-6 : f32
    %14 = vector.broadcast %cst_4 : f32 to vector<24x1xf32>
    %15 = arith.addf %11, %14 : vector<24x1xf32>
    %16 = math.rsqrt %15 : vector<24x1xf32>
    %17 = vector.broadcast %16 : vector<24x1xf32> to vector<24x32xf32>
    %18 = arith.mulf %13, %17 : vector<24x32xf32>
    %c0_5 = arith.constant 0 : index
    %c0_6 = arith.constant 0 : index
    %19 = vector.load %arg3[%c0_5, %c0_6] : memref<1x32xf32, #tpu.memory_space<vmem>>, vector<1x32xf32>
    %20 = vector.broadcast %19 : vector<1x32xf32> to vector<24x32xf32>
    %21 = arith.mulf %18, %20 : vector<24x32xf32>
    %c0_7 = arith.constant 0 : index
    %c0_8 = arith.constant 0 : index
    %22 = vector.load %arg4[%c0_7, %c0_8] : memref<1x32xf32, #tpu.memory_space<vmem>>, vector<1x32xf32>
    %23 = vector.broadcast %22 : vector<1x32xf32> to vector<24x32xf32>
    %24 = arith.addf %21, %23 : vector<24x32xf32>
    %25 = arith.truncf %24 : vector<24x32xf32> to vector<24x32xbf16>
    %c0_9 = arith.constant 0 : index
    %c0_10 = arith.constant 0 : index
    %26 = vector.load %arg5[%c0_9, %c0_10] : memref<32x128xbf16, #tpu.memory_space<vmem>>, vector<32x128xbf16>
    %cst_11 = arith.constant dense<0.000000e+00> : vector<24x128xf32>
    %27 = tpu.matmul %25, %26, %cst_11 {dimension_numbers = #tpu.dot_dimension_numbers<[1], [0], [0], [1], [0, 0, 1, 1], [], []>} : vector<24x32xbf16>, vector<32x128xbf16>, vector<24x128xf32> -> vector<24x128xf32>
    %c0_12 = arith.constant 0 : index
    %c0_13 = arith.constant 0 : index
    %28 = vector.load %arg6[%c0_12, %c0_13] : memref<1x128xf32, #tpu.memory_space<vmem>>, vector<1x128xf32>
    %29 = vector.broadcast %28 : vector<1x128xf32> to vector<24x128xf32>
    %30 = arith.addf %27, %29 : vector<24x128xf32>
    %cst_14 = arith.constant 1.702000e+00 : f32
    %31 = vector.broadcast %cst_14 : f32 to vector<24x128xf32>
    %32 = arith.mulf %31, %30 : vector<24x128xf32>
    %33 = arith.negf %32 : vector<24x128xf32>
    %34 = math.exp %33 : vector<24x128xf32>
    %cst_15 = arith.constant 1.000000e+00 : f32
    %35 = vector.broadcast %cst_15 : f32 to vector<24x128xf32>
    %36 = arith.addf %35, %34 : vector<24x128xf32>
    %37 = arith.divf %35, %36 : vector<24x128xf32>
    %38 = arith.mulf %30, %37 : vector<24x128xf32>
    %c0_16 = arith.constant 0 : index
    %c0_17 = arith.constant 0 : index
    %39 = vector.load %arg7[%c0_16, %c0_17] : memref<24x128xf32, #tpu.memory_space<vmem>>, vector<24x128xf32>
    tpu.vector_store %arg7[%c0_16, %c0_17], %38 {strides = array<i32>} : memref<24x128xf32, #tpu.memory_space<vmem>>, vector<24x128xf32>,
    return
  }
  func.func @transform_0(%arg0: i32, %arg1: i32) -> (i32, i32) {
    %c0_i32 = arith.constant 0 : i32
    %c0_i32_0 = arith.constant 0 : i32
    return %arg0, %c0_i32 : i32, i32
  }
  func.func @transform_1(%arg0: i32, %arg1: i32) -> (i32, i32) {
    %c0_i32 = arith.constant 0 : i32
    %c0_i32_0 = arith.constant 0 : i32
    %c0_i32_1 = arith.constant 0 : i32
    return %c0_i32, %c0_i32_0 : i32, i32
  }
  func.func @transform_2(%arg0: i32, %arg1: i32) -> (i32, i32) {
    %c0_i32 = arith.constant 0 : i32
    %c0_i32_0 = arith.constant 0 : i32
    %c0_i32_1 = arith.constant 0 : i32
    return %c0_i32, %c0_i32_0 : i32, i32
  }
  func.func @transform_3(%arg0: i32, %arg1: i32) -> (i32, i32) {
    %c0_i32 = arith.constant 0 : i32
    %c0_i32_0 = arith.constant 0 : i32
    return %c0_i32, %arg1 : i32, i32
  }
  func.func @transform_4(%arg0: i32, %arg1: i32) -> (i32, i32) {
    %c0_i32 = arith.constant 0 : i32
    %c0_i32_0 = arith.constant 0 : i32
    return %c0_i32, %arg1 : i32, i32
  }
  func.func @transform_5(%arg0: i32, %arg1: i32) -> (i32, i32) {
    %c0_i32 = arith.constant 0 : i32
    return %arg0, %arg1 : i32, i32
  }
}

module attributes {stable_mosaic.version = 11 : i64} {
  func.func @kernel(%arg0: i32, %arg1: i32, %arg2: i32, %arg3: memref<24x128xf32, #tpu.memory_space<vmem>>, %arg4: memref<128x32xbf16, #tpu.memory_space<vmem>>, %arg5: memref<1x32xf32, #tpu.memory_space<vmem>>, %arg6: memref<24x32xf32, #tpu.memory_space<vmem>>, %arg7: memref<24x32xf32, #tpu.memory_space<vmem>>, %arg8: memref<24x32xf32, #tpu.memory_space<vmem>>) attributes {dimension_semantics = [#tpu.dimension_semantics<parallel>, #tpu.dimension_semantics<parallel>, #tpu.dimension_semantics<arbitrary>], iteration_bounds = array<i64: 1, 1, 1>, scalar_prefetch = 0 : i64, scratch_operands = 1 : i64, tpu.core_type = #tpu.core_type<tc>, window_params = [{transform_indices = @transform_0, window_bounds = array<i64: 24, 128>}, {transform_indices = @transform_1, window_bounds = array<i64: 128, 32>}, {transform_indices = @transform_2, window_bounds = array<i64: 1, 32>}, {transform_indices = @transform_3, window_bounds = array<i64: 24, 32>}, {transform_indices = @transform_4, window_bounds = array<i64: 24, 32>}]} {
    %c0_i32 = arith.constant 0 : i32
    %0 = arith.cmpi eq, %arg2, %c0_i32 : i32
    %1 = arith.extui %0 : i1 to i32
    %c0_i32_0 = arith.constant 0 : i32
    %2 = arith.cmpi ne, %1, %c0_i32_0 : i32
    scf.if %2 {
      %cst_10 = arith.constant 0.000000e+00 : f32
      %13 = vector.broadcast %cst_10 : f32 to vector<24x32xf32>
      %c0_11 = arith.constant 0 : index
      %c0_12 = arith.constant 0 : index
      %14 = vector.load %arg8[%c0_11, %c0_12] : memref<24x32xf32, #tpu.memory_space<vmem>>, vector<24x32xf32>
      tpu.vector_store %arg8[%c0_11, %c0_12], %13 {strides = array<i32>} : memref<24x32xf32, #tpu.memory_space<vmem>>, vector<24x32xf32>,
    } else {
    }
    %c0 = arith.constant 0 : index
    %c0_1 = arith.constant 0 : index
    %3 = vector.load %arg8[%c0, %c0_1] : memref<24x32xf32, #tpu.memory_space<vmem>>, vector<24x32xf32>
    %c0_2 = arith.constant 0 : index
    %c0_3 = arith.constant 0 : index
    %4 = vector.load %arg3[%c0_2, %c0_3] : memref<24x128xf32, #tpu.memory_space<vmem>>, vector<24x128xf32>
    %5 = arith.truncf %4 : vector<24x128xf32> to vector<24x128xbf16>
    %c0_4 = arith.constant 0 : index
    %c0_5 = arith.constant 0 : index
    %6 = vector.load %arg4[%c0_4, %c0_5] : memref<128x32xbf16, #tpu.memory_space<vmem>>, vector<128x32xbf16>
    %cst = arith.constant dense<0.000000e+00> : vector<24x32xf32>
    %7 = tpu.matmul %5, %6, %cst {dimension_numbers = #tpu.dot_dimension_numbers<[1], [0], [0], [1], [0, 0, 1, 1], [], []>} : vector<24x128xbf16>, vector<128x32xbf16>, vector<24x32xf32> -> vector<24x32xf32>
    %8 = arith.addf %3, %7 : vector<24x32xf32>
    %c0_6 = arith.constant 0 : index
    %c0_7 = arith.constant 0 : index
    %9 = vector.load %arg8[%c0_6, %c0_7] : memref<24x32xf32, #tpu.memory_space<vmem>>, vector<24x32xf32>
    tpu.vector_store %arg8[%c0_6, %c0_7], %8 {strides = array<i32>} : memref<24x32xf32, #tpu.memory_space<vmem>>, vector<24x32xf32>,
    %c0_i32_8 = arith.constant 0 : i32
    %10 = arith.cmpi eq, %arg2, %c0_i32_8 : i32
    %11 = arith.extui %10 : i1 to i32
    %c0_i32_9 = arith.constant 0 : i32
    %12 = arith.cmpi ne, %11, %c0_i32_9 : i32
    scf.if %12 {
      %c0_10 = arith.constant 0 : index
      %c0_11 = arith.constant 0 : index
      %13 = vector.load %arg8[%c0_10, %c0_11] : memref<24x32xf32, #tpu.memory_space<vmem>>, vector<24x32xf32>
      %c0_12 = arith.constant 0 : index
      %c0_13 = arith.constant 0 : index
      %14 = vector.load %arg5[%c0_12, %c0_13] : memref<1x32xf32, #tpu.memory_space<vmem>>, vector<1x32xf32>
      %15 = vector.broadcast %14 : vector<1x32xf32> to vector<24x32xf32>
      %16 = arith.addf %13, %15 : vector<24x32xf32>
      %c0_14 = arith.constant 0 : index
      %c0_15 = arith.constant 0 : index
      %17 = vector.load %arg6[%c0_14, %c0_15] : memref<24x32xf32, #tpu.memory_space<vmem>>, vector<24x32xf32>
      %18 = arith.addf %16, %17 : vector<24x32xf32>
      %c0_16 = arith.constant 0 : index
      %c0_17 = arith.constant 0 : index
      %19 = vector.load %arg7[%c0_16, %c0_17] : memref<24x32xf32, #tpu.memory_space<vmem>>, vector<24x32xf32>
      tpu.vector_store %arg7[%c0_16, %c0_17], %18 {strides = array<i32>} : memref<24x32xf32, #tpu.memory_space<vmem>>, vector<24x32xf32>,
    } else {
    }
    return
  }
  func.func @transform_0(%arg0: i32, %arg1: i32, %arg2: i32) -> (i32, i32) {
    %c0_i32 = arith.constant 0 : i32
    return %arg0, %arg2 : i32, i32
  }
  func.func @transform_1(%arg0: i32, %arg1: i32, %arg2: i32) -> (i32, i32) {
    %c0_i32 = arith.constant 0 : i32
    return %arg2, %arg1 : i32, i32
  }
  func.func @transform_2(%arg0: i32, %arg1: i32, %arg2: i32) -> (i32, i32) {
    %c0_i32 = arith.constant 0 : i32
    %c0_i32_0 = arith.constant 0 : i32
    return %c0_i32, %arg1 : i32, i32
  }
  func.func @transform_3(%arg0: i32, %arg1: i32, %arg2: i32) -> (i32, i32) {
    %c0_i32 = arith.constant 0 : i32
    return %arg0, %arg1 : i32, i32
  }
  func.func @transform_4(%arg0: i32, %arg1: i32, %arg2: i32) -> (i32, i32) {
    %c0_i32 = arith.constant 0 : i32
    return %arg0, %arg1 : i32, i32
  }
}

module attributes {stable_mosaic.version = 11 : i64} {
  func.func @kernel(%arg0: i32, %arg1: i32, %arg2: memref<3x32xf32, #tpu.memory_space<vmem>>, %arg3: memref<1x32xf32, #tpu.memory_space<vmem>>, %arg4: memref<1x32xf32, #tpu.memory_space<vmem>>, %arg5: memref<32x32xbf16, #tpu.memory_space<vmem>>, %arg6: memref<3x32xf32, #tpu.memory_space<vmem>>) attributes {dimension_semantics = [#tpu.dimension_semantics<parallel>, #tpu.dimension_semantics<parallel>], iteration_bounds = array<i64: 1, 1>, scalar_prefetch = 0 : i64, scratch_operands = 0 : i64, tpu.core_type = #tpu.core_type<tc>, window_params = [{transform_indices = @transform_0, window_bounds = array<i64: 3, 32>}, {pipeline_mode = #tpu.pipeline_mode<synchronous>, transform_indices = @transform_1, window_bounds = array<i64: 1, 32>}, {pipeline_mode = #tpu.pipeline_mode<synchronous>, transform_indices = @transform_2, window_bounds = array<i64: 1, 32>}, {transform_indices = @transform_3, window_bounds = array<i64: 32, 32>}, {transform_indices = @transform_4, window_bounds = array<i64: 3, 32>}]} {
    %c0 = arith.constant 0 : index
    %c0_0 = arith.constant 0 : index
    %0 = vector.load %arg2[%c0, %c0_0] : memref<3x32xf32, #tpu.memory_space<vmem>>, vector<3x32xf32>
    %cst = arith.constant dense<0.000000e+00> : vector<3xf32>
    %1 = vector.multi_reduction <add>, %0, %cst [1] : vector<3x32xf32> to vector<3xf32>
    %2 = vector.shape_cast %1 : vector<3xf32> to vector<3x1xf32>
    %cst_1 = arith.constant 3.200000e+01 : f32
    %3 = vector.broadcast %cst_1 : f32 to vector<3x1xf32>
    %4 = arith.divf %2, %3 : vector<3x1xf32>
    %5 = vector.broadcast %4 : vector<3x1xf32> to vector<3x32xf32>
    %6 = arith.subf %0, %5 : vector<3x32xf32>
    %7 = arith.mulf %6, %6 : vector<3x32xf32>
    %cst_2 = arith.constant dense<0.000000e+00> : vector<3xf32>
    %8 = vector.multi_reduction <add>, %7, %cst_2 [1] : vector<3x32xf32> to vector<3xf32>
    %9 = vector.shape_cast %8 : vector<3xf32> to vector<3x1xf32>
    %cst_3 = arith.constant 3.200000e+01 : f32
    %10 = vector.broadcast %cst_3 : f32 to vector<3x1xf32>
    %11 = arith.divf %9, %10 : vector<3x1xf32>
    %12 = vector.broadcast %4 : vector<3x1xf32> to vector<3x32xf32>
    %13 = arith.subf %0, %12 : vector<3x32xf32>
    %cst_4 = arith.constant 9.99999974E-6 : f32
    %14 = vector.broadcast %cst_4 : f32 to vector<3x1xf32>
    %15 = arith.addf %11, %14 : vector<3x1xf32>
    %16 = math.rsqrt %15 : vector<3x1xf32>
    %17 = vector.broadcast %16 : vector<3x1xf32> to vector<3x32xf32>
    %18 = arith.mulf %13, %17 : vector<3x32xf32>
    %c0_5 = arith.constant 0 : index
    %c0_6 = arith.constant 0 : index
    %19 = vector.load %arg3[%c0_5, %c0_6] : memref<1x32xf32, #tpu.memory_space<vmem>>, vector<1x32xf32>
    %20 = vector.broadcast %19 : vector<1x32xf32> to vector<3x32xf32>
    %21 = arith.mulf %18, %20 : vector<3x32xf32>
    %c0_7 = arith.constant 0 : index
    %c0_8 = arith.constant 0 : index
    %22 = vector.load %arg4[%c0_7, %c0_8] : memref<1x32xf32, #tpu.memory_space<vmem>>, vector<1x32xf32>
    %23 = vector.broadcast %22 : vector<1x32xf32> to vector<3x32xf32>
    %24 = arith.addf %21, %23 : vector<3x32xf32>
    %25 = arith.truncf %24 : vector<3x32xf32> to vector<3x32xbf16>
    %c0_9 = arith.constant 0 : index
    %c0_10 = arith.constant 0 : index
    %26 = vector.load %arg5[%c0_9, %c0_10] : memref<32x32xbf16, #tpu.memory_space<vmem>>, vector<32x32xbf16>
    %cst_11 = arith.constant dense<0.000000e+00> : vector<3x32xf32>
    %27 = tpu.matmul %25, %26, %cst_11 {dimension_numbers = #tpu.dot_dimension_numbers<[1], [0], [0], [1], [0, 0, 1, 1], [], []>} : vector<3x32xbf16>, vector<32x32xbf16>, vector<3x32xf32> -> vector<3x32xf32>
    %c0_12 = arith.constant 0 : index
    %c0_13 = arith.constant 0 : index
    %28 = vector.load %arg6[%c0_12, %c0_13] : memref<3x32xf32, #tpu.memory_space<vmem>>, vector<3x32xf32>
    tpu.vector_store %arg6[%c0_12, %c0_13], %27 {strides = array<i32>} : memref<3x32xf32, #tpu.memory_space<vmem>>, vector<3x32xf32>,
    return
  }
  func.func @transform_0(%arg0: i32, %arg1: i32) -> (i32, i32) {
    %c0_i32 = arith.constant 0 : i32
    %c0_i32_0 = arith.constant 0 : i32
    return %arg0, %c0_i32 : i32, i32
  }
  func.func @transform_1(%arg0: i32, %arg1: i32) -> (i32, i32) {
    %c0_i32 = arith.constant 0 : i32
    %c0_i32_0 = arith.constant 0 : i32
    %c0_i32_1 = arith.constant 0 : i32
    return %c0_i32, %c0_i32_0 : i32, i32
  }
  func.func @transform_2(%arg0: i32, %arg1: i32) -> (i32, i32) {
    %c0_i32 = arith.constant 0 : i32
    %c0_i32_0 = arith.constant 0 : i32
    %c0_i32_1 = arith.constant 0 : i32
    return %c0_i32, %c0_i32_0 : i32, i32
  }
  func.func @transform_3(%arg0: i32, %arg1: i32) -> (i32, i32) {
    %c0_i32 = arith.constant 0 : i32
    %c0_i32_0 = arith.constant 0 : i32
    return %c0_i32, %arg1 : i32, i32
  }
  func.func @transform_4(%arg0: i32, %arg1: i32) -> (i32, i32) {
    %c0_i32 = arith.constant 0 : i32
    return %arg0, %arg1 : i32, i32
  }
}

module attributes {stable_mosaic.version = 11 : i64} {
  func.func @_logits_kernel(%arg0: memref<2x32xf32, #tpu.memory_space<vmem>>, %arg1: memref<3x32xf32, #tpu.memory_space<vmem>>, %arg2: memref<1x1xf32, #tpu.memory_space<smem>>, %arg3: memref<2x3xf32, #tpu.memory_space<vmem>>) attributes {dimension_semantics = [], scalar_prefetch = 0 : i64, scratch_operands = 0 : i64, tpu.core_type = #tpu.core_type<tc>} {
    %c0 = arith.constant 0 : index
    %c0_0 = arith.constant 0 : index
    %0 = vector.load %arg0[%c0, %c0_0] : memref<2x32xf32, #tpu.memory_space<vmem>>, vector<2x32xf32>
    %c0_1 = arith.constant 0 : index
    %c0_2 = arith.constant 0 : index
    %1 = vector.load %arg1[%c0_1, %c0_2] : memref<3x32xf32, #tpu.memory_space<vmem>>, vector<3x32xf32>
    %2 = arith.mulf %0, %0 : vector<2x32xf32>
    %cst = arith.constant dense<0.000000e+00> : vector<2xf32>
    %3 = vector.multi_reduction <add>, %2, %cst [1] : vector<2x32xf32> to vector<2xf32>
    %4 = vector.shape_cast %3 : vector<2xf32> to vector<2x1xf32>
    %5 = math.rsqrt %4 : vector<2x1xf32>
    %6 = vector.broadcast %5 : vector<2x1xf32> to vector<2x32xf32>
    %7 = arith.mulf %0, %6 : vector<2x32xf32>
    %8 = arith.mulf %1, %1 : vector<3x32xf32>
    %cst_3 = arith.constant dense<0.000000e+00> : vector<3xf32>
    %9 = vector.multi_reduction <add>, %8, %cst_3 [1] : vector<3x32xf32> to vector<3xf32>
    %10 = vector.shape_cast %9 : vector<3xf32> to vector<3x1xf32>
    %11 = math.rsqrt %10 : vector<3x1xf32>
    %12 = vector.broadcast %11 : vector<3x1xf32> to vector<3x32xf32>
    %13 = arith.mulf %1, %12 : vector<3x32xf32>
    %c0_4 = arith.constant 0 : index
    %c0_5 = arith.constant 0 : index
    %14 = memref.load %arg2[%c0_4, %c0_5] : memref<1x1xf32, #tpu.memory_space<smem>>
    %cst_6 = arith.constant dense<0.000000e+00> : vector<2x3xf32>
    %15 = tpu.matmul %7, %13, %cst_6 {dimension_numbers = #tpu.dot_dimension_numbers<[1], [1], [0], [0], [0, 0, 1, 0], [], []>} : vector<2x32xf32>, vector<3x32xf32>, vector<2x3xf32> -> vector<2x3xf32>
    %16 = vector.broadcast %14 : f32 to vector<2x3xf32>
    %17 = arith.mulf %16, %15 : vector<2x3xf32>
    %c0_7 = arith.constant 0 : index
    %c0_8 = arith.constant 0 : index
    %18 = vector.load %arg3[%c0_7, %c0_8] : memref<2x3xf32, #tpu.memory_space<vmem>>, vector<2x3xf32>
    tpu.vector_store %arg3[%c0_7, %c0_8], %17 {strides = array<i32>} : memref<2x3xf32, #tpu.memory_space<vmem>>, vector<2x3xf32>,
    return
  }
}

</mosaic_0001>

<llo_original>
// kernel: custom_clip_forward.37
$region0: #{custom_clip_forward.37}
  #allocation0 [shape = 'u32[]', space=smem, size = 0x4, offset = 0x4, fixed_abs, tag = 'smem constant byte address 0x4 - core index']
  #allocation1 [shape = 'u32[144,128]{1,0:T(1,128)}', space=vmem, size = 0x12000, scoped, tag = 'internal scratch']
  %s0 = inlined_call_operand.vmem [shape: f32[34,32], index: 0, kind: input, shape index: {}]
  %s1 = inlined_call_operand.vmem [shape: f32[1,32], index: 1, kind: input, shape index: {}]
  %s2 = inlined_call_operand.vmem [shape: f32[1,32], index: 2, kind: input, shape index: {}]
  %s3 = inlined_call_operand.vmem [shape: f32[34,32], index: 3, kind: output, shape index: {}]
  %s4 = sld [smem:[#allocation0]]
  $region22: #{custom_clip_forward.37} parent=0
    _
  %s6 = ssub.s32 1, %s4
  %s7 = scalar_select 0, %s6, %s4
  // Predicated region
  $region2: #{custom_clip_forward.37} parent=0 // pred_check
    _
  $region3: #{custom_clip_forward.37} parent=0 // pred_check_branch
    %9 = sbr.rel (0) target = $region5
  $region4: #{custom_clip_forward.37} parent=0 // pred_region
    _
  $region5: #{custom_clip_forward.37} parent=0 // pred_fallthru
    _
  // Predicated region
  $region6: #{custom_clip_forward.37} parent=0 // pred_check
    _
  $region7: #{custom_clip_forward.37} parent=0 // pred_check_branch
    %11 = sbr.rel (0) target = $region9
  $region8: #{custom_clip_forward.37} parent=0 // pred_region
    _
  $region9: #{custom_clip_forward.37} parent=0 // pred_fallthru
    _
  // Predicated region
  $region10: #{custom_clip_forward.37} parent=0 // pred_check
    _
  $region11: #{custom_clip_forward.37} parent=0 // pred_check_branch
    %13 = sbr.rel (0) target = $region13
  $region12: #{custom_clip_forward.37} parent=0 // pred_region
    _
  $region13: #{custom_clip_forward.37} parent=0 // pred_fallthru
    _
  %v14 = vld [vmem:[%s0] sm:$0xff]
  %v15 = vld [vmem:[%s0 + $0x8] sm:$0xff]
  %v16 = vld [vmem:[%s0 + $0x10] sm:$0xff]
  %v17 = vld [vmem:[%s0 + $0x18] sm:$0xff]
  %v18 = vld [vmem:[%s0 + $0x20] sm:$0x3]
  %vm19 = vcmask 261120
  %v20 = vsel %vm19, %v14, 0.0
  %21 = vadd.xlane.f32.xlu0 %v20
  %v22 = vpop.xlane.xlu0 %21
  %v23 = vsel %vm19, %v15, 0.0
  %24 = vadd.xlane.f32.xlu0 %v23
  %v25 = vpop.xlane.xlu0 %24
  %v26 = vsel %vm19, %v16, 0.0
  %27 = vadd.xlane.f32.xlu0 %v26
  %v28 = vpop.xlane.xlu0 %27
  %v29 = vsel %vm19, %v17, 0.0
  %30 = vadd.xlane.f32.xlu0 %v29
  %v31 = vpop.xlane.xlu0 %30
  %vm32 = vcmask 254976
  %v33 = vsel %vm32, %v18, 0.0
  %34 = vadd.xlane.f32.xlu0 %v33
  %v35 = vpop.xlane.xlu0 %34
  %v36 = vrcp.pop 32.0
  %v37 = vmul.f32 %v22, %v36
  %v38 = vmul.f32 %v25, %v36
  %v39 = vmul.f32 %v28, %v36
  %v40 = vmul.f32 %v31, %v36
  %v41 = vmul.f32 %v35, %v36
  %v42 = vsub.f32 %v14, %v37
  %v43 = vsub.f32 %v15, %v38
  %v44 = vsub.f32 %v16, %v39
  %v45 = vsub.f32 %v17, %v40
  %v46 = vsub.f32 %v18, %v41
  %v47 = vmul.f32 %v42, %v42
  %v48 = vmul.f32 %v43, %v43
  %v49 = vmul.f32 %v44, %v44
  %v50 = vmul.f32 %v45, %v45
  %v51 = vmul.f32 %v46, %v46
  %v52 = vsel %vm19, %v47, 0.0
  %53 = vadd.xlane.f32.xlu0 %v52
  %v54 = vpop.xlane.xlu0 %53
  %v55 = vsel %vm19, %v48, 0.0
  %56 = vadd.xlane.f32.xlu0 %v55
  %v57 = vpop.xlane.xlu0 %56
  %v58 = vsel %vm19, %v49, 0.0
  %59 = vadd.xlane.f32.xlu0 %v58
  %v60 = vpop.xlane.xlu0 %59
  %v61 = vsel %vm19, %v50, 0.0
  %62 = vadd.xlane.f32.xlu0 %v61
  %v63 = vpop.xlane.xlu0 %62
  %v64 = vsel %vm32, %v51, 0.0
  %65 = vadd.xlane.f32.xlu0 %v64
  %v66 = vpop.xlane.xlu0 %65
  %v67 = vmul.f32 %v54, %v36
  %v68 = vmul.f32 %v57, %v36
  %v69 = vmul.f32 %v60, %v36
  %v70 = vmul.f32 %v63, %v36
  %v71 = vmul.f32 %v66, %v36
  %v72 = vadd.f32 %v67, 1e-05
  %v73 = vadd.f32 %v68, 1e-05
  %v74 = vadd.f32 %v69, 1e-05
  %v75 = vadd.f32 %v70, 1e-05
  %v76 = vadd.f32 %v71, 1e-05
  %v77 = vrsqrt.pop %v72
  %v78 = vrsqrt.pop %v73
  %v79 = vrsqrt.pop %v74
  %v80 = vrsqrt.pop %v75
  %v81 = vrsqrt.pop %v76
  %v82 = vmul.f32 %v42, %v77
  %v83 = vmul.f32 %v43, %v78
  %v84 = vmul.f32 %v44, %v79
  %v85 = vmul.f32 %v45, %v80
  %v86 = vmul.f32 %v46, %v81
  %v87 = vld [vmem:[%s1] sm:$0x1]
  %v89 = vlaneseq
  %v90 = vshrl.u32 %v89, 7
  %v91 = vsub.s32 0, %v90
  %v92 = vrot.slane %v87, %v91
  %v94 = vmul.f32 %v82, %v92
  %v95 = vmul.f32 %v83, %v92
  %v96 = vmul.f32 %v84, %v92
  %v97 = vmul.f32 %v85, %v92
  %v98 = vmul.f32 %v86, %v92
  %v99 = vld [vmem:[%s2] sm:$0x1]
  %v101 = vlaneseq
  %v102 = vshrl.u32 %v101, 7
  %v103 = vsub.s32 0, %v102
  %v104 = vrot.slane %v99, %v103
  %v106 = vadd.f32 %v94, %v104
  %v107 = vadd.f32 %v95, %v104
  %v108 = vadd.f32 %v96, %v104
  %v109 = vadd.f32 %v97, %v104
  %v110 = vadd.f32 %v98, %v104
  %111 = vst.msk [vmem:[%s3] sm:$0xff] %vm19, %v106
  %112 = vst.msk [vmem:[%s3 + $0x8] sm:$0xff] %vm19, %v107
  %113 = vst.msk [vmem:[%s3 + $0x10] sm:$0xff] %vm19, %v108
  %114 = vst.msk [vmem:[%s3 + $0x18] sm:$0xff] %vm19, %v109
  %115 = vst.msk [vmem:[%s3 + $0x20] sm:$0x3] %vm32, %v110
  // Predicated region
  $region14: #{custom_clip_forward.37} parent=0 // pred_check
    _
  $region15: #{custom_clip_forward.37} parent=0 // pred_check_branch
    %117 = sbr.rel (0) target = $region17
  $region16: #{custom_clip_forward.37} parent=0 // pred_region
    _
  $region17: #{custom_clip_forward.37} parent=0 // pred_fallthru
    _
  // Predicated region
  $region18: #{custom_clip_forward.37} parent=0 // pred_check
    _
  $region19: #{custom_clip_forward.37} parent=0 // pred_check_branch
    %119 = sbr.rel (0) target = $region21
  $region20: #{custom_clip_forward.37} parent=0 // pred_region
    _
  $region21: #{custom_clip_forward.37} parent=0 // pred_fallthru
    _

// kernel: custom_clip_forward.36
$region0: #{custom_clip_forward.36}
  #allocation0 [shape = 'u32[]', space=smem, size = 0x4, offset = 0x4, fixed_abs, tag = 'smem constant byte address 0x4 - core index']
  #allocation1 [shape = 'u32[144,128]{1,0:T(1,128)}', space=vmem, size = 0x12000, scoped, tag = 'internal scratch']
  %s0 = inlined_call_operand.vmem [shape: f32[2,4,192], index: 0, kind: input, shape index: {}]
  %s1 = inlined_call_operand.vmem [shape: bf16[192,32], index: 1, kind: input, shape index: {}]
  %s2 = inlined_call_operand.vmem [shape: f32[1,32], index: 2, kind: input, shape index: {}]
  %s3 = inlined_call_operand.vmem [shape: f32[5,32], index: 3, kind: input, shape index: {}]
  %s4 = inlined_call_operand.vmem [shape: f32[2,5,32], index: 4, kind: output, shape index: {}]
  %s5 = sld [smem:[#allocation0]]
  $region49: #{custom_clip_forward.36} parent=0
    _
  %s7 = ssub.s32 1, %s5
  %s8 = scalar_select 0, %s7, %s5
  loop: start=0, step=1, limit=4
  $region2: #{custom_clip_forward.36} parent=0 // loop_pre_header
    _
  $region3: #{custom_clip_forward.36} parent=0 // loop_header
    %s10 = sphi 0, %s14
    %p11 = scmp.ge.s32.totalorder %s10, 4
    %s20 = sphi 0, %s22
    %s23 = sphi 0, %s20
    %s24 = sphi 0, %s23
    %s40 = sphi 0, %s24
    %s44 = sphi 0, %s44
    %s46 = sphi 0, %s44
    %s47 = sphi 0, %s46
    %s61 = sphi 0, %s47
    %s65 = sphi 0, %s65
    %s67 = sphi 0, %s65
    %s68 = sphi 0, %s67
    %s82 = sphi 0, %s68
    %s86 = sphi 0, %s86
    %s88 = sphi 0, %s86
    %s89 = sphi 0, %s88
    %s103 = sphi 0, %s89
    %s109 = sphi 0, %s111
    %s112 = sphi 0, %s109
    %s113 = sphi 0, %s112
    %s129 = sphi 0, %s113
  $region4: #{custom_clip_forward.36} parent=0 // loop_header_branch
    %13 = sbr.rel (%p11) target = $region8
  $region5: #{custom_clip_forward.36} parent=0 // loop_body
    %s15 = ssub.s32 %s10, 1
    %s16 = ssub.s32 %s10, 2
    %s17 = sadd.s32 %s10, 1
    %s18 = ssub.s32 %s10, %s17
    %p19 = scmp.eq.s32.totalorder %s18, 0
    %s21 = sadd.s32 %s20, 1
    %s22 = scalar_select %p19, %s20, %s21
    %p25 = pneg %p19
    %p26 = scmp.eq.s32.totalorder %s10, 1
    %p27 = por %p25, %p26
    %p28 = scmp.ne.s32.totalorder %s20, %s23
    %p29 = scmp.eq.s32.totalorder %s10, 0
    %p30 = por %p28, %p29
    %p31 = scmp.ne.s32.totalorder %s20, %s23
    %p32 = scmp.eq.s32.totalorder %s15, 1
    %p33 = por %p31, %p32
    %p34 = scmp.ne.s32.totalorder %s23, %s24
    %p35 = scmp.eq.s32.totalorder %s15, 0
    %p36 = por %p34, %p35
    %p37 = scmp.ne.s32.totalorder %s23, %s24
    %p38 = scmp.eq.s32.totalorder %s16, 1
    %p39 = por %p37, %p38
    %p41 = scmp.ne.s32.totalorder %s24, %s40
    %p42 = scmp.eq.s32.totalorder %s16, 0
    %p43 = por %p41, %p42
    %s45 = sadd.s32 %s44, 1
    %p48 = scmp.eq.s32.totalorder %s10, 1
    %p49 = scmp.ne.s32.totalorder %s44, %s46
    %p50 = scmp.eq.s32.totalorder %s10, 0
    %p51 = por %p49, %p50
    %p52 = scmp.ne.s32.totalorder %s44, %s46
    %p53 = scmp.eq.s32.totalorder %s15, 1
    %p54 = por %p52, %p53
    %p55 = scmp.ne.s32.totalorder %s46, %s47
    %p56 = scmp.eq.s32.totalorder %s15, 0
    %p57 = por %p55, %p56
    %p58 = scmp.ne.s32.totalorder %s46, %s47
    %p59 = scmp.eq.s32.totalorder %s16, 1
    %p60 = por %p58, %p59
    %p62 = scmp.ne.s32.totalorder %s47, %s61
    %p63 = scmp.eq.s32.totalorder %s16, 0
    %p64 = por %p62, %p63
    %s66 = sadd.s32 %s65, 1
    %p69 = scmp.eq.s32.totalorder %s10, 1
    %p70 = scmp.ne.s32.totalorder %s65, %s67
    %p71 = scmp.eq.s32.totalorder %s10, 0
    %p72 = por %p70, %p71
    %p73 = scmp.ne.s32.totalorder %s65, %s67
    %p74 = scmp.eq.s32.totalorder %s15, 1
    %p75 = por %p73, %p74
    %p76 = scmp.ne.s32.totalorder %s67, %s68
    %p77 = scmp.eq.s32.totalorder %s15, 0
    %p78 = por %p76, %p77
    %p79 = scmp.ne.s32.totalorder %s67, %s68
    %p80 = scmp.eq.s32.totalorder %s16, 1
    %p81 = por %p79, %p80
    %p83 = scmp.ne.s32.totalorder %s68, %s82
    %p84 = scmp.eq.s32.totalorder %s16, 0
    %p85 = por %p83, %p84
    %s87 = sadd.s32 %s86, 1
    %p90 = scmp.eq.s32.totalorder %s10, 1
    %p91 = scmp.ne.s32.totalorder %s86, %s88
    %p92 = scmp.eq.s32.totalorder %s10, 0
    %p93 = por %p91, %p92
    %p94 = scmp.ne.s32.totalorder %s86, %s88
    %p95 = scmp.eq.s32.totalorder %s15, 1
    %p96 = por %p94, %p95
    %p97 = scmp.ne.s32.totalorder %s88, %s89
    %p98 = scmp.eq.s32.totalorder %s15, 0
    %p99 = por %p97, %p98
    %p100 = scmp.ne.s32.totalorder %s88, %s89
    %p101 = scmp.eq.s32.totalorder %s16, 1
    %p102 = por %p100, %p101
    %p104 = scmp.ne.s32.totalorder %s89, %s103
    %p105 = scmp.eq.s32.totalorder %s16, 0
    %p106 = por %p104, %p105
    %s107 = ssub.s32 %s10, %s17
    %p108 = scmp.eq.s32.totalorder %s107, 0
    %s110 = sadd.s32 %s109, 1
    %s111 = scalar_select %p108, %s109, %s110
    %p114 = pneg %p108
    %p115 = scmp.eq.s32.totalorder %s10, 1
    %p116 = por %p114, %p115
    %p117 = scmp.ne.s32.totalorder %s109, %s112
    %p118 = scmp.eq.s32.totalorder %s10, 0
    %p119 = por %p117, %p118
    %p120 = scmp.ne.s32.totalorder %s109, %s112
    %p121 = scmp.eq.s32.totalorder %s15, 1
    %p122 = por %p120, %p121
    %p123 = scmp.ne.s32.totalorder %s112, %s113
    %p124 = scmp.eq.s32.totalorder %s15, 0
    %p125 = por %p123, %p124
    %p126 = scmp.ne.s32.totalorder %s112, %s113
    %p127 = scmp.eq.s32.totalorder %s16, 1
    %p128 = por %p126, %p127
    %p130 = scmp.ne.s32.totalorder %s113, %s129
    %p131 = scmp.eq.s32.totalorder %s16, 0
    %p132 = por %p130, %p131
    %p133 = scmp.le.s32.totalorder 1, %s10
    %p134 = scmp.lt.s32.totalorder %s10, 3
    %p135 = pnand %p133, %p134
    %p136 = pneg %p135
    // Predicated region
    $region9: #{custom_clip_forward.36} parent=5 // pred_check
      _
    $region10: #{custom_clip_forward.36} parent=5 // pred_check_branch
      %138 = sbr.rel (%p135) target = $region12
    $region11: #{custom_clip_forward.36} parent=5 // pred_region
      %s139 = ssub.s32 %s10, 1
      // Predicated region
      $region13: #{custom_clip_forward.36} parent=11 // pred_check
        %p140 = pneg %p57
      $region14: #{custom_clip_forward.36} parent=11 // pred_check_branch
        %142 = sbr.rel (%p140) target = $region16
      $region15: #{custom_clip_forward.36} parent=11 // pred_region
        _
      $region16: #{custom_clip_forward.36} parent=11 // pred_fallthru
        _
      // Predicated region
      $region17: #{custom_clip_forward.36} parent=11 // pred_check
        %p143 = pneg %p78
      $region18: #{custom_clip_forward.36} parent=11 // pred_check_branch
        %145 = sbr.rel (%p143) target = $region20
      $region19: #{custom_clip_forward.36} parent=11 // pred_region
        _
      $region20: #{custom_clip_forward.36} parent=11 // pred_fallthru
        _
      // Predicated region
      $region21: #{custom_clip_forward.36} parent=11 // pred_check
        %p146 = pneg %p99
      $region22: #{custom_clip_forward.36} parent=11 // pred_check_branch
        %148 = sbr.rel (%p146) target = $region24
      $region23: #{custom_clip_forward.36} parent=11 // pred_region
        _
      $region24: #{custom_clip_forward.36} parent=11 // pred_fallthru
        _
    $region12: #{custom_clip_forward.36} parent=5 // pred_fallthru
      _
    %p149 = scmp.lt.s32.totalorder %s10, 2
    // Predicated region
    $region25: #{custom_clip_forward.36} parent=5 // pred_check
      %p150 = pneg %p149
    $region26: #{custom_clip_forward.36} parent=5 // pred_check_branch
      %152 = sbr.rel (%p150) target = $region28
    $region27: #{custom_clip_forward.36} parent=5 // pred_region
      // Predicated region
      $region29: #{custom_clip_forward.36} parent=27 // pred_check
        %p153 = pneg %p30
      $region30: #{custom_clip_forward.36} parent=27 // pred_check_branch
        %155 = sbr.rel (%p153) target = $region32
      $region31: #{custom_clip_forward.36} parent=27 // pred_region
        %p156 = scmp.lt.s32.totalorder %s10, 1
        %s157 = scalar_select %p156, %s10, 1
        %s158 = smul.addr %s157, 2
        %s159 = smul.addr %s158, 4
        %s160 = scalar_lea.vmem %s0, %s159
      $region32: #{custom_clip_forward.36} parent=27 // pred_fallthru
        _
    $region28: #{custom_clip_forward.36} parent=5 // pred_fallthru
      _
    %p161 = scmp.le.s32.totalorder 1, %s10
    %p162 = scmp.lt.s32.totalorder %s10, 3
    %p163 = pnand %p161, %p162
    %p164 = pneg %p163
    // Predicated region
    $region33: #{custom_clip_forward.36} parent=5 // pred_check
      _
    $region34: #{custom_clip_forward.36} parent=5 // pred_check_branch
      %166 = sbr.rel (%p163) target = $region36
    $region35: #{custom_clip_forward.36} parent=5 // pred_region
      %s167 = ssub.s32 %s10, 1
      %p168 = scmp.lt.s32.totalorder %s15, 1
      %s169 = scalar_select %p168, %s15, 1
      %s170 = smul.addr %s169, 2
      %s171 = smul.addr %s170, 4
      %s172 = scalar_lea.vmem %s0, %s171
      %p173 = pneg %p36
      %p174 = pneg %p33
      %p175 = pneg %p57
      %p176 = pneg %p54
      %p177 = pneg %p78
      %p178 = pneg %p75
      %p179 = pneg %p99
      %p180 = pneg %p96
      %p181 = pneg %p125
      %p182 = pneg %p122
      %p183 = scmp.lt.s32.totalorder %s15, 1
      %s184 = scalar_select %p183, %s15, 1
      %s185 = smul.addr %s184, 8
      %s186 = scalar_lea.vmem %s4, %s185
      %p187 = scmp.lt.s32.totalorder %s15, 1
      %s188 = scalar_select %p187, %s15, 1
      %s189 = smul.addr %s188, 2
      %s190 = smul.addr %s189, 4
      %s191 = scalar_lea.vmem %s0, %s190
      %p192 = scmp.lt.s32.totalorder %s15, 1
      %s193 = scalar_select %p192, %s15, 1
      %s194 = smul.addr %s193, 8
      %s195 = scalar_lea.vmem %s4, %s194
      %v197 = vld [vmem:[%s191] sm:$0xff]
      %v199 = vcombine.high %v197, %v197
      %v201 = vpack.c.bf16 %v197, %v197
      %v202 = vpack.c.bf16 %v199, %v199
      %v203 = vld [vmem:[%s1] sm:$0xf]
      %v204 = vld [vmem:[%s1 + $0x4] sm:$0xf]
      %v205 = vld [vmem:[%s1 + $0x8] sm:$0xf]
      %v206 = vld [vmem:[%s1 + $0xc] sm:$0xf]
      %v207 = vld [vmem:[%s1 + $0x10] sm:$0xf]
      %v208 = vld [vmem:[%s1 + $0x14] sm:$0xf]
      %v209 = vld [vmem:[%s1 + $0x18] sm:$0xf]
      %v210 = vld [vmem:[%s1 + $0x1c] sm:$0xf]
      %v211 = vld [vmem:[%s1 + $0x20] sm:$0xf]
      %v212 = vld [vmem:[%s1 + $0x24] sm:$0xf]
      %v213 = vld [vmem:[%s1 + $0x28] sm:$0xf]
      %v214 = vld [vmem:[%s1 + $0x2c] sm:$0xf]
      %v215 = vld [vmem:[%s1 + $0x30] sm:$0xf]
      %v216 = vld [vmem:[%s1 + $0x34] sm:$0xf]
      %v217 = vld [vmem:[%s1 + $0x38] sm:$0xf]
      %v218 = vld [vmem:[%s1 + $0x3c] sm:$0xf]
      %v219 = vld [vmem:[%s1 + $0x40] sm:$0xf]
      %v220 = vld [vmem:[%s1 + $0x44] sm:$0xf]
      %v221 = vld [vmem:[%s1 + $0x48] sm:$0xf]
      %v222 = vld [vmem:[%s1 + $0x4c] sm:$0xf]
      %v223 = vld [vmem:[%s1 + $0x50] sm:$0xf]
      %v224 = vld [vmem:[%s1 + $0x54] sm:$0xf]
      %v225 = vld [vmem:[%s1 + $0x58] sm:$0xf]
      %v226 = vld [vmem:[%s1 + $0x5c] sm:$0xf]
      %v251 = vunpack.c.l.b16 %v203
      %v252 = vunpack.c.l.b16 %v204
      %v253 = vunpack.c.l.b16 %v205
      %v254 = vunpack.c.l.b16 %v206
      %v255 = vunpack.c.l.b16 %v207
      %v256 = vunpack.c.l.b16 %v208
      %v257 = vunpack.c.l.b16 %v209
      %v258 = vunpack.c.l.b16 %v210
      %v259 = vunpack.c.l.b16 %v211
      %v260 = vunpack.c.l.b16 %v212
      %v261 = vunpack.c.l.b16 %v213
      %v262 = vunpack.c.l.b16 %v214
      %v263 = vunpack.c.l.b16 %v215
      %v264 = vunpack.c.l.b16 %v216
      %v265 = vunpack.c.l.b16 %v217
      %v266 = vunpack.c.l.b16 %v218
      %v267 = vunpack.c.l.b16 %v219
      %v268 = vunpack.c.l.b16 %v220
      %v269 = vunpack.c.l.b16 %v221
      %v270 = vunpack.c.l.b16 %v222
      %v271 = vunpack.c.l.b16 %v223
      %v272 = vunpack.c.l.b16 %v224
      %v273 = vunpack.c.l.b16 %v225
      %v274 = vunpack.c.l.b16 %v226
      %v275 = vpack.c.b16 %v252, %v251
      %v276 = vpack.c.b16 %v254, %v253
      %v277 = vpack.c.b16 %v256, %v255
      %v278 = vpack.c.b16 %v258, %v257
      %v279 = vpack.c.b16 %v260, %v259
      %v280 = vpack.c.b16 %v262, %v261
      %v281 = vpack.c.b16 %v264, %v263
      %v282 = vpack.c.b16 %v266, %v265
      %v283 = vpack.c.b16 %v268, %v267
      %v284 = vpack.c.b16 %v270, %v269
      %v285 = vpack.c.b16 %v272, %v271
      %v286 = vpack.c.b16 %v274, %v273
      %vm299 = vcmask 523264
      %v301 = vsel %vm299, %v202, 0
      %303 = vmatprep.subr.bf16.mxu0 0
      %304 = vmatpush1.bf16.msra.mxu0 %v275
      %305 = vmatprep.subr.bf16.mxu0 0
      %306 = vmatpush1.bf16.msra.mxu0 %v276
      %307 = vmatprep.subr.bf16.mxu0 0
      %308 = vmatpush1.bf16.msra.mxu0 %v277
      %309 = vmatprep.subr.bf16.mxu0 0
      %310 = vmatpush1.bf16.msra.mxu0 %v278
      %311 = vmatprep.subr.bf16.mxu0 0
      %312 = vmatpush1.bf16.msra.mxu0 %v279
      %313 = vmatprep.subr.bf16.mxu0 0
      %314 = vmatpush1.bf16.msra.mxu0 %v280
      %315 = vmatprep.subr.bf16.mxu0 0
      %316 = vmatpush1.bf16.msra.mxu0 %v281
      %317 = vmatprep.subr.bf16.mxu0 0
      %318 = vmatpush1.bf16.msra.mxu0 %v282
      %319 = vmatprep.subr.bf16.mxu0 0
      %320 = vmatpush1.bf16.msra.mxu0 %v283
      %321 = vmatprep.subr.bf16.mxu0 0
      %322 = vmatpush1.bf16.msra.mxu0 %v284
      %323 = vmatprep.subr.bf16.mxu0 0
      %324 = vmatpush1.bf16.msra.mxu0 %v285
      %325 = vmatprep.subr.bf16.mxu0 0
      %326 = vmatpush1.bf16.msra.mxu0 %v286
      %327 = vmatprep.subr.bf16.mxu0 0
      %328 = vmatpush1.bf16.msra.mxu0 0
      %329 = vmatprep.subr.bf16.mxu0 0
      %330 = vmatpush1.bf16.msra.mxu0 0
      %331 = vmatprep.subr.bf16.mxu0 0
      %332 = vmatpush1.bf16.msra.mxu0 0
      %333 = vmatprep.subr.bf16.mxu0 0
      %334 = vmatpush1.bf16.msra.mxu0 0
      %335 = vmatprep.mubr.bf16.mxu0 %v301
      %336 = vmatmul.mubr.bf16.gmra.mrb[0].mxu0 %v201
      %v337 = vpop.f32.mrb[0].mxu0
      %v338 = vadd.f32 0.0, %v337
      %v339 = vpop.f32.mrb[0].mxu0
      %v340 = vpop.f32.mrb[0].mxu0
      %v341 = vpop.f32.mrb[0].mxu0
      %342 = vdwg.mxu0
      %v343 = vld [vmem:[%s2] sm:$0x1]
      %v345 = vrot.slane %v338, 7
      %vm347 = vcmask 1040384
      %v348 = vsel %vm347, %v343, %v345
      %v349 = vld [vmem:[%s3] sm:$0x1f]
      %v350 = vadd.f32 %v348, %v349
      %vm351 = vcmask 258048
      %352 = vst.msk [vmem:[%s195] sm:$0x1f] %vm351, %v350
      %p353 = scmp.lt.s32.totalorder %s15, 1
      %s354 = scalar_select %p353, %s15, 1
      %s355 = smul.addr %s354, 8
      %s356 = scalar_lea.vmem %s4, %s355
      // Predicated region
      $region37: #{custom_clip_forward.36} parent=35 // pred_check
        %p357 = pneg %p122
      $region38: #{custom_clip_forward.36} parent=35 // pred_check_branch
        %359 = sbr.rel (%p357) target = $region40
      $region39: #{custom_clip_forward.36} parent=35 // pred_region
        _
      $region40: #{custom_clip_forward.36} parent=35 // pred_fallthru
        _
    $region36: #{custom_clip_forward.36} parent=5 // pred_fallthru
      _
    %p360 = scmp.le.s32.totalorder 2, %s10
    // Predicated region
    $region41: #{custom_clip_forward.36} parent=5 // pred_check
      %p361 = pneg %p360
    $region42: #{custom_clip_forward.36} parent=5 // pred_check_branch
      %363 = sbr.rel (%p361) target = $region44
    $region43: #{custom_clip_forward.36} parent=5 // pred_region
      %s364 = ssub.s32 %s10, 2
      // Predicated region
      $region45: #{custom_clip_forward.36} parent=43 // pred_check
        %p365 = pneg %p128
      $region46: #{custom_clip_forward.36} parent=43 // pred_check_branch
        %367 = sbr.rel (%p365) target = $region48
      $region47: #{custom_clip_forward.36} parent=43 // pred_region
        %p368 = scmp.lt.s32.totalorder %s16, 1
        %s369 = scalar_select %p368, %s16, 1
        %s370 = smul.addr %s369, 8
        %s371 = scalar_lea.vmem %s4, %s370
      $region48: #{custom_clip_forward.36} parent=43 // pred_fallthru
        _
    $region44: #{custom_clip_forward.36} parent=5 // pred_fallthru
      _
  $region6: #{custom_clip_forward.36} parent=0 // loop_footer
    %s14 = sadd.s32 1, %s10
  $region7: #{custom_clip_forward.36} parent=0 // loop_footer_branch
    %9 = sbr.rel target = $region3
  $region8: #{custom_clip_forward.36} parent=0 // loop_exit
    _

// kernel: custom_clip_forward.38
$region0: #{custom_clip_forward.38}
  #allocation0 [shape = 'u32[]', space=smem, size = 0x4, offset = 0x4, fixed_abs, tag = 'smem constant byte address 0x4 - core index']
  #allocation1 [shape = 'u32[144,128]{1,0:T(1,128)}', space=vmem, size = 0x12000, scoped, tag = 'internal scratch']
  %s0 = inlined_call_operand.vmem [shape: f32[34,32], index: 0, kind: input, shape index: {}]
  %s1 = inlined_call_operand.vmem [shape: f32[1,32], index: 1, kind: input, shape index: {}]
  %s2 = inlined_call_operand.vmem [shape: f32[1,32], index: 2, kind: input, shape index: {}]
  %s3 = inlined_call_operand.vmem [shape: bf16[32,96], index: 3, kind: input, shape index: {}]
  %s4 = inlined_call_operand.vmem [shape: f32[1,96], index: 4, kind: input, shape index: {}]
  %s5 = inlined_call_operand.vmem [shape: f32[34,96], index: 5, kind: output, shape index: {}]
  %s6 = sld [smem:[#allocation0]]
  $region30: #{custom_clip_forward.38} parent=0
    _
  %s8 = ssub.s32 1, %s6
  %s9 = scalar_select 0, %s8, %s6
  // Predicated region
  $region2: #{custom_clip_forward.38} parent=0 // pred_check
    _
  $region3: #{custom_clip_forward.38} parent=0 // pred_check_branch
    %11 = sbr.rel (0) target = $region5
  $region4: #{custom_clip_forward.38} parent=0 // pred_region
    _
  $region5: #{custom_clip_forward.38} parent=0 // pred_fallthru
    _
  // Predicated region
  $region6: #{custom_clip_forward.38} parent=0 // pred_check
    _
  $region7: #{custom_clip_forward.38} parent=0 // pred_check_branch
    %13 = sbr.rel (0) target = $region9
  $region8: #{custom_clip_forward.38} parent=0 // pred_region
    _
  $region9: #{custom_clip_forward.38} parent=0 // pred_fallthru
    _
  // Predicated region
  $region10: #{custom_clip_forward.38} parent=0 // pred_check
    _
  $region11: #{custom_clip_forward.38} parent=0 // pred_check_branch
    %15 = sbr.rel (0) target = $region13
  $region12: #{custom_clip_forward.38} parent=0 // pred_region
    _
  $region13: #{custom_clip_forward.38} parent=0 // pred_fallthru
    _
  // Predicated region
  $region14: #{custom_clip_forward.38} parent=0 // pred_check
    _
  $region15: #{custom_clip_forward.38} parent=0 // pred_check_branch
    %17 = sbr.rel (0) target = $region17
  $region16: #{custom_clip_forward.38} parent=0 // pred_region
    _
  $region17: #{custom_clip_forward.38} parent=0 // pred_fallthru
    _
  // Predicated region
  $region18: #{custom_clip_forward.38} parent=0 // pred_check
    _
  $region19: #{custom_clip_forward.38} parent=0 // pred_check_branch
    %19 = sbr.rel (0) target = $region21
  $region20: #{custom_clip_forward.38} parent=0 // pred_region
    _
  $region21: #{custom_clip_forward.38} parent=0 // pred_fallthru
    _
  %v21 = vld [vmem:[%s0] sm:$0xff]
  %v22 = vld [vmem:[%s0 + $0x8] sm:$0xff]
  %v23 = vld [vmem:[%s0 + $0x10] sm:$0xff]
  %v24 = vld [vmem:[%s0 + $0x18] sm:$0xff]
  %v25 = vld [vmem:[%s0 + $0x20] sm:$0x3]
  %vm26 = vcmask 261120
  %v27 = vsel %vm26, %v21, 0.0
  %28 = vadd.xlane.f32.xlu0 %v27
  %v29 = vpop.xlane.xlu0 %28
  %v30 = vsel %vm26, %v22, 0.0
  %31 = vadd.xlane.f32.xlu0 %v30
  %v32 = vpop.xlane.xlu0 %31
  %v33 = vsel %vm26, %v23, 0.0
  %34 = vadd.xlane.f32.xlu0 %v33
  %v35 = vpop.xlane.xlu0 %34
  %v36 = vsel %vm26, %v24, 0.0
  %37 = vadd.xlane.f32.xlu0 %v36
  %v38 = vpop.xlane.xlu0 %37
  %vm39 = vcmask 254976
  %v40 = vsel %vm39, %v25, 0.0
  %41 = vadd.xlane.f32.xlu0 %v40
  %v42 = vpop.xlane.xlu0 %41
  %v43 = vrcp.pop 32.0
  %v44 = vmul.f32 %v29, %v43
  %v45 = vmul.f32 %v32, %v43
  %v46 = vmul.f32 %v35, %v43
  %v47 = vmul.f32 %v38, %v43
  %v48 = vmul.f32 %v42, %v43
  %v49 = vsub.f32 %v21, %v44
  %v50 = vsub.f32 %v22, %v45
  %v51 = vsub.f32 %v23, %v46
  %v52 = vsub.f32 %v24, %v47
  %v53 = vsub.f32 %v25, %v48
  %v54 = vmul.f32 %v49, %v49
  %v55 = vmul.f32 %v50, %v50
  %v56 = vmul.f32 %v51, %v51
  %v57 = vmul.f32 %v52, %v52
  %v58 = vmul.f32 %v53, %v53
  %v59 = vsel %vm26, %v54, 0.0
  %60 = vadd.xlane.f32.xlu0 %v59
  %v61 = vpop.xlane.xlu0 %60
  %v62 = vsel %vm26, %v55, 0.0
  %63 = vadd.xlane.f32.xlu0 %v62
  %v64 = vpop.xlane.xlu0 %63
  %v65 = vsel %vm26, %v56, 0.0
  %66 = vadd.xlane.f32.xlu0 %v65
  %v67 = vpop.xlane.xlu0 %66
  %v68 = vsel %vm26, %v57, 0.0
  %69 = vadd.xlane.f32.xlu0 %v68
  %v70 = vpop.xlane.xlu0 %69
  %v71 = vsel %vm39, %v58, 0.0
  %72 = vadd.xlane.f32.xlu0 %v71
  %v73 = vpop.xlane.xlu0 %72
  %v74 = vmul.f32 %v61, %v43
  %v75 = vmul.f32 %v64, %v43
  %v76 = vmul.f32 %v67, %v43
  %v77 = vmul.f32 %v70, %v43
  %v78 = vmul.f32 %v73, %v43
  %v79 = vadd.f32 %v74, 1e-05
  %v80 = vadd.f32 %v75, 1e-05
  %v81 = vadd.f32 %v76, 1e-05
  %v82 = vadd.f32 %v77, 1e-05
  %v83 = vadd.f32 %v78, 1e-05
  %v84 = vrsqrt.pop %v79
  %v85 = vrsqrt.pop %v80
  %v86 = vrsqrt.pop %v81
  %v87 = vrsqrt.pop %v82
  %v88 = vrsqrt.pop %v83
  %v89 = vmul.f32 %v49, %v84
  %v90 = vmul.f32 %v50, %v85
  %v91 = vmul.f32 %v51, %v86
  %v92 = vmul.f32 %v52, %v87
  %v93 = vmul.f32 %v53, %v88
  %v94 = vld [vmem:[%s1] sm:$0x1]
  %v96 = vlaneseq
  %v97 = vshrl.u32 %v96, 7
  %v98 = vsub.s32 0, %v97
  %v99 = vrot.slane %v94, %v98
  %v101 = vmul.f32 %v89, %v99
  %v102 = vmul.f32 %v90, %v99
  %v103 = vmul.f32 %v91, %v99
  %v104 = vmul.f32 %v92, %v99
  %v105 = vmul.f32 %v93, %v99
  %v106 = vld [vmem:[%s2] sm:$0x1]
  %v108 = vlaneseq
  %v109 = vshrl.u32 %v108, 7
  %v110 = vsub.s32 0, %v109
  %v111 = vrot.slane %v106, %v110
  %v113 = vadd.f32 %v101, %v111
  %v114 = vadd.f32 %v102, %v111
  %v115 = vadd.f32 %v103, %v111
  %v116 = vadd.f32 %v104, %v111
  %v117 = vadd.f32 %v105, %v111
  %v118 = vpack.c.bf16 %v114, %v113
  %v119 = vpack.c.bf16 %v116, %v115
  %v120 = vpack.c.bf16 %v117, %v117
  %v121 = vld [vmem:[%s3] sm:$0xf]
  %v122 = vld [vmem:[%s3 + $0x4] sm:$0xf]
  %v123 = vld [vmem:[%s3 + $0x8] sm:$0xf]
  %v124 = vld [vmem:[%s3 + $0xc] sm:$0xf]
  %v125 = vld [vmem:[%s4] sm:$0x1]
  %v127 = vlaneseq
  %v128 = vshrl.u32 %v127, 7
  %v129 = vsub.s32 0, %v128
  %v130 = vrot.slane %v125, %v129
  %v136 = vunpack.c.l.b16 %v121
  %v137 = vunpack.c.l.b16 %v122
  %v138 = vunpack.c.l.b16 %v123
  %v139 = vunpack.c.l.b16 %v124
  %v140 = vpack.c.b16 %v137, %v136
  %v141 = vpack.c.b16 %v139, %v138
  %v145 = vsel %vm26, %v118, 0
  %v148 = vsel %vm26, %v119, 0
  %v151 = vsel %vm26, %v120, 0
  %153 = vmatprep.subr.bf16.mxu0 0
  %154 = vmatpush1.bf16.msra.mxu0 %v140
  %155 = vmatprep.subr.bf16.mxu0 0
  %156 = vmatpush1.bf16.msra.mxu0 %v141
  %157 = vmatprep.subr.bf16.mxu0 0
  %158 = vmatpush1.bf16.msra.mxu0 0
  %159 = vmatprep.subr.bf16.mxu0 0
  %160 = vmatpush1.bf16.msra.mxu0 0
  %161 = vmatprep.subr.bf16.mxu0 0
  %162 = vmatpush1.bf16.msra.mxu0 0
  %163 = vmatprep.subr.bf16.mxu0 0
  %164 = vmatpush1.bf16.msra.mxu0 0
  %165 = vmatprep.subr.bf16.mxu0 0
  %166 = vmatpush1.bf16.msra.mxu0 0
  %167 = vmatprep.subr.bf16.mxu0 0
  %168 = vmatpush1.bf16.msra.mxu0 0
  %169 = vmatprep.subr.bf16.mxu0 0
  %170 = vmatpush1.bf16.msra.mxu0 0
  %171 = vmatprep.subr.bf16.mxu0 0
  %172 = vmatpush1.bf16.msra.mxu0 0
  %173 = vmatprep.subr.bf16.mxu0 0
  %174 = vmatpush1.bf16.msra.mxu0 0
  %175 = vmatprep.subr.bf16.mxu0 0
  %176 = vmatpush1.bf16.msra.mxu0 0
  %177 = vmatprep.subr.bf16.mxu0 0
  %178 = vmatpush1.bf16.msra.mxu0 0
  %179 = vmatprep.subr.bf16.mxu0 0
  %180 = vmatpush1.bf16.msra.mxu0 0
  %181 = vmatprep.subr.bf16.mxu0 0
  %182 = vmatpush1.bf16.msra.mxu0 0
  %183 = vmatprep.subr.bf16.mxu0 0
  %184 = vmatpush1.bf16.msra.mxu0 0
  %185 = vmatprep.mubr.bf16.mxu0 0
  %186 = vmatmul.mubr.bf16.gmra.mrb[0].mxu0 %v145
  %v187 = vpop.f32.mrb[0].mxu0
  %v188 = vadd.f32 %v130, %v187
  %v189 = vpop.f32.mrb[0].mxu0
  %v190 = vpop.f32.mrb[0].mxu0
  %v191 = vadd.f32 %v130, %v190
  %v192 = vpop.f32.mrb[0].mxu0
  %193 = vmatprep.mubr.bf16.mxu0 0
  %194 = vmatmul.mubr.bf16.gmra.mrb[0].mxu0 %v148
  %v195 = vpop.f32.mrb[0].mxu0
  %v196 = vadd.f32 %v130, %v195
  %v197 = vpop.f32.mrb[0].mxu0
  %v198 = vpop.f32.mrb[0].mxu0
  %v199 = vadd.f32 %v130, %v198
  %v200 = vpop.f32.mrb[0].mxu0
  %201 = vmatprep.mubr.bf16.mxu0 0
  %202 = vmatmul.mubr.bf16.gmra.mrb[0].mxu0 %v151
  %v203 = vpop.f32.mrb[0].mxu0
  %v204 = vadd.f32 %v130, %v203
  %v205 = vpop.f32.mrb[0].mxu0
  %v206 = vpop.f32.mrb[0].mxu0
  %v207 = vpop.f32.mrb[0].mxu0
  %208 = vdwg.mxu0
  %vm209 = vcmask 785408
  %210 = vst.msk [vmem:[%s5] sm:$0xff] %vm209, %v188
  %211 = vst.msk [vmem:[%s5 + $0x8] sm:$0xff] %vm209, %v191
  %212 = vst.msk [vmem:[%s5 + $0x10] sm:$0xff] %vm209, %v196
  %213 = vst.msk [vmem:[%s5 + $0x18] sm:$0xff] %vm209, %v199
  %vm214 = vcmask 779264
  %215 = vst.msk [vmem:[%s5 + $0x20] sm:$0x3] %vm214, %v204
  // Predicated region
  $region22: #{custom_clip_forward.38} parent=0 // pred_check
    _
  $region23: #{custom_clip_forward.38} parent=0 // pred_check_branch
    %217 = sbr.rel (0) target = $region25
  $region24: #{custom_clip_forward.38} parent=0 // pred_region
    _
  $region25: #{custom_clip_forward.38} parent=0 // pred_fallthru
    _
  // Predicated region
  $region26: #{custom_clip_forward.38} parent=0 // pred_check
    _
  $region27: #{custom_clip_forward.38} parent=0 // pred_check_branch
    %219 = sbr.rel (0) target = $region29
  $region28: #{custom_clip_forward.38} parent=0 // pred_region
    _
  $region29: #{custom_clip_forward.38} parent=0 // pred_fallthru
    _

// kernel: custom_clip_forward.39
$region0: #{custom_clip_forward.39}
  #allocation0 [shape = 'u32[]', space=smem, size = 0x4, offset = 0x4, fixed_abs, tag = 'smem constant byte address 0x4 - core index']
  #allocation1 [shape = 'u32[144,128]{1,0:T(1,128)}', space=vmem, size = 0x12000, scoped, tag = 'internal scratch']
  %s0 = inlined_call_operand.vmem [shape: f32[2,17,96], index: 0, kind: input, shape index: {}]
  %s1 = inlined_call_operand.vmem [shape: f32[2,17,32], index: 1, kind: output, shape index: {}]
  %s2 = sld [smem:[#allocation0]]
  $region37: #{custom_clip_forward.39} parent=0
    _
  %s4 = ssub.s32 1, %s2
  %s5 = scalar_select 0, %s4, %s2
  loop: start=0, step=1, limit=4
  $region2: #{custom_clip_forward.39} parent=0 // loop_pre_header
    _
  $region3: #{custom_clip_forward.39} parent=0 // loop_header
    %s7 = sphi 0, %s11
    %p8 = scmp.ge.s32.totalorder %s7, 4
    %s17 = sphi 0, %s19
    %s20 = sphi 0, %s17
    %s21 = sphi 0, %s20
    %s37 = sphi 0, %s21
    %s43 = sphi 0, %s45
    %s46 = sphi 0, %s43
    %s47 = sphi 0, %s46
    %s63 = sphi 0, %s47
  $region4: #{custom_clip_forward.39} parent=0 // loop_header_branch
    %10 = sbr.rel (%p8) target = $region8
  $region5: #{custom_clip_forward.39} parent=0 // loop_body
    %s12 = ssub.s32 %s7, 1
    %s13 = ssub.s32 %s7, 2
    %s14 = sadd.s32 %s7, 1
    %s15 = ssub.s32 %s7, %s14
    %p16 = scmp.eq.s32.totalorder %s15, 0
    %s18 = sadd.s32 %s17, 1
    %s19 = scalar_select %p16, %s17, %s18
    %p22 = pneg %p16
    %p23 = scmp.eq.s32.totalorder %s7, 1
    %p24 = por %p22, %p23
    %p25 = scmp.ne.s32.totalorder %s17, %s20
    %p26 = scmp.eq.s32.totalorder %s7, 0
    %p27 = por %p25, %p26
    %p28 = scmp.ne.s32.totalorder %s17, %s20
    %p29 = scmp.eq.s32.totalorder %s12, 1
    %p30 = por %p28, %p29
    %p31 = scmp.ne.s32.totalorder %s20, %s21
    %p32 = scmp.eq.s32.totalorder %s12, 0
    %p33 = por %p31, %p32
    %p34 = scmp.ne.s32.totalorder %s20, %s21
    %p35 = scmp.eq.s32.totalorder %s13, 1
    %p36 = por %p34, %p35
    %p38 = scmp.ne.s32.totalorder %s21, %s37
    %p39 = scmp.eq.s32.totalorder %s13, 0
    %p40 = por %p38, %p39
    %s41 = ssub.s32 %s7, %s14
    %p42 = scmp.eq.s32.totalorder %s41, 0
    %s44 = sadd.s32 %s43, 1
    %s45 = scalar_select %p42, %s43, %s44
    %p48 = pneg %p42
    %p49 = scmp.eq.s32.totalorder %s7, 1
    %p50 = por %p48, %p49
    %p51 = scmp.ne.s32.totalorder %s43, %s46
    %p52 = scmp.eq.s32.totalorder %s7, 0
    %p53 = por %p51, %p52
    %p54 = scmp.ne.s32.totalorder %s43, %s46
    %p55 = scmp.eq.s32.totalorder %s12, 1
    %p56 = por %p54, %p55
    %p57 = scmp.ne.s32.totalorder %s46, %s47
    %p58 = scmp.eq.s32.totalorder %s12, 0
    %p59 = por %p57, %p58
    %p60 = scmp.ne.s32.totalorder %s46, %s47
    %p61 = scmp.eq.s32.totalorder %s13, 1
    %p62 = por %p60, %p61
    %p64 = scmp.ne.s32.totalorder %s47, %s63
    %p65 = scmp.eq.s32.totalorder %s13, 0
    %p66 = por %p64, %p65
    %p67 = scmp.le.s32.totalorder 1, %s7
    %p68 = scmp.lt.s32.totalorder %s7, 3
    %p69 = pnand %p67, %p68
    %p70 = pneg %p69
    // Predicated region
    $region9: #{custom_clip_forward.39} parent=5 // pred_check
      _
    $region10: #{custom_clip_forward.39} parent=5 // pred_check_branch
      %72 = sbr.rel (%p69) target = $region12
    $region11: #{custom_clip_forward.39} parent=5 // pred_region
      %s73 = ssub.s32 %s7, 1
    $region12: #{custom_clip_forward.39} parent=5 // pred_fallthru
      _
    %p74 = scmp.lt.s32.totalorder %s7, 2
    // Predicated region
    $region13: #{custom_clip_forward.39} parent=5 // pred_check
      %p75 = pneg %p74
    $region14: #{custom_clip_forward.39} parent=5 // pred_check_branch
      %77 = sbr.rel (%p75) target = $region16
    $region15: #{custom_clip_forward.39} parent=5 // pred_region
      // Predicated region
      $region17: #{custom_clip_forward.39} parent=15 // pred_check
        %p78 = pneg %p27
      $region18: #{custom_clip_forward.39} parent=15 // pred_check_branch
        %80 = sbr.rel (%p78) target = $region20
      $region19: #{custom_clip_forward.39} parent=15 // pred_region
        %p81 = scmp.lt.s32.totalorder %s7, 1
        %s82 = scalar_select %p81, %s7, 1
        %s83 = smul.addr %s82, 3
        %s84 = smul.addr %s83, 8
        %s85 = scalar_lea.vmem %s0, %s84
      $region20: #{custom_clip_forward.39} parent=15 // pred_fallthru
        _
    $region16: #{custom_clip_forward.39} parent=5 // pred_fallthru
      _
    %p86 = scmp.le.s32.totalorder 1, %s7
    %p87 = scmp.lt.s32.totalorder %s7, 3
    %p88 = pnand %p86, %p87
    %p89 = pneg %p88
    // Predicated region
    $region21: #{custom_clip_forward.39} parent=5 // pred_check
      _
    $region22: #{custom_clip_forward.39} parent=5 // pred_check_branch
      %91 = sbr.rel (%p88) target = $region24
    $region23: #{custom_clip_forward.39} parent=5 // pred_region
      %s92 = ssub.s32 %s7, 1
      %p93 = scmp.lt.s32.totalorder %s12, 1
      %s94 = scalar_select %p93, %s12, 1
      %s95 = smul.addr %s94, 3
      %s96 = smul.addr %s95, 8
      %s97 = scalar_lea.vmem %s0, %s96
      %p98 = pneg %p33
      %p99 = pneg %p30
      %p100 = pneg %p59
      %p101 = pneg %p56
      %p102 = scmp.lt.s32.totalorder %s12, 1
      %s103 = scalar_select %p102, %s12, 1
      %s104 = smul.addr %s103, 3
      %s105 = smul.addr %s104, 8
      %s106 = scalar_lea.vmem %s1, %s105
      %p107 = scmp.lt.s32.totalorder %s12, 1
      %s108 = scalar_select %p107, %s12, 1
      %s109 = smul.addr %s108, 3
      %s110 = smul.addr %s109, 8
      %s111 = scalar_lea.vmem %s0, %s110
      %p112 = scmp.lt.s32.totalorder %s12, 1
      %s113 = scalar_select %p112, %s12, 1
      %s114 = smul.addr %s113, 3
      %s115 = smul.addr %s114, 8
      %s116 = scalar_lea.vmem %s1, %s115
      %v118 = vld [vmem:[%s111] sm:$0xff]
      %v119 = vld [vmem:[%s111 + $0x8] sm:$0xff]
      %v120 = vld [vmem:[%s111 + $0x10] sm:$0x1]
      %v121 = vpack.c.bf16 %v119, %v118
      %v122 = vpack.c.bf16 %v120, %v120
      %125 = vrot.lane.b32.xlu0 %v121, 96
      %v126 = vpop.permute.xlu0 %125
      %127 = vrot.lane.b32.xlu0 %v122, 96
      %v128 = vpop.permute.xlu0 %127
      %vm129 = vcmask 64512
      %v131 = vsel %vm129, %v121, 0
      %v134 = vsel %vm129, %v122, 0
      %v137 = vsel %vm129, %v126, 0
      %v140 = vsel %vm129, %v128, 0
      %142 = vmatprep.subr.bf16.mxu0 0
      %143 = vmatpush1.bf16.xpose.msra.mxu0 %v137
      %144 = vmatprep.subr.bf16.mxu0 0
      %145 = vmatpush1.bf16.xpose.msra.mxu0 %v140
      %146 = vmatprep.subr.bf16.mxu0 0
      %147 = vmatpush1.bf16.xpose.msra.mxu0 0
      %148 = vmatprep.subr.bf16.mxu0 0
      %149 = vmatpush1.bf16.xpose.msra.mxu0 0
      %150 = vmatprep.subr.bf16.mxu0 0
      %151 = vmatpush1.bf16.xpose.msra.mxu0 0
      %152 = vmatprep.subr.bf16.mxu0 0
      %153 = vmatpush1.bf16.xpose.msra.mxu0 0
      %154 = vmatprep.subr.bf16.mxu0 0
      %155 = vmatpush1.bf16.xpose.msra.mxu0 0
      %156 = vmatprep.subr.bf16.mxu0 0
      %157 = vmatpush1.bf16.xpose.msra.mxu0 0
      %158 = vmatprep.subr.bf16.mxu0 0
      %159 = vmatpush1.bf16.xpose.msra.mxu0 0
      %160 = vmatprep.subr.bf16.mxu0 0
      %161 = vmatpush1.bf16.xpose.msra.mxu0 0
      %162 = vmatprep.subr.bf16.mxu0 0
      %163 = vmatpush1.bf16.xpose.msra.mxu0 0
      %164 = vmatprep.subr.bf16.mxu0 0
      %165 = vmatpush1.bf16.xpose.msra.mxu0 0
      %166 = vmatprep.subr.bf16.mxu0 0
      %167 = vmatpush1.bf16.xpose.msra.mxu0 0
      %168 = vmatprep.subr.bf16.mxu0 0
      %169 = vmatpush1.bf16.xpose.msra.mxu0 0
      %170 = vmatprep.subr.bf16.mxu0 0
      %171 = vmatpush1.bf16.xpose.msra.mxu0 0
      %172 = vmatprep.subr.bf16.mxu0 0
      %173 = vmatpush1.bf16.xpose.msra.mxu0 0
      %174 = vmatprep.mubr.bf16.mxu0 0
      %175 = vmatmul.mubr.bf16.gmra.mrb[0].mxu0 %v131
      %v176 = vpop.f32.mrb[0].mxu0
      %v177 = vadd.f32 0.0, %v176
      %v178 = vpop.f32.mrb[0].mxu0
      %v179 = vpop.f32.mrb[0].mxu0
      %v180 = vadd.f32 0.0, %v179
      %v181 = vpop.f32.mrb[0].mxu0
      %182 = vmatprep.mubr.bf16.mxu0 0
      %183 = vmatmul.mubr.bf16.gmra.mrb[0].mxu0 %v134
      %v184 = vpop.f32.mrb[0].mxu0
      %v185 = vadd.f32 0.0, %v184
      %v186 = vpop.f32.mrb[0].mxu0
      %v187 = vpop.f32.mrb[0].mxu0
      %v188 = vpop.f32.mrb[0].mxu0
      %189 = vdwg.mxu0
      %v190 = vmul.f32 %v177, 0.35355338
      %v191 = vmul.f32 %v180, 0.35355338
      %v192 = vmul.f32 %v185, 0.35355338
      %vm193 = vcmask 138240
      %v194 = vsel %vm193, %v190, -inf
      %195 = vmax.xlane.f32.xlu0 %v194
      %v196 = vpop.xlane.xlu0 %195
      %v197 = vsel %vm193, %v191, -inf
      %198 = vmax.xlane.f32.xlu0 %v197
      %v199 = vpop.xlane.xlu0 %198
      %vm200 = vcmask 131072
      %v201 = vsel %vm200, %v192, -inf
      %202 = vmax.xlane.f32.xlu0 %v201
      %v203 = vpop.xlane.xlu0 %202
      %v204 = vsub.f32 %v190, %v196
      %v205 = vsub.f32 %v191, %v199
      %v206 = vsub.f32 %v192, %v203
      %v207 = vmul.f32 %v204, 1.442695
      %v208 = vpow.pop %v207
      %v209 = vmul.f32 %v205, 1.442695
      %v210 = vpow.pop %v209
      %v211 = vmul.f32 %v206, 1.442695
      %v212 = vpow.pop %v211
      %v213 = vsel %vm193, %v208, 0.0
      %214 = vadd.xlane.f32.xlu0 %v213
      %v215 = vpop.xlane.xlu0 %214
      %v216 = vsel %vm193, %v210, 0.0
      %217 = vadd.xlane.f32.xlu0 %v216
      %v218 = vpop.xlane.xlu0 %217
      %v219 = vsel %vm200, %v212, 0.0
      %220 = vadd.xlane.f32.xlu0 %v219
      %v221 = vpop.xlane.xlu0 %220
      %v222 = vrcp.pop %v215
      %v223 = vrcp.pop %v218
      %v224 = vrcp.pop %v221
      %v225 = vmul.f32 %v208, %v222
      %v226 = vmul.f32 %v210, %v223
      %v227 = vmul.f32 %v212, %v224
      %v228 = vpack.c.bf16 %v226, %v225
      %v229 = vpack.c.bf16 %v227, %v227
      %230 = vrot.lane.b32.xlu0 %v121, 64
      %v231 = vpop.permute.xlu0 %230
      %232 = vrot.lane.b32.xlu0 %v122, 64
      %v233 = vpop.permute.xlu0 %232
      %v236 = vsel %vm193, %v228, 0
      %v239 = vsel %vm193, %v229, 0
      %vm241 = vcmask 1040384
      %v242 = vsel 0, 4294967295, 65535
      %v243 = vsel %vm241, %v242, 0
      %v245 = vand.u32 %v233, %v243
      %247 = vmatprep.subr.bf16.mxu0 0
      %248 = vmatpush1.bf16.msra.mxu0 %v231
      %249 = vmatprep.subr.bf16.mxu0 0
      %250 = vmatpush1.bf16.msra.mxu0 %v245
      %251 = vmatprep.subr.bf16.mxu0 0
      %252 = vmatpush1.bf16.msra.mxu0 0
      %253 = vmatprep.subr.bf16.mxu0 0
      %254 = vmatpush1.bf16.msra.mxu0 0
      %255 = vmatprep.subr.bf16.mxu0 0
      %256 = vmatpush1.bf16.msra.mxu0 0
      %257 = vmatprep.subr.bf16.mxu0 0
      %258 = vmatpush1.bf16.msra.mxu0 0
      %259 = vmatprep.subr.bf16.mxu0 0
      %260 = vmatpush1.bf16.msra.mxu0 0
      %261 = vmatprep.subr.bf16.mxu0 0
      %262 = vmatpush1.bf16.msra.mxu0 0
      %263 = vmatprep.subr.bf16.mxu0 0
      %264 = vmatpush1.bf16.msra.mxu0 0
      %265 = vmatprep.subr.bf16.mxu0 0
      %266 = vmatpush1.bf16.msra.mxu0 0
      %267 = vmatprep.subr.bf16.mxu0 0
      %268 = vmatpush1.bf16.msra.mxu0 0
      %269 = vmatprep.subr.bf16.mxu0 0
      %270 = vmatpush1.bf16.msra.mxu0 0
      %271 = vmatprep.subr.bf16.mxu0 0
      %272 = vmatpush1.bf16.msra.mxu0 0
      %273 = vmatprep.subr.bf16.mxu0 0
      %274 = vmatpush1.bf16.msra.mxu0 0
      %275 = vmatprep.subr.bf16.mxu0 0
      %276 = vmatpush1.bf16.msra.mxu0 0
      %277 = vmatprep.subr.bf16.mxu0 0
      %278 = vmatpush1.bf16.msra.mxu0 0
      %279 = vmatprep.mubr.bf16.mxu0 0
      %280 = vmatmul.mubr.bf16.gmra.mrb[0].mxu0 %v236
      %v281 = vpop.f32.mrb[0].mxu0
      %v282 = vadd.f32 0.0, %v281
      %v283 = vpop.f32.mrb[0].mxu0
      %v284 = vpop.f32.mrb[0].mxu0
      %v285 = vadd.f32 0.0, %v284
      %v286 = vpop.f32.mrb[0].mxu0
      %287 = vmatprep.mubr.bf16.mxu0 0
      %288 = vmatmul.mubr.bf16.gmra.mrb[0].mxu0 %v239
      %v289 = vpop.f32.mrb[0].mxu0
      %v290 = vadd.f32 0.0, %v289
      %v291 = vpop.f32.mrb[0].mxu0
      %v292 = vpop.f32.mrb[0].mxu0
      %v293 = vpop.f32.mrb[0].mxu0
      %294 = vdwg.mxu0
      %295 = vrot.lane.b32.xlu0 %v121, 120
      %v296 = vpop.permute.xlu0 %295
      %297 = vrot.lane.b32.xlu0 %v122, 120
      %v298 = vpop.permute.xlu0 %297
      %299 = vrot.lane.b32.xlu0 %v121, 88
      %v300 = vpop.permute.xlu0 %299
      %301 = vrot.lane.b32.xlu0 %v122, 88
      %v302 = vpop.permute.xlu0 %301
      %v304 = vsel %vm129, %v296, 0
      %v307 = vsel %vm129, %v298, 0
      %v310 = vsel %vm129, %v300, 0
      %v313 = vsel %vm129, %v302, 0
      %315 = vmatprep.subr.bf16.mxu0 0
      %316 = vmatpush1.bf16.xpose.msra.mxu0 %v310
      %317 = vmatprep.subr.bf16.mxu0 0
      %318 = vmatpush1.bf16.xpose.msra.mxu0 %v313
      %319 = vmatprep.subr.bf16.mxu0 0
      %320 = vmatpush1.bf16.xpose.msra.mxu0 0
      %321 = vmatprep.subr.bf16.mxu0 0
      %322 = vmatpush1.bf16.xpose.msra.mxu0 0
      %323 = vmatprep.subr.bf16.mxu0 0
      %324 = vmatpush1.bf16.xpose.msra.mxu0 0
      %325 = vmatprep.subr.bf16.mxu0 0
      %326 = vmatpush1.bf16.xpose.msra.mxu0 0
      %327 = vmatprep.subr.bf16.mxu0 0
      %328 = vmatpush1.bf16.xpose.msra.mxu0 0
      %329 = vmatprep.subr.bf16.mxu0 0
      %330 = vmatpush1.bf16.xpose.msra.mxu0 0
      %331 = vmatprep.subr.bf16.mxu0 0
      %332 = vmatpush1.bf16.xpose.msra.mxu0 0
      %333 = vmatprep.subr.bf16.mxu0 0
      %334 = vmatpush1.bf16.xpose.msra.mxu0 0
      %335 = vmatprep.subr.bf16.mxu0 0
      %336 = vmatpush1.bf16.xpose.msra.mxu0 0
      %337 = vmatprep.subr.bf16.mxu0 0
      %338 = vmatpush1.bf16.xpose.msra.mxu0 0
      %339 = vmatprep.subr.bf16.mxu0 0
      %340 = vmatpush1.bf16.xpose.msra.mxu0 0
      %341 = vmatprep.subr.bf16.mxu0 0
      %342 = vmatpush1.bf16.xpose.msra.mxu0 0
      %343 = vmatprep.subr.bf16.mxu0 0
      %344 = vmatpush1.bf16.xpose.msra.mxu0 0
      %345 = vmatprep.subr.bf16.mxu0 0
      %346 = vmatpush1.bf16.xpose.msra.mxu0 0
      %347 = vmatprep.mubr.bf16.mxu0 0
      %348 = vmatmul.mubr.bf16.gmra.mrb[0].mxu0 %v304
      %v349 = vpop.f32.mrb[0].mxu0
      %v350 = vadd.f32 0.0, %v349
      %v351 = vpop.f32.mrb[0].mxu0
      %v352 = vpop.f32.mrb[0].mxu0
      %v353 = vadd.f32 0.0, %v352
      %v354 = vpop.f32.mrb[0].mxu0
      %355 = vmatprep.mubr.bf16.mxu0 0
      %356 = vmatmul.mubr.bf16.gmra.mrb[0].mxu0 %v307
      %v357 = vpop.f32.mrb[0].mxu0
      %v358 = vadd.f32 0.0, %v357
      %v359 = vpop.f32.mrb[0].mxu0
      %v360 = vpop.f32.mrb[0].mxu0
      %v361 = vpop.f32.mrb[0].mxu0
      %362 = vdwg.mxu0
      %v363 = vmul.f32 %v350, 0.35355338
      %v364 = vmul.f32 %v353, 0.35355338
      %v365 = vmul.f32 %v358, 0.35355338
      %v366 = vsel %vm193, %v363, -inf
      %367 = vmax.xlane.f32.xlu0 %v366
      %v368 = vpop.xlane.xlu0 %367
      %v369 = vsel %vm193, %v364, -inf
      %370 = vmax.xlane.f32.xlu0 %v369
      %v371 = vpop.xlane.xlu0 %370
      %v372 = vsel %vm200, %v365, -inf
      %373 = vmax.xlane.f32.xlu0 %v372
      %v374 = vpop.xlane.xlu0 %373
      %v375 = vsub.f32 %v363, %v368
      %v376 = vsub.f32 %v364, %v371
      %v377 = vsub.f32 %v365, %v374
      %v378 = vmul.f32 %v375, 1.442695
      %v379 = vpow.pop %v378
      %v380 = vmul.f32 %v376, 1.442695
      %v381 = vpow.pop %v380
      %v382 = vmul.f32 %v377, 1.442695
      %v383 = vpow.pop %v382
      %v384 = vsel %vm193, %v379, 0.0
      %385 = vadd.xlane.f32.xlu0 %v384
      %v386 = vpop.xlane.xlu0 %385
      %v387 = vsel %vm193, %v381, 0.0
      %388 = vadd.xlane.f32.xlu0 %v387
      %v389 = vpop.xlane.xlu0 %388
      %v390 = vsel %vm200, %v383, 0.0
      %391 = vadd.xlane.f32.xlu0 %v390
      %v392 = vpop.xlane.xlu0 %391
      %v393 = vrcp.pop %v386
      %v394 = vrcp.pop %v389
      %v395 = vrcp.pop %v392
      %v396 = vmul.f32 %v379, %v393
      %v397 = vmul.f32 %v381, %v394
      %v398 = vmul.f32 %v383, %v395
      %v399 = vpack.c.bf16 %v397, %v396
      %v400 = vpack.c.bf16 %v398, %v398
      %401 = vrot.lane.b32.xlu0 %v121, 56
      %v402 = vpop.permute.xlu0 %401
      %403 = vrot.lane.b32.xlu0 %v122, 56
      %v404 = vpop.permute.xlu0 %403
      %v407 = vsel %vm193, %v399, 0
      %v410 = vsel %vm193, %v400, 0
      %v413 = vand.u32 %v404, %v243
      %415 = vmatprep.subr.bf16.mxu0 0
      %416 = vmatpush1.bf16.msra.mxu0 %v402
      %417 = vmatprep.subr.bf16.mxu0 0
      %418 = vmatpush1.bf16.msra.mxu0 %v413
      %419 = vmatprep.subr.bf16.mxu0 0
      %420 = vmatpush1.bf16.msra.mxu0 0
      %421 = vmatprep.subr.bf16.mxu0 0
      %422 = vmatpush1.bf16.msra.mxu0 0
      %423 = vmatprep.subr.bf16.mxu0 0
      %424 = vmatpush1.bf16.msra.mxu0 0
      %425 = vmatprep.subr.bf16.mxu0 0
      %426 = vmatpush1.bf16.msra.mxu0 0
      %427 = vmatprep.subr.bf16.mxu0 0
      %428 = vmatpush1.bf16.msra.mxu0 0
      %429 = vmatprep.subr.bf16.mxu0 0
      %430 = vmatpush1.bf16.msra.mxu0 0
      %431 = vmatprep.subr.bf16.mxu0 0
      %432 = vmatpush1.bf16.msra.mxu0 0
      %433 = vmatprep.subr.bf16.mxu0 0
      %434 = vmatpush1.bf16.msra.mxu0 0
      %435 = vmatprep.subr.bf16.mxu0 0
      %436 = vmatpush1.bf16.msra.mxu0 0
      %437 = vmatprep.subr.bf16.mxu0 0
      %438 = vmatpush1.bf16.msra.mxu0 0
      %439 = vmatprep.subr.bf16.mxu0 0
      %440 = vmatpush1.bf16.msra.mxu0 0
      %441 = vmatprep.subr.bf16.mxu0 0
      %442 = vmatpush1.bf16.msra.mxu0 0
      %443 = vmatprep.subr.bf16.mxu0 0
      %444 = vmatpush1.bf16.msra.mxu0 0
      %445 = vmatprep.subr.bf16.mxu0 0
      %446 = vmatpush1.bf16.msra.mxu0 0
      %447 = vmatprep.mubr.bf16.mxu0 0
      %448 = vmatmul.mubr.bf16.gmra.mrb[0].mxu0 %v407
      %v449 = vpop.f32.mrb[0].mxu0
      %v450 = vadd.f32 0.0, %v449
      %v451 = vpop.f32.mrb[0].mxu0
      %v452 = vpop.f32.mrb[0].mxu0
      %v453 = vadd.f32 0.0, %v452
      %v454 = vpop.f32.mrb[0].mxu0
      %455 = vmatprep.mubr.bf16.mxu0 0
      %456 = vmatmul.mubr.bf16.gmra.mrb[0].mxu0 %v410
      %v457 = vpop.f32.mrb[0].mxu0
      %v458 = vadd.f32 0.0, %v457
      %v459 = vpop.f32.mrb[0].mxu0
      %v460 = vpop.f32.mrb[0].mxu0
      %v461 = vpop.f32.mrb[0].mxu0
      %462 = vdwg.mxu0
      %463 = vrot.lane.b32.xlu0 %v121, 112
      %v464 = vpop.permute.xlu0 %463
      %465 = vrot.lane.b32.xlu0 %v122, 112
      %v466 = vpop.permute.xlu0 %465
      %467 = vrot.lane.b32.xlu0 %v121, 80
      %v468 = vpop.permute.xlu0 %467
      %469 = vrot.lane.b32.xlu0 %v122, 80
      %v470 = vpop.permute.xlu0 %469
      %v472 = vsel %vm129, %v464, 0
      %v475 = vsel %vm129, %v466, 0
      %v478 = vsel %vm129, %v468, 0
      %v481 = vsel %vm129, %v470, 0
      %483 = vmatprep.subr.bf16.mxu0 0
      %484 = vmatpush1.bf16.xpose.msra.mxu0 %v478
      %485 = vmatprep.subr.bf16.mxu0 0
      %486 = vmatpush1.bf16.xpose.msra.mxu0 %v481
      %487 = vmatprep.subr.bf16.mxu0 0
      %488 = vmatpush1.bf16.xpose.msra.mxu0 0
      %489 = vmatprep.subr.bf16.mxu0 0
      %490 = vmatpush1.bf16.xpose.msra.mxu0 0
      %491 = vmatprep.subr.bf16.mxu0 0
      %492 = vmatpush1.bf16.xpose.msra.mxu0 0
      %493 = vmatprep.subr.bf16.mxu0 0
      %494 = vmatpush1.bf16.xpose.msra.mxu0 0
      %495 = vmatprep.subr.bf16.mxu0 0
      %496 = vmatpush1.bf16.xpose.msra.mxu0 0
      %497 = vmatprep.subr.bf16.mxu0 0
      %498 = vmatpush1.bf16.xpose.msra.mxu0 0
      %499 = vmatprep.subr.bf16.mxu0 0
      %500 = vmatpush1.bf16.xpose.msra.mxu0 0
      %501 = vmatprep.subr.bf16.mxu0 0
      %502 = vmatpush1.bf16.xpose.msra.mxu0 0
      %503 = vmatprep.subr.bf16.mxu0 0
      %504 = vmatpush1.bf16.xpose.msra.mxu0 0
      %505 = vmatprep.subr.bf16.mxu0 0
      %506 = vmatpush1.bf16.xpose.msra.mxu0 0
      %507 = vmatprep.subr.bf16.mxu0 0
      %508 = vmatpush1.bf16.xpose.msra.mxu0 0
      %509 = vmatprep.subr.bf16.mxu0 0
      %510 = vmatpush1.bf16.xpose.msra.mxu0 0
      %511 = vmatprep.subr.bf16.mxu0 0
      %512 = vmatpush1.bf16.xpose.msra.mxu0 0
      %513 = vmatprep.subr.bf16.mxu0 0
      %514 = vmatpush1.bf16.xpose.msra.mxu0 0
      %515 = vmatprep.mubr.bf16.mxu0 0
      %516 = vmatmul.mubr.bf16.gmra.mrb[0].mxu0 %v472
      %v517 = vpop.f32.mrb[0].mxu0
      %v518 = vadd.f32 0.0, %v517
      %v519 = vpop.f32.mrb[0].mxu0
      %v520 = vpop.f32.mrb[0].mxu0
      %v521 = vadd.f32 0.0, %v520
      %v522 = vpop.f32.mrb[0].mxu0
      %523 = vmatprep.mubr.bf16.mxu0 0
      %524 = vmatmul.mubr.bf16.gmra.mrb[0].mxu0 %v475
      %v525 = vpop.f32.mrb[0].mxu0
      %v526 = vadd.f32 0.0, %v525
      %v527 = vpop.f32.mrb[0].mxu0
      %v528 = vpop.f32.mrb[0].mxu0
      %v529 = vpop.f32.mrb[0].mxu0
      %530 = vdwg.mxu0
      %v531 = vmul.f32 %v518, 0.35355338
      %v532 = vmul.f32 %v521, 0.35355338
      %v533 = vmul.f32 %v526, 0.35355338
      %v534 = vsel %vm193, %v531, -inf
      %535 = vmax.xlane.f32.xlu0 %v534
      %v536 = vpop.xlane.xlu0 %535
      %v537 = vsel %vm193, %v532, -inf
      %538 = vmax.xlane.f32.xlu0 %v537
      %v539 = vpop.xlane.xlu0 %538
      %v540 = vsel %vm200, %v533, -inf
      %541 = vmax.xlane.f32.xlu0 %v540
      %v542 = vpop.xlane.xlu0 %541
      %v543 = vsub.f32 %v531, %v536
      %v544 = vsub.f32 %v532, %v539
      %v545 = vsub.f32 %v533, %v542
      %v546 = vmul.f32 %v543, 1.442695
      %v547 = vpow.pop %v546
      %v548 = vmul.f32 %v544, 1.442695
      %v549 = vpow.pop %v548
      %v550 = vmul.f32 %v545, 1.442695
      %v551 = vpow.pop %v550
      %v552 = vsel %vm193, %v547, 0.0
      %553 = vadd.xlane.f32.xlu0 %v552
      %v554 = vpop.xlane.xlu0 %553
      %v555 = vsel %vm193, %v549, 0.0
      %556 = vadd.xlane.f32.xlu0 %v555
      %v557 = vpop.xlane.xlu0 %556
      %v558 = vsel %vm200, %v551, 0.0
      %559 = vadd.xlane.f32.xlu0 %v558
      %v560 = vpop.xlane.xlu0 %559
      %v561 = vrcp.pop %v554
      %v562 = vrcp.pop %v557
      %v563 = vrcp.pop %v560
      %v564 = vmul.f32 %v547, %v561
      %v565 = vmul.f32 %v549, %v562
      %v566 = vmul.f32 %v551, %v563
      %v567 = vpack.c.bf16 %v565, %v564
      %v568 = vpack.c.bf16 %v566, %v566
      %569 = vrot.lane.b32.xlu0 %v121, 48
      %v570 = vpop.permute.xlu0 %569
      %571 = vrot.lane.b32.xlu0 %v122, 48
      %v572 = vpop.permute.xlu0 %571
      %v575 = vsel %vm193, %v567, 0
      %v578 = vsel %vm193, %v568, 0
      %v581 = vand.u32 %v572, %v243
      %583 = vmatprep.subr.bf16.mxu0 0
      %584 = vmatpush1.bf16.msra.mxu0 %v570
      %585 = vmatprep.subr.bf16.mxu0 0
      %586 = vmatpush1.bf16.msra.mxu0 %v581
      %587 = vmatprep.subr.bf16.mxu0 0
      %588 = vmatpush1.bf16.msra.mxu0 0
      %589 = vmatprep.subr.bf16.mxu0 0
      %590 = vmatpush1.bf16.msra.mxu0 0
      %591 = vmatprep.subr.bf16.mxu0 0
      %592 = vmatpush1.bf16.msra.mxu0 0
      %593 = vmatprep.subr.bf16.mxu0 0
      %594 = vmatpush1.bf16.msra.mxu0 0
      %595 = vmatprep.subr.bf16.mxu0 0
      %596 = vmatpush1.bf16.msra.mxu0 0
      %597 = vmatprep.subr.bf16.mxu0 0
      %598 = vmatpush1.bf16.msra.mxu0 0
      %599 = vmatprep.subr.bf16.mxu0 0
      %600 = vmatpush1.bf16.msra.mxu0 0
      %601 = vmatprep.subr.bf16.mxu0 0
      %602 = vmatpush1.bf16.msra.mxu0 0
      %603 = vmatprep.subr.bf16.mxu0 0
      %604 = vmatpush1.bf16.msra.mxu0 0
      %605 = vmatprep.subr.bf16.mxu0 0
      %606 = vmatpush1.bf16.msra.mxu0 0
      %607 = vmatprep.subr.bf16.mxu0 0
      %608 = vmatpush1.bf16.msra.mxu0 0
      %609 = vmatprep.subr.bf16.mxu0 0
      %610 = vmatpush1.bf16.msra.mxu0 0
      %611 = vmatprep.subr.bf16.mxu0 0
      %612 = vmatpush1.bf16.msra.mxu0 0
      %613 = vmatprep.subr.bf16.mxu0 0
      %614 = vmatpush1.bf16.msra.mxu0 0
      %615 = vmatprep.mubr.bf16.mxu0 0
      %616 = vmatmul.mubr.bf16.gmra.mrb[0].mxu0 %v575
      %v617 = vpop.f32.mrb[0].mxu0
      %v618 = vadd.f32 0.0, %v617
      %v619 = vpop.f32.mrb[0].mxu0
      %v620 = vpop.f32.mrb[0].mxu0
      %v621 = vadd.f32 0.0, %v620
      %v622 = vpop.f32.mrb[0].mxu0
      %623 = vmatprep.mubr.bf16.mxu0 0
      %624 = vmatmul.mubr.bf16.gmra.mrb[0].mxu0 %v578
      %v625 = vpop.f32.mrb[0].mxu0
      %v626 = vadd.f32 0.0, %v625
      %v627 = vpop.f32.mrb[0].mxu0
      %v628 = vpop.f32.mrb[0].mxu0
      %v629 = vpop.f32.mrb[0].mxu0
      %630 = vdwg.mxu0
      %631 = vrot.lane.b32.xlu0 %v121, 104
      %v632 = vpop.permute.xlu0 %631
      %633 = vrot.lane.b32.xlu0 %v122, 104
      %v634 = vpop.permute.xlu0 %633
      %635 = vrot.lane.b32.xlu0 %v121, 72
      %v636 = vpop.permute.xlu0 %635
      %637 = vrot.lane.b32.xlu0 %v122, 72
      %v638 = vpop.permute.xlu0 %637
      %v640 = vsel %vm129, %v632, 0
      %v643 = vsel %vm129, %v634, 0
      %v646 = vsel %vm129, %v636, 0
      %v649 = vsel %vm129, %v638, 0
      %651 = vmatprep.subr.bf16.mxu0 0
      %652 = vmatpush1.bf16.xpose.msra.mxu0 %v646
      %653 = vmatprep.subr.bf16.mxu0 0
      %654 = vmatpush1.bf16.xpose.msra.mxu0 %v649
      %655 = vmatprep.subr.bf16.mxu0 0
      %656 = vmatpush1.bf16.xpose.msra.mxu0 0
      %657 = vmatprep.subr.bf16.mxu0 0
      %658 = vmatpush1.bf16.xpose.msra.mxu0 0
      %659 = vmatprep.subr.bf16.mxu0 0
      %660 = vmatpush1.bf16.xpose.msra.mxu0 0
      %661 = vmatprep.subr.bf16.mxu0 0
      %662 = vmatpush1.bf16.xpose.msra.mxu0 0
      %663 = vmatprep.subr.bf16.mxu0 0
      %664 = vmatpush1.bf16.xpose.msra.mxu0 0
      %665 = vmatprep.subr.bf16.mxu0 0
      %666 = vmatpush1.bf16.xpose.msra.mxu0 0
      %667 = vmatprep.subr.bf16.mxu0 0
      %668 = vmatpush1.bf16.xpose.msra.mxu0 0
      %669 = vmatprep.subr.bf16.mxu0 0
      %670 = vmatpush1.bf16.xpose.msra.mxu0 0
      %671 = vmatprep.subr.bf16.mxu0 0
      %672 = vmatpush1.bf16.xpose.msra.mxu0 0
      %673 = vmatprep.subr.bf16.mxu0 0
      %674 = vmatpush1.bf16.xpose.msra.mxu0 0
      %675 = vmatprep.subr.bf16.mxu0 0
      %676 = vmatpush1.bf16.xpose.msra.mxu0 0
      %677 = vmatprep.subr.bf16.mxu0 0
      %678 = vmatpush1.bf16.xpose.msra.mxu0 0
      %679 = vmatprep.subr.bf16.mxu0 0
      %680 = vmatpush1.bf16.xpose.msra.mxu0 0
      %681 = vmatprep.subr.bf16.mxu0 0
      %682 = vmatpush1.bf16.xpose.msra.mxu0 0
      %683 = vmatprep.mubr.bf16.mxu0 0
      %684 = vmatmul.mubr.bf16.gmra.mrb[0].mxu0 %v640
      %v685 = vpop.f32.mrb[0].mxu0
      %v686 = vadd.f32 0.0, %v685
      %v687 = vpop.f32.mrb[0].mxu0
      %v688 = vpop.f32.mrb[0].mxu0
      %v689 = vadd.f32 0.0, %v688
      %v690 = vpop.f32.mrb[0].mxu0
      %691 = vmatprep.mubr.bf16.mxu0 0
      %692 = vmatmul.mubr.bf16.gmra.mrb[0].mxu0 %v643
      %v693 = vpop.f32.mrb[0].mxu0
      %v694 = vadd.f32 0.0, %v693
      %v695 = vpop.f32.mrb[0].mxu0
      %v696 = vpop.f32.mrb[0].mxu0
      %v697 = vpop.f32.mrb[0].mxu0
      %698 = vdwg.mxu0
      %v699 = vmul.f32 %v686, 0.35355338
      %v700 = vmul.f32 %v689, 0.35355338
      %v701 = vmul.f32 %v694, 0.35355338
      %v702 = vsel %vm193, %v699, -inf
      %703 = vmax.xlane.f32.xlu0 %v702
      %v704 = vpop.xlane.xlu0 %703
      %v705 = vsel %vm193, %v700, -inf
      %706 = vmax.xlane.f32.xlu0 %v705
      %v707 = vpop.xlane.xlu0 %706
      %v708 = vsel %vm200, %v701, -inf
      %709 = vmax.xlane.f32.xlu0 %v708
      %v710 = vpop.xlane.xlu0 %709
      %v711 = vsub.f32 %v699, %v704
      %v712 = vsub.f32 %v700, %v707
      %v713 = vsub.f32 %v701, %v710
      %v714 = vmul.f32 %v711, 1.442695
      %v715 = vpow.pop %v714
      %v716 = vmul.f32 %v712, 1.442695
      %v717 = vpow.pop %v716
      %v718 = vmul.f32 %v713, 1.442695
      %v719 = vpow.pop %v718
      %v720 = vsel %vm193, %v715, 0.0
      %721 = vadd.xlane.f32.xlu0 %v720
      %v722 = vpop.xlane.xlu0 %721
      %v723 = vsel %vm193, %v717, 0.0
      %724 = vadd.xlane.f32.xlu0 %v723
      %v725 = vpop.xlane.xlu0 %724
      %v726 = vsel %vm200, %v719, 0.0
      %727 = vadd.xlane.f32.xlu0 %v726
      %v728 = vpop.xlane.xlu0 %727
      %v729 = vrcp.pop %v722
      %v730 = vrcp.pop %v725
      %v731 = vrcp.pop %v728
      %v732 = vmul.f32 %v715, %v729
      %v733 = vmul.f32 %v717, %v730
      %v734 = vmul.f32 %v719, %v731
      %v735 = vpack.c.bf16 %v733, %v732
      %v736 = vpack.c.bf16 %v734, %v734
      %737 = vrot.lane.b32.xlu0 %v121, 40
      %v738 = vpop.permute.xlu0 %737
      %739 = vrot.lane.b32.xlu0 %v122, 40
      %v740 = vpop.permute.xlu0 %739
      %v743 = vsel %vm193, %v735, 0
      %v746 = vsel %vm193, %v736, 0
      %v749 = vand.u32 %v740, %v243
      %751 = vmatprep.subr.bf16.mxu0 0
      %752 = vmatpush1.bf16.msra.mxu0 %v738
      %753 = vmatprep.subr.bf16.mxu0 0
      %754 = vmatpush1.bf16.msra.mxu0 %v749
      %755 = vmatprep.subr.bf16.mxu0 0
      %756 = vmatpush1.bf16.msra.mxu0 0
      %757 = vmatprep.subr.bf16.mxu0 0
      %758 = vmatpush1.bf16.msra.mxu0 0
      %759 = vmatprep.subr.bf16.mxu0 0
      %760 = vmatpush1.bf16.msra.mxu0 0
      %761 = vmatprep.subr.bf16.mxu0 0
      %762 = vmatpush1.bf16.msra.mxu0 0
      %763 = vmatprep.subr.bf16.mxu0 0
      %764 = vmatpush1.bf16.msra.mxu0 0
      %765 = vmatprep.subr.bf16.mxu0 0
      %766 = vmatpush1.bf16.msra.mxu0 0
      %767 = vmatprep.subr.bf16.mxu0 0
      %768 = vmatpush1.bf16.msra.mxu0 0
      %769 = vmatprep.subr.bf16.mxu0 0
      %770 = vmatpush1.bf16.msra.mxu0 0
      %771 = vmatprep.subr.bf16.mxu0 0
      %772 = vmatpush1.bf16.msra.mxu0 0
      %773 = vmatprep.subr.bf16.mxu0 0
      %774 = vmatpush1.bf16.msra.mxu0 0
      %775 = vmatprep.subr.bf16.mxu0 0
      %776 = vmatpush1.bf16.msra.mxu0 0
      %777 = vmatprep.subr.bf16.mxu0 0
      %778 = vmatpush1.bf16.msra.mxu0 0
      %779 = vmatprep.subr.bf16.mxu0 0
      %780 = vmatpush1.bf16.msra.mxu0 0
      %781 = vmatprep.subr.bf16.mxu0 0
      %782 = vmatpush1.bf16.msra.mxu0 0
      %783 = vmatprep.mubr.bf16.mxu0 0
      %784 = vmatmul.mubr.bf16.gmra.mrb[0].mxu0 %v743
      %v785 = vpop.f32.mrb[0].mxu0
      %v786 = vadd.f32 0.0, %v785
      %v787 = vpop.f32.mrb[0].mxu0
      %v788 = vpop.f32.mrb[0].mxu0
      %v789 = vadd.f32 0.0, %v788
      %v790 = vpop.f32.mrb[0].mxu0
      %791 = vmatprep.mubr.bf16.mxu0 0
      %792 = vmatmul.mubr.bf16.gmra.mrb[0].mxu0 %v746
      %v793 = vpop.f32.mrb[0].mxu0
      %v794 = vadd.f32 0.0, %v793
      %v795 = vpop.f32.mrb[0].mxu0
      %v796 = vpop.f32.mrb[0].mxu0
      %v797 = vpop.f32.mrb[0].mxu0
      %798 = vdwg.mxu0
      %802 = vrot.lane.b32.xlu0 %v450, 8
      %v803 = vpop.permute.xlu0 %802
      %804 = vrot.lane.b32.xlu0 %v453, 8
      %v805 = vpop.permute.xlu0 %804
      %806 = vrot.lane.b32.xlu0 %v458, 8
      %v807 = vpop.permute.xlu0 %806
      %814 = vrot.lane.b32.xlu0 %v618, 16
      %v815 = vpop.permute.xlu0 %814
      %816 = vrot.lane.b32.xlu0 %v621, 16
      %v817 = vpop.permute.xlu0 %816
      %818 = vrot.lane.b32.xlu0 %v626, 16
      %v819 = vpop.permute.xlu0 %818
      %826 = vrot.lane.b32.xlu0 %v786, 24
      %v827 = vpop.permute.xlu0 %826
      %828 = vrot.lane.b32.xlu0 %v789, 24
      %v829 = vpop.permute.xlu0 %828
      %830 = vrot.lane.b32.xlu0 %v794, 24
      %v831 = vpop.permute.xlu0 %830
      %v835 = vsel %vm129, %v282, %v803
      %v836 = vsel %vm129, %v285, %v805
      %v837 = vsel %vm129, %v290, %v807
      %vm838 = vcmask 130048
      %v839 = vsel %vm838, %v835, %v815
      %v840 = vsel %vm838, %v836, %v817
      %v841 = vsel %vm838, %v837, %v819
      %vm842 = vcmask 195584
      %v843 = vsel %vm842, %v839, %v827
      %v844 = vsel %vm842, %v840, %v829
      %v845 = vsel %vm842, %v841, %v831
      %vm846 = vcmask 261120
      %847 = vst.msk [vmem:[%s116] sm:$0xff] %vm846, %v843
      %848 = vst.msk [vmem:[%s116 + $0x8] sm:$0xff] %vm846, %v844
      %vm849 = vcmask 253952
      %850 = vst.msk [vmem:[%s116 + $0x10] sm:$0x1] %vm849, %v845
      %p851 = scmp.lt.s32.totalorder %s12, 1
      %s852 = scalar_select %p851, %s12, 1
      %s853 = smul.addr %s852, 3
      %s854 = smul.addr %s853, 8
      %s855 = scalar_lea.vmem %s1, %s854
      // Predicated region
      $region25: #{custom_clip_forward.39} parent=23 // pred_check
        %p856 = pneg %p56
      $region26: #{custom_clip_forward.39} parent=23 // pred_check_branch
        %858 = sbr.rel (%p856) target = $region28
      $region27: #{custom_clip_forward.39} parent=23 // pred_region
        _
      $region28: #{custom_clip_forward.39} parent=23 // pred_fallthru
        _
    $region24: #{custom_clip_forward.39} parent=5 // pred_fallthru
      _
    %p859 = scmp.le.s32.totalorder 2, %s7
    // Predicated region
    $region29: #{custom_clip_forward.39} parent=5 // pred_check
      %p860 = pneg %p859
    $region30: #{custom_clip_forward.39} parent=5 // pred_check_branch
      %862 = sbr.rel (%p860) target = $region32
    $region31: #{custom_clip_forward.39} parent=5 // pred_region
      %s863 = ssub.s32 %s7, 2
      // Predicated region
      $region33: #{custom_clip_forward.39} parent=31 // pred_check
        %p864 = pneg %p62
      $region34: #{custom_clip_forward.39} parent=31 // pred_check_branch
        %866 = sbr.rel (%p864) target = $region36
      $region35: #{custom_clip_forward.39} parent=31 // pred_region
        %p867 = scmp.lt.s32.totalorder %s13, 1
        %s868 = scalar_select %p867, %s13, 1
        %s869 = smul.addr %s868, 3
        %s870 = smul.addr %s869, 8
        %s871 = scalar_lea.vmem %s1, %s870
      $region36: #{custom_clip_forward.39} parent=31 // pred_fallthru
        _
    $region32: #{custom_clip_forward.39} parent=5 // pred_fallthru
      _
  $region6: #{custom_clip_forward.39} parent=0 // loop_footer
    %s11 = sadd.s32 1, %s7
  $region7: #{custom_clip_forward.39} parent=0 // loop_footer_branch
    %6 = sbr.rel target = $region3
  $region8: #{custom_clip_forward.39} parent=0 // loop_exit
    _

// kernel: custom_clip_forward.40
$region0: #{custom_clip_forward.40}
  #allocation0 [shape = 'u32[]', space=smem, size = 0x4, offset = 0x4, fixed_abs, tag = 'smem constant byte address 0x4 - core index']
  #allocation1 [shape = 'u32[144,128]{1,0:T(1,128)}', space=vmem, size = 0x12000, scoped, tag = 'internal scratch']
  #allocation2 [shape = 'f32[34,32]{1,0:T(8,128)}', space=vmem, size = 0x5000, scoped, tag = 'scratch operand']
  %s0 = inlined_call_operand.vmem [shape: f32[34,32], index: 0, kind: input, shape index: {}]
  %s1 = inlined_call_operand.vmem [shape: bf16[32,32], index: 1, kind: input, shape index: {}]
  %s2 = inlined_call_operand.vmem [shape: f32[1,32], index: 2, kind: input, shape index: {}]
  %s3 = inlined_call_operand.vmem [shape: f32[34,32], index: 3, kind: input, shape index: {}]
  %s4 = inlined_call_operand.vmem [shape: f32[34,32], index: 4, kind: output, shape index: {}]
  %s5 = sld [smem:[#allocation0]]
  $region34: #{custom_clip_forward.40} parent=0
    _
  %s7 = ssub.s32 1, %s5
  %s8 = scalar_select 0, %s7, %s5
  // Predicated region
  $region2: #{custom_clip_forward.40} parent=0 // pred_check
    _
  $region3: #{custom_clip_forward.40} parent=0 // pred_check_branch
    %10 = sbr.rel (0) target = $region5
  $region4: #{custom_clip_forward.40} parent=0 // pred_region
    _
  $region5: #{custom_clip_forward.40} parent=0 // pred_fallthru
    _
  // Predicated region
  $region6: #{custom_clip_forward.40} parent=0 // pred_check
    _
  $region7: #{custom_clip_forward.40} parent=0 // pred_check_branch
    %12 = sbr.rel (0) target = $region9
  $region8: #{custom_clip_forward.40} parent=0 // pred_region
    _
  $region9: #{custom_clip_forward.40} parent=0 // pred_fallthru
    _
  // Predicated region
  $region10: #{custom_clip_forward.40} parent=0 // pred_check
    _
  $region11: #{custom_clip_forward.40} parent=0 // pred_check_branch
    %14 = sbr.rel (0) target = $region13
  $region12: #{custom_clip_forward.40} parent=0 // pred_region
    _
  $region13: #{custom_clip_forward.40} parent=0 // pred_fallthru
    _
  // Predicated region
  $region14: #{custom_clip_forward.40} parent=0 // pred_check
    _
  $region15: #{custom_clip_forward.40} parent=0 // pred_check_branch
    %16 = sbr.rel (0) target = $region17
  $region16: #{custom_clip_forward.40} parent=0 // pred_region
    _
  $region17: #{custom_clip_forward.40} parent=0 // pred_fallthru
    _
  %p18 = scmp.eq.s32.totalorder 0, 0
  // Predicated region
  $region18: #{custom_clip_forward.40} parent=0 // pred_check
    %p19 = pneg %p18
  $region19: #{custom_clip_forward.40} parent=0 // pred_check_branch
    %21 = sbr.rel (%p19) target = $region21
  $region20: #{custom_clip_forward.40} parent=0 // pred_region
    %vm22 = vcmask 261120
    %23 = vst.msk [vmem:[#allocation2] sm:$0xff] %vm22, 0.0
    %24 = vst.msk [vmem:[#allocation2 + $0x8] sm:$0xff] %vm22, 0.0
    %25 = vst.msk [vmem:[#allocation2 + $0x10] sm:$0xff] %vm22, 0.0
    %26 = vst.msk [vmem:[#allocation2 + $0x18] sm:$0xff] %vm22, 0.0
    %vm27 = vcmask 254976
    %28 = vst.msk [vmem:[#allocation2 + $0x20] sm:$0x3] %vm27, 0.0
  $region21: #{custom_clip_forward.40} parent=0 // pred_fallthru
    _
  %v29 = vld [vmem:[#allocation2] sm:$0xff]
  %v30 = vld [vmem:[#allocation2 + $0x8] sm:$0xff]
  %v31 = vld [vmem:[#allocation2 + $0x10] sm:$0xff]
  %v32 = vld [vmem:[#allocation2 + $0x18] sm:$0xff]
  %v33 = vld [vmem:[#allocation2 + $0x20] sm:$0x3]
  %v34 = vld [vmem:[%s0] sm:$0xff]
  %v35 = vld [vmem:[%s0 + $0x8] sm:$0xff]
  %v36 = vld [vmem:[%s0 + $0x10] sm:$0xff]
  %v37 = vld [vmem:[%s0 + $0x18] sm:$0xff]
  %v38 = vld [vmem:[%s0 + $0x20] sm:$0x3]
  %v39 = vpack.c.bf16 %v35, %v34
  %v40 = vpack.c.bf16 %v37, %v36
  %v41 = vpack.c.bf16 %v38, %v38
  %v42 = vld [vmem:[%s1] sm:$0xf]
  %v43 = vld [vmem:[%s1 + $0x4] sm:$0xf]
  %v44 = vld [vmem:[%s1 + $0x8] sm:$0xf]
  %v45 = vld [vmem:[%s1 + $0xc] sm:$0xf]
  %v50 = vunpack.c.l.b16 %v42
  %v51 = vunpack.c.l.b16 %v43
  %v52 = vunpack.c.l.b16 %v44
  %v53 = vunpack.c.l.b16 %v45
  %v54 = vpack.c.b16 %v51, %v50
  %v55 = vpack.c.b16 %v53, %v52
  %vm58 = vcmask 261120
  %v60 = vsel %vm58, %v39, 0
  %v63 = vsel %vm58, %v40, 0
  %v66 = vsel %vm58, %v41, 0
  %68 = vmatprep.subr.bf16.mxu0 0
  %69 = vmatpush1.bf16.msra.mxu0 %v54
  %70 = vmatprep.subr.bf16.mxu0 0
  %71 = vmatpush1.bf16.msra.mxu0 %v55
  %72 = vmatprep.subr.bf16.mxu0 0
  %73 = vmatpush1.bf16.msra.mxu0 0
  %74 = vmatprep.subr.bf16.mxu0 0
  %75 = vmatpush1.bf16.msra.mxu0 0
  %76 = vmatprep.subr.bf16.mxu0 0
  %77 = vmatpush1.bf16.msra.mxu0 0
  %78 = vmatprep.subr.bf16.mxu0 0
  %79 = vmatpush1.bf16.msra.mxu0 0
  %80 = vmatprep.subr.bf16.mxu0 0
  %81 = vmatpush1.bf16.msra.mxu0 0
  %82 = vmatprep.subr.bf16.mxu0 0
  %83 = vmatpush1.bf16.msra.mxu0 0
  %84 = vmatprep.subr.bf16.mxu0 0
  %85 = vmatpush1.bf16.msra.mxu0 0
  %86 = vmatprep.subr.bf16.mxu0 0
  %87 = vmatpush1.bf16.msra.mxu0 0
  %88 = vmatprep.subr.bf16.mxu0 0
  %89 = vmatpush1.bf16.msra.mxu0 0
  %90 = vmatprep.subr.bf16.mxu0 0
  %91 = vmatpush1.bf16.msra.mxu0 0
  %92 = vmatprep.subr.bf16.mxu0 0
  %93 = vmatpush1.bf16.msra.mxu0 0
  %94 = vmatprep.subr.bf16.mxu0 0
  %95 = vmatpush1.bf16.msra.mxu0 0
  %96 = vmatprep.subr.bf16.mxu0 0
  %97 = vmatpush1.bf16.msra.mxu0 0
  %98 = vmatprep.subr.bf16.mxu0 0
  %99 = vmatpush1.bf16.msra.mxu0 0
  %100 = vmatprep.mubr.bf16.mxu0 0
  %101 = vmatmul.mubr.bf16.gmra.mrb[0].mxu0 %v60
  %v102 = vpop.f32.mrb[0].mxu0
  %v103 = vadd.f32 0.0, %v102
  %v104 = vpop.f32.mrb[0].mxu0
  %v105 = vpop.f32.mrb[0].mxu0
  %v106 = vadd.f32 0.0, %v105
  %v107 = vpop.f32.mrb[0].mxu0
  %108 = vmatprep.mubr.bf16.mxu0 0
  %109 = vmatmul.mubr.bf16.gmra.mrb[0].mxu0 %v63
  %v110 = vpop.f32.mrb[0].mxu0
  %v111 = vadd.f32 0.0, %v110
  %v112 = vpop.f32.mrb[0].mxu0
  %v113 = vpop.f32.mrb[0].mxu0
  %v114 = vadd.f32 0.0, %v113
  %v115 = vpop.f32.mrb[0].mxu0
  %116 = vmatprep.mubr.bf16.mxu0 0
  %117 = vmatmul.mubr.bf16.gmra.mrb[0].mxu0 %v66
  %v118 = vpop.f32.mrb[0].mxu0
  %v119 = vadd.f32 0.0, %v118
  %v120 = vpop.f32.mrb[0].mxu0
  %v121 = vpop.f32.mrb[0].mxu0
  %v122 = vpop.f32.mrb[0].mxu0
  %123 = vdwg.mxu0
  %v124 = vadd.f32 %v29, %v103
  %v125 = vadd.f32 %v30, %v106
  %v126 = vadd.f32 %v31, %v111
  %v127 = vadd.f32 %v32, %v114
  %v128 = vadd.f32 %v33, %v119
  %129 = vst.msk [vmem:[#allocation2] sm:$0xff] %vm58, %v124
  %130 = vst.msk [vmem:[#allocation2 + $0x8] sm:$0xff] %vm58, %v125
  %131 = vst.msk [vmem:[#allocation2 + $0x10] sm:$0xff] %vm58, %v126
  %132 = vst.msk [vmem:[#allocation2 + $0x18] sm:$0xff] %vm58, %v127
  %vm133 = vcmask 254976
  %134 = vst.msk [vmem:[#allocation2 + $0x20] sm:$0x3] %vm133, %v128
  // Predicated region
  $region22: #{custom_clip_forward.40} parent=0 // pred_check
    %p135 = pneg %p18
  $region23: #{custom_clip_forward.40} parent=0 // pred_check_branch
    %137 = sbr.rel (%p135) target = $region25
  $region24: #{custom_clip_forward.40} parent=0 // pred_region
    %v138 = vld [vmem:[#allocation2] sm:$0xff]
    %v139 = vld [vmem:[#allocation2 + $0x8] sm:$0xff]
    %v140 = vld [vmem:[#allocation2 + $0x10] sm:$0xff]
    %v141 = vld [vmem:[#allocation2 + $0x18] sm:$0xff]
    %v142 = vld [vmem:[#allocation2 + $0x20] sm:$0x3]
    %v143 = vld [vmem:[%s2] sm:$0x1]
    %v145 = vlaneseq
    %v146 = vshrl.u32 %v145, 7
    %v147 = vsub.s32 0, %v146
    %v148 = vrot.slane %v143, %v147
    %v150 = vadd.f32 %v138, %v148
    %v151 = vadd.f32 %v139, %v148
    %v152 = vadd.f32 %v140, %v148
    %v153 = vadd.f32 %v141, %v148
    %v154 = vadd.f32 %v142, %v148
    %v155 = vld [vmem:[%s3] sm:$0xff]
    %v156 = vld [vmem:[%s3 + $0x8] sm:$0xff]
    %v157 = vld [vmem:[%s3 + $0x10] sm:$0xff]
    %v158 = vld [vmem:[%s3 + $0x18] sm:$0xff]
    %v159 = vld [vmem:[%s3 + $0x20] sm:$0x3]
    %v160 = vadd.f32 %v150, %v155
    %v161 = vadd.f32 %v151, %v156
    %v162 = vadd.f32 %v152, %v157
    %v163 = vadd.f32 %v153, %v158
    %v164 = vadd.f32 %v154, %v159
    %165 = vst.msk [vmem:[%s4] sm:$0xff] %vm58, %v160
    %166 = vst.msk [vmem:[%s4 + $0x8] sm:$0xff] %vm58, %v161
    %167 = vst.msk [vmem:[%s4 + $0x10] sm:$0xff] %vm58, %v162
    %168 = vst.msk [vmem:[%s4 + $0x18] sm:$0xff] %vm58, %v163
    %169 = vst.msk [vmem:[%s4 + $0x20] sm:$0x3] %vm133, %v164
  $region25: #{custom_clip_forward.40} parent=0 // pred_fallthru
    _
  // Predicated region
  $region26: #{custom_clip_forward.40} parent=0 // pred_check
    _
  $region27: #{custom_clip_forward.40} parent=0 // pred_check_branch
    %171 = sbr.rel (0) target = $region29
  $region28: #{custom_clip_forward.40} parent=0 // pred_region
    _
  $region29: #{custom_clip_forward.40} parent=0 // pred_fallthru
    _
  // Predicated region
  $region30: #{custom_clip_forward.40} parent=0 // pred_check
    _
  $region31: #{custom_clip_forward.40} parent=0 // pred_check_branch
    %173 = sbr.rel (0) target = $region33
  $region32: #{custom_clip_forward.40} parent=0 // pred_region
    _
  $region33: #{custom_clip_forward.40} parent=0 // pred_fallthru
    _

// kernel: custom_clip_forward.41
$region0: #{custom_clip_forward.41}
  #allocation0 [shape = 'u32[]', space=smem, size = 0x4, offset = 0x4, fixed_abs, tag = 'smem constant byte address 0x4 - core index']
  #allocation1 [shape = 'u32[144,128]{1,0:T(1,128)}', space=vmem, size = 0x12000, scoped, tag = 'internal scratch']
  %s0 = inlined_call_operand.vmem [shape: f32[34,32], index: 0, kind: input, shape index: {}]
  %s1 = inlined_call_operand.vmem [shape: f32[1,32], index: 1, kind: input, shape index: {}]
  %s2 = inlined_call_operand.vmem [shape: f32[1,32], index: 2, kind: input, shape index: {}]
  %s3 = inlined_call_operand.vmem [shape: bf16[32,128], index: 3, kind: input, shape index: {}]
  %s4 = inlined_call_operand.vmem [shape: f32[1,128], index: 4, kind: input, shape index: {}]
  %s5 = inlined_call_operand.vmem [shape: f32[34,128], index: 5, kind: output, shape index: {}]
  %s6 = sld [smem:[#allocation0]]
  $region30: #{custom_clip_forward.41} parent=0
    _
  %s8 = ssub.s32 1, %s6
  %s9 = scalar_select 0, %s8, %s6
  // Predicated region
  $region2: #{custom_clip_forward.41} parent=0 // pred_check
    _
  $region3: #{custom_clip_forward.41} parent=0 // pred_check_branch
    %11 = sbr.rel (0) target = $region5
  $region4: #{custom_clip_forward.41} parent=0 // pred_region
    _
  $region5: #{custom_clip_forward.41} parent=0 // pred_fallthru
    _
  // Predicated region
  $region6: #{custom_clip_forward.41} parent=0 // pred_check
    _
  $region7: #{custom_clip_forward.41} parent=0 // pred_check_branch
    %13 = sbr.rel (0) target = $region9
  $region8: #{custom_clip_forward.41} parent=0 // pred_region
    _
  $region9: #{custom_clip_forward.41} parent=0 // pred_fallthru
    _
  // Predicated region
  $region10: #{custom_clip_forward.41} parent=0 // pred_check
    _
  $region11: #{custom_clip_forward.41} parent=0 // pred_check_branch
    %15 = sbr.rel (0) target = $region13
  $region12: #{custom_clip_forward.41} parent=0 // pred_region
    _
  $region13: #{custom_clip_forward.41} parent=0 // pred_fallthru
    _
  // Predicated region
  $region14: #{custom_clip_forward.41} parent=0 // pred_check
    _
  $region15: #{custom_clip_forward.41} parent=0 // pred_check_branch
    %17 = sbr.rel (0) target = $region17
  $region16: #{custom_clip_forward.41} parent=0 // pred_region
    _
  $region17: #{custom_clip_forward.41} parent=0 // pred_fallthru
    _
  // Predicated region
  $region18: #{custom_clip_forward.41} parent=0 // pred_check
    _
  $region19: #{custom_clip_forward.41} parent=0 // pred_check_branch
    %19 = sbr.rel (0) target = $region21
  $region20: #{custom_clip_forward.41} parent=0 // pred_region
    _
  $region21: #{custom_clip_forward.41} parent=0 // pred_fallthru
    _
  %v21 = vld [vmem:[%s0] sm:$0xff]
  %v22 = vld [vmem:[%s0 + $0x8] sm:$0xff]
  %v23 = vld [vmem:[%s0 + $0x10] sm:$0xff]
  %v24 = vld [vmem:[%s0 + $0x18] sm:$0xff]
  %v25 = vld [vmem:[%s0 + $0x20] sm:$0x3]
  %vm26 = vcmask 261120
  %v27 = vsel %vm26, %v21, 0.0
  %28 = vadd.xlane.f32.xlu0 %v27
  %v29 = vpop.xlane.xlu0 %28
  %v30 = vsel %vm26, %v22, 0.0
  %31 = vadd.xlane.f32.xlu0 %v30
  %v32 = vpop.xlane.xlu0 %31
  %v33 = vsel %vm26, %v23, 0.0
  %34 = vadd.xlane.f32.xlu0 %v33
  %v35 = vpop.xlane.xlu0 %34
  %v36 = vsel %vm26, %v24, 0.0
  %37 = vadd.xlane.f32.xlu0 %v36
  %v38 = vpop.xlane.xlu0 %37
  %vm39 = vcmask 254976
  %v40 = vsel %vm39, %v25, 0.0
  %41 = vadd.xlane.f32.xlu0 %v40
  %v42 = vpop.xlane.xlu0 %41
  %v43 = vrcp.pop 32.0
  %v44 = vmul.f32 %v29, %v43
  %v45 = vmul.f32 %v32, %v43
  %v46 = vmul.f32 %v35, %v43
  %v47 = vmul.f32 %v38, %v43
  %v48 = vmul.f32 %v42, %v43
  %v49 = vsub.f32 %v21, %v44
  %v50 = vsub.f32 %v22, %v45
  %v51 = vsub.f32 %v23, %v46
  %v52 = vsub.f32 %v24, %v47
  %v53 = vsub.f32 %v25, %v48
  %v54 = vmul.f32 %v49, %v49
  %v55 = vmul.f32 %v50, %v50
  %v56 = vmul.f32 %v51, %v51
  %v57 = vmul.f32 %v52, %v52
  %v58 = vmul.f32 %v53, %v53
  %v59 = vsel %vm26, %v54, 0.0
  %60 = vadd.xlane.f32.xlu0 %v59
  %v61 = vpop.xlane.xlu0 %60
  %v62 = vsel %vm26, %v55, 0.0
  %63 = vadd.xlane.f32.xlu0 %v62
  %v64 = vpop.xlane.xlu0 %63
  %v65 = vsel %vm26, %v56, 0.0
  %66 = vadd.xlane.f32.xlu0 %v65
  %v67 = vpop.xlane.xlu0 %66
  %v68 = vsel %vm26, %v57, 0.0
  %69 = vadd.xlane.f32.xlu0 %v68
  %v70 = vpop.xlane.xlu0 %69
  %v71 = vsel %vm39, %v58, 0.0
  %72 = vadd.xlane.f32.xlu0 %v71
  %v73 = vpop.xlane.xlu0 %72
  %v74 = vmul.f32 %v61, %v43
  %v75 = vmul.f32 %v64, %v43
  %v76 = vmul.f32 %v67, %v43
  %v77 = vmul.f32 %v70, %v43
  %v78 = vmul.f32 %v73, %v43
  %v79 = vadd.f32 %v74, 1e-05
  %v80 = vadd.f32 %v75, 1e-05
  %v81 = vadd.f32 %v76, 1e-05
  %v82 = vadd.f32 %v77, 1e-05
  %v83 = vadd.f32 %v78, 1e-05
  %v84 = vrsqrt.pop %v79
  %v85 = vrsqrt.pop %v80
  %v86 = vrsqrt.pop %v81
  %v87 = vrsqrt.pop %v82
  %v88 = vrsqrt.pop %v83
  %v89 = vmul.f32 %v49, %v84
  %v90 = vmul.f32 %v50, %v85
  %v91 = vmul.f32 %v51, %v86
  %v92 = vmul.f32 %v52, %v87
  %v93 = vmul.f32 %v53, %v88
  %v94 = vld [vmem:[%s1] sm:$0x1]
  %v96 = vlaneseq
  %v97 = vshrl.u32 %v96, 7
  %v98 = vsub.s32 0, %v97
  %v99 = vrot.slane %v94, %v98
  %v101 = vmul.f32 %v89, %v99
  %v102 = vmul.f32 %v90, %v99
  %v103 = vmul.f32 %v91, %v99
  %v104 = vmul.f32 %v92, %v99
  %v105 = vmul.f32 %v93, %v99
  %v106 = vld [vmem:[%s2] sm:$0x1]
  %v108 = vlaneseq
  %v109 = vshrl.u32 %v108, 7
  %v110 = vsub.s32 0, %v109
  %v111 = vrot.slane %v106, %v110
  %v113 = vadd.f32 %v101, %v111
  %v114 = vadd.f32 %v102, %v111
  %v115 = vadd.f32 %v103, %v111
  %v116 = vadd.f32 %v104, %v111
  %v117 = vadd.f32 %v105, %v111
  %v118 = vpack.c.bf16 %v114, %v113
  %v119 = vpack.c.bf16 %v116, %v115
  %v120 = vpack.c.bf16 %v117, %v117
  %v121 = vld [vmem:[%s3] sm:$0xf]
  %v122 = vld [vmem:[%s3 + $0x4] sm:$0xf]
  %v123 = vld [vmem:[%s3 + $0x8] sm:$0xf]
  %v124 = vld [vmem:[%s3 + $0xc] sm:$0xf]
  %v125 = vld [vmem:[%s4] sm:$0x1]
  %v127 = vlaneseq
  %v128 = vshrl.u32 %v127, 7
  %v129 = vsub.s32 0, %v128
  %v130 = vrot.slane %v125, %v129
  %v136 = vunpack.c.l.b16 %v121
  %v137 = vunpack.c.l.b16 %v122
  %v138 = vunpack.c.l.b16 %v123
  %v139 = vunpack.c.l.b16 %v124
  %v140 = vpack.c.b16 %v137, %v136
  %v141 = vpack.c.b16 %v139, %v138
  %v145 = vsel %vm26, %v118, 0
  %v148 = vsel %vm26, %v119, 0
  %v151 = vsel %vm26, %v120, 0
  %153 = vmatprep.subr.bf16.mxu0 0
  %154 = vmatpush1.bf16.msra.mxu0 %v140
  %155 = vmatprep.subr.bf16.mxu0 0
  %156 = vmatpush1.bf16.msra.mxu0 %v141
  %157 = vmatprep.subr.bf16.mxu0 0
  %158 = vmatpush1.bf16.msra.mxu0 0
  %159 = vmatprep.subr.bf16.mxu0 0
  %160 = vmatpush1.bf16.msra.mxu0 0
  %161 = vmatprep.subr.bf16.mxu0 0
  %162 = vmatpush1.bf16.msra.mxu0 0
  %163 = vmatprep.subr.bf16.mxu0 0
  %164 = vmatpush1.bf16.msra.mxu0 0
  %165 = vmatprep.subr.bf16.mxu0 0
  %166 = vmatpush1.bf16.msra.mxu0 0
  %167 = vmatprep.subr.bf16.mxu0 0
  %168 = vmatpush1.bf16.msra.mxu0 0
  %169 = vmatprep.subr.bf16.mxu0 0
  %170 = vmatpush1.bf16.msra.mxu0 0
  %171 = vmatprep.subr.bf16.mxu0 0
  %172 = vmatpush1.bf16.msra.mxu0 0
  %173 = vmatprep.subr.bf16.mxu0 0
  %174 = vmatpush1.bf16.msra.mxu0 0
  %175 = vmatprep.subr.bf16.mxu0 0
  %176 = vmatpush1.bf16.msra.mxu0 0
  %177 = vmatprep.subr.bf16.mxu0 0
  %178 = vmatpush1.bf16.msra.mxu0 0
  %179 = vmatprep.subr.bf16.mxu0 0
  %180 = vmatpush1.bf16.msra.mxu0 0
  %181 = vmatprep.subr.bf16.mxu0 0
  %182 = vmatpush1.bf16.msra.mxu0 0
  %183 = vmatprep.subr.bf16.mxu0 0
  %184 = vmatpush1.bf16.msra.mxu0 0
  %185 = vmatprep.mubr.bf16.mxu0 0
  %186 = vmatmul.mubr.bf16.gmra.mrb[0].mxu0 %v145
  %v187 = vpop.f32.mrb[0].mxu0
  %v188 = vadd.f32 %v130, %v187
  %v189 = vpop.f32.mrb[0].mxu0
  %v190 = vpop.f32.mrb[0].mxu0
  %v191 = vadd.f32 %v130, %v190
  %v192 = vpop.f32.mrb[0].mxu0
  %193 = vmatprep.mubr.bf16.mxu0 0
  %194 = vmatmul.mubr.bf16.gmra.mrb[0].mxu0 %v148
  %v195 = vpop.f32.mrb[0].mxu0
  %v196 = vadd.f32 %v130, %v195
  %v197 = vpop.f32.mrb[0].mxu0
  %v198 = vpop.f32.mrb[0].mxu0
  %v199 = vadd.f32 %v130, %v198
  %v200 = vpop.f32.mrb[0].mxu0
  %201 = vmatprep.mubr.bf16.mxu0 0
  %202 = vmatmul.mubr.bf16.gmra.mrb[0].mxu0 %v151
  %v203 = vpop.f32.mrb[0].mxu0
  %v204 = vadd.f32 %v130, %v203
  %v205 = vpop.f32.mrb[0].mxu0
  %v206 = vpop.f32.mrb[0].mxu0
  %v207 = vpop.f32.mrb[0].mxu0
  %208 = vdwg.mxu0
  %v209 = vmul.f32 %v188, 1.702
  %v210 = vmul.f32 %v191, 1.702
  %v211 = vmul.f32 %v196, 1.702
  %v212 = vmul.f32 %v199, 1.702
  %v213 = vmul.f32 %v204, 1.702
  %v214 = vxor.u32 %v209, 2147483648
  %v215 = vxor.u32 %v210, 2147483648
  %v216 = vxor.u32 %v211, 2147483648
  %v217 = vxor.u32 %v212, 2147483648
  %v218 = vxor.u32 %v213, 2147483648
  %v219 = vmul.f32 %v214, 1.442695
  %v220 = vpow.pop %v219
  %v221 = vmul.f32 %v215, 1.442695
  %v222 = vpow.pop %v221
  %v223 = vmul.f32 %v216, 1.442695
  %v224 = vpow.pop %v223
  %v225 = vmul.f32 %v217, 1.442695
  %v226 = vpow.pop %v225
  %v227 = vmul.f32 %v218, 1.442695
  %v228 = vpow.pop %v227
  %v229 = vadd.f32 %v220, 1.0
  %v230 = vadd.f32 %v222, 1.0
  %v231 = vadd.f32 %v224, 1.0
  %v232 = vadd.f32 %v226, 1.0
  %v233 = vadd.f32 %v228, 1.0
  %v234 = vrcp.pop %v229
  %v235 = vmul.f32 1.0, %v234
  %v236 = vrcp.pop %v230
  %v237 = vmul.f32 1.0, %v236
  %v238 = vrcp.pop %v231
  %v239 = vmul.f32 1.0, %v238
  %v240 = vrcp.pop %v232
  %v241 = vmul.f32 1.0, %v240
  %v242 = vrcp.pop %v233
  %v243 = vmul.f32 1.0, %v242
  %v244 = vmul.f32 %v188, %v235
  %v245 = vmul.f32 %v191, %v237
  %v246 = vmul.f32 %v196, %v239
  %v247 = vmul.f32 %v199, %v241
  %v248 = vmul.f32 %v204, %v243
  %249 = vst [vmem:[%s5] sm:$0xff] %v244
  %250 = vst [vmem:[%s5 + $0x8] sm:$0xff] %v245
  %251 = vst [vmem:[%s5 + $0x10] sm:$0xff] %v246
  %252 = vst [vmem:[%s5 + $0x18] sm:$0xff] %v247
  %253 = vst [vmem:[%s5 + $0x20] sm:$0x3] %v248
  // Predicated region
  $region22: #{custom_clip_forward.41} parent=0 // pred_check
    _
  $region23: #{custom_clip_forward.41} parent=0 // pred_check_branch
    %255 = sbr.rel (0) target = $region25
  $region24: #{custom_clip_forward.41} parent=0 // pred_region
    _
  $region25: #{custom_clip_forward.41} parent=0 // pred_fallthru
    _
  // Predicated region
  $region26: #{custom_clip_forward.41} parent=0 // pred_check
    _
  $region27: #{custom_clip_forward.41} parent=0 // pred_check_branch
    %257 = sbr.rel (0) target = $region29
  $region28: #{custom_clip_forward.41} parent=0 // pred_region
    _
  $region29: #{custom_clip_forward.41} parent=0 // pred_fallthru
    _

// kernel: custom_clip_forward.42
$region0: #{custom_clip_forward.42}
  #allocation0 [shape = 'u32[]', space=smem, size = 0x4, offset = 0x4, fixed_abs, tag = 'smem constant byte address 0x4 - core index']
  #allocation1 [shape = 'u32[144,128]{1,0:T(1,128)}', space=vmem, size = 0x12000, scoped, tag = 'internal scratch']
  #allocation2 [shape = 'f32[34,32]{1,0:T(8,128)}', space=vmem, size = 0x5000, scoped, tag = 'scratch operand']
  %s0 = inlined_call_operand.vmem [shape: f32[34,128], index: 0, kind: input, shape index: {}]
  %s1 = inlined_call_operand.vmem [shape: bf16[128,32], index: 1, kind: input, shape index: {}]
  %s2 = inlined_call_operand.vmem [shape: f32[1,32], index: 2, kind: input, shape index: {}]
  %s3 = inlined_call_operand.vmem [shape: f32[34,32], index: 3, kind: input, shape index: {}]
  %s4 = inlined_call_operand.vmem [shape: f32[34,32], index: 4, kind: output, shape index: {}]
  %s5 = sld [smem:[#allocation0]]
  $region34: #{custom_clip_forward.42} parent=0
    _
  %s7 = ssub.s32 1, %s5
  %s8 = scalar_select 0, %s7, %s5
  // Predicated region
  $region2: #{custom_clip_forward.42} parent=0 // pred_check
    _
  $region3: #{custom_clip_forward.42} parent=0 // pred_check_branch
    %10 = sbr.rel (0) target = $region5
  $region4: #{custom_clip_forward.42} parent=0 // pred_region
    _
  $region5: #{custom_clip_forward.42} parent=0 // pred_fallthru
    _
  // Predicated region
  $region6: #{custom_clip_forward.42} parent=0 // pred_check
    _
  $region7: #{custom_clip_forward.42} parent=0 // pred_check_branch
    %12 = sbr.rel (0) target = $region9
  $region8: #{custom_clip_forward.42} parent=0 // pred_region
    _
  $region9: #{custom_clip_forward.42} parent=0 // pred_fallthru
    _
  // Predicated region
  $region10: #{custom_clip_forward.42} parent=0 // pred_check
    _
  $region11: #{custom_clip_forward.42} parent=0 // pred_check_branch
    %14 = sbr.rel (0) target = $region13
  $region12: #{custom_clip_forward.42} parent=0 // pred_region
    _
  $region13: #{custom_clip_forward.42} parent=0 // pred_fallthru
    _
  // Predicated region
  $region14: #{custom_clip_forward.42} parent=0 // pred_check
    _
  $region15: #{custom_clip_forward.42} parent=0 // pred_check_branch
    %16 = sbr.rel (0) target = $region17
  $region16: #{custom_clip_forward.42} parent=0 // pred_region
    _
  $region17: #{custom_clip_forward.42} parent=0 // pred_fallthru
    _
  %p18 = scmp.eq.s32.totalorder 0, 0
  // Predicated region
  $region18: #{custom_clip_forward.42} parent=0 // pred_check
    %p19 = pneg %p18
  $region19: #{custom_clip_forward.42} parent=0 // pred_check_branch
    %21 = sbr.rel (%p19) target = $region21
  $region20: #{custom_clip_forward.42} parent=0 // pred_region
    %vm22 = vcmask 261120
    %23 = vst.msk [vmem:[#allocation2] sm:$0xff] %vm22, 0.0
    %24 = vst.msk [vmem:[#allocation2 + $0x8] sm:$0xff] %vm22, 0.0
    %25 = vst.msk [vmem:[#allocation2 + $0x10] sm:$0xff] %vm22, 0.0
    %26 = vst.msk [vmem:[#allocation2 + $0x18] sm:$0xff] %vm22, 0.0
    %vm27 = vcmask 254976
    %28 = vst.msk [vmem:[#allocation2 + $0x20] sm:$0x3] %vm27, 0.0
  $region21: #{custom_clip_forward.42} parent=0 // pred_fallthru
    _
  %v29 = vld [vmem:[#allocation2] sm:$0xff]
  %v30 = vld [vmem:[#allocation2 + $0x8] sm:$0xff]
  %v31 = vld [vmem:[#allocation2 + $0x10] sm:$0xff]
  %v32 = vld [vmem:[#allocation2 + $0x18] sm:$0xff]
  %v33 = vld [vmem:[#allocation2 + $0x20] sm:$0x3]
  %v34 = vld [vmem:[%s0] sm:$0xff]
  %v35 = vld [vmem:[%s0 + $0x8] sm:$0xff]
  %v36 = vld [vmem:[%s0 + $0x10] sm:$0xff]
  %v37 = vld [vmem:[%s0 + $0x18] sm:$0xff]
  %v38 = vld [vmem:[%s0 + $0x20] sm:$0x3]
  %v39 = vpack.c.bf16 %v35, %v34
  %v40 = vpack.c.bf16 %v37, %v36
  %v41 = vpack.c.bf16 %v38, %v38
  %v42 = vld [vmem:[%s1] sm:$0xf]
  %v43 = vld [vmem:[%s1 + $0x4] sm:$0xf]
  %v44 = vld [vmem:[%s1 + $0x8] sm:$0xf]
  %v45 = vld [vmem:[%s1 + $0xc] sm:$0xf]
  %v46 = vld [vmem:[%s1 + $0x10] sm:$0xf]
  %v47 = vld [vmem:[%s1 + $0x14] sm:$0xf]
  %v48 = vld [vmem:[%s1 + $0x18] sm:$0xf]
  %v49 = vld [vmem:[%s1 + $0x1c] sm:$0xf]
  %v50 = vld [vmem:[%s1 + $0x20] sm:$0xf]
  %v51 = vld [vmem:[%s1 + $0x24] sm:$0xf]
  %v52 = vld [vmem:[%s1 + $0x28] sm:$0xf]
  %v53 = vld [vmem:[%s1 + $0x2c] sm:$0xf]
  %v54 = vld [vmem:[%s1 + $0x30] sm:$0xf]
  %v55 = vld [vmem:[%s1 + $0x34] sm:$0xf]
  %v56 = vld [vmem:[%s1 + $0x38] sm:$0xf]
  %v57 = vld [vmem:[%s1 + $0x3c] sm:$0xf]
  %v74 = vunpack.c.l.b16 %v42
  %v75 = vunpack.c.l.b16 %v43
  %v76 = vunpack.c.l.b16 %v44
  %v77 = vunpack.c.l.b16 %v45
  %v78 = vunpack.c.l.b16 %v46
  %v79 = vunpack.c.l.b16 %v47
  %v80 = vunpack.c.l.b16 %v48
  %v81 = vunpack.c.l.b16 %v49
  %v82 = vunpack.c.l.b16 %v50
  %v83 = vunpack.c.l.b16 %v51
  %v84 = vunpack.c.l.b16 %v52
  %v85 = vunpack.c.l.b16 %v53
  %v86 = vunpack.c.l.b16 %v54
  %v87 = vunpack.c.l.b16 %v55
  %v88 = vunpack.c.l.b16 %v56
  %v89 = vunpack.c.l.b16 %v57
  %v90 = vpack.c.b16 %v75, %v74
  %v91 = vpack.c.b16 %v77, %v76
  %v92 = vpack.c.b16 %v79, %v78
  %v93 = vpack.c.b16 %v81, %v80
  %v94 = vpack.c.b16 %v83, %v82
  %v95 = vpack.c.b16 %v85, %v84
  %v96 = vpack.c.b16 %v87, %v86
  %v97 = vpack.c.b16 %v89, %v88
  %106 = vmatprep.subr.bf16.mxu0 0
  %107 = vmatpush1.bf16.msra.mxu0 %v90
  %108 = vmatprep.subr.bf16.mxu0 0
  %109 = vmatpush1.bf16.msra.mxu0 %v91
  %110 = vmatprep.subr.bf16.mxu0 0
  %111 = vmatpush1.bf16.msra.mxu0 %v92
  %112 = vmatprep.subr.bf16.mxu0 0
  %113 = vmatpush1.bf16.msra.mxu0 %v93
  %114 = vmatprep.subr.bf16.mxu0 0
  %115 = vmatpush1.bf16.msra.mxu0 %v94
  %116 = vmatprep.subr.bf16.mxu0 0
  %117 = vmatpush1.bf16.msra.mxu0 %v95
  %118 = vmatprep.subr.bf16.mxu0 0
  %119 = vmatpush1.bf16.msra.mxu0 %v96
  %120 = vmatprep.subr.bf16.mxu0 0
  %121 = vmatpush1.bf16.msra.mxu0 %v97
  %122 = vmatprep.subr.bf16.mxu0 0
  %123 = vmatpush1.bf16.msra.mxu0 0
  %124 = vmatprep.subr.bf16.mxu0 0
  %125 = vmatpush1.bf16.msra.mxu0 0
  %126 = vmatprep.subr.bf16.mxu0 0
  %127 = vmatpush1.bf16.msra.mxu0 0
  %128 = vmatprep.subr.bf16.mxu0 0
  %129 = vmatpush1.bf16.msra.mxu0 0
  %130 = vmatprep.subr.bf16.mxu0 0
  %131 = vmatpush1.bf16.msra.mxu0 0
  %132 = vmatprep.subr.bf16.mxu0 0
  %133 = vmatpush1.bf16.msra.mxu0 0
  %134 = vmatprep.subr.bf16.mxu0 0
  %135 = vmatpush1.bf16.msra.mxu0 0
  %136 = vmatprep.subr.bf16.mxu0 0
  %137 = vmatpush1.bf16.msra.mxu0 0
  %138 = vmatprep.mubr.bf16.mxu0 0
  %139 = vmatmul.mubr.bf16.gmra.mrb[0].mxu0 %v39
  %v140 = vpop.f32.mrb[0].mxu0
  %v141 = vadd.f32 0.0, %v140
  %v142 = vpop.f32.mrb[0].mxu0
  %v143 = vpop.f32.mrb[0].mxu0
  %v144 = vadd.f32 0.0, %v143
  %v145 = vpop.f32.mrb[0].mxu0
  %146 = vmatprep.mubr.bf16.mxu0 0
  %147 = vmatmul.mubr.bf16.gmra.mrb[0].mxu0 %v40
  %v148 = vpop.f32.mrb[0].mxu0
  %v149 = vadd.f32 0.0, %v148
  %v150 = vpop.f32.mrb[0].mxu0
  %v151 = vpop.f32.mrb[0].mxu0
  %v152 = vadd.f32 0.0, %v151
  %v153 = vpop.f32.mrb[0].mxu0
  %154 = vmatprep.mubr.bf16.mxu0 0
  %155 = vmatmul.mubr.bf16.gmra.mrb[0].mxu0 %v41
  %v156 = vpop.f32.mrb[0].mxu0
  %v157 = vadd.f32 0.0, %v156
  %v158 = vpop.f32.mrb[0].mxu0
  %v159 = vpop.f32.mrb[0].mxu0
  %v160 = vpop.f32.mrb[0].mxu0
  %161 = vdwg.mxu0
  %v162 = vadd.f32 %v29, %v141
  %v163 = vadd.f32 %v30, %v144
  %v164 = vadd.f32 %v31, %v149
  %v165 = vadd.f32 %v32, %v152
  %v166 = vadd.f32 %v33, %v157
  %vm167 = vcmask 261120
  %168 = vst.msk [vmem:[#allocation2] sm:$0xff] %vm167, %v162
  %169 = vst.msk [vmem:[#allocation2 + $0x8] sm:$0xff] %vm167, %v163
  %170 = vst.msk [vmem:[#allocation2 + $0x10] sm:$0xff] %vm167, %v164
  %171 = vst.msk [vmem:[#allocation2 + $0x18] sm:$0xff] %vm167, %v165
  %vm172 = vcmask 254976
  %173 = vst.msk [vmem:[#allocation2 + $0x20] sm:$0x3] %vm172, %v166
  // Predicated region
  $region22: #{custom_clip_forward.42} parent=0 // pred_check
    %p174 = pneg %p18
  $region23: #{custom_clip_forward.42} parent=0 // pred_check_branch
    %176 = sbr.rel (%p174) target = $region25
  $region24: #{custom_clip_forward.42} parent=0 // pred_region
    %v177 = vld [vmem:[#allocation2] sm:$0xff]
    %v178 = vld [vmem:[#allocation2 + $0x8] sm:$0xff]
    %v179 = vld [vmem:[#allocation2 + $0x10] sm:$0xff]
    %v180 = vld [vmem:[#allocation2 + $0x18] sm:$0xff]
    %v181 = vld [vmem:[#allocation2 + $0x20] sm:$0x3]
    %v182 = vld [vmem:[%s2] sm:$0x1]
    %v184 = vlaneseq
    %v185 = vshrl.u32 %v184, 7
    %v186 = vsub.s32 0, %v185
    %v187 = vrot.slane %v182, %v186
    %v189 = vadd.f32 %v177, %v187
    %v190 = vadd.f32 %v178, %v187
    %v191 = vadd.f32 %v179, %v187
    %v192 = vadd.f32 %v180, %v187
    %v193 = vadd.f32 %v181, %v187
    %v194 = vld [vmem:[%s3] sm:$0xff]
    %v195 = vld [vmem:[%s3 + $0x8] sm:$0xff]
    %v196 = vld [vmem:[%s3 + $0x10] sm:$0xff]
    %v197 = vld [vmem:[%s3 + $0x18] sm:$0xff]
    %v198 = vld [vmem:[%s3 + $0x20] sm:$0x3]
    %v199 = vadd.f32 %v189, %v194
    %v200 = vadd.f32 %v190, %v195
    %v201 = vadd.f32 %v191, %v196
    %v202 = vadd.f32 %v192, %v197
    %v203 = vadd.f32 %v193, %v198
    %204 = vst.msk [vmem:[%s4] sm:$0xff] %vm167, %v199
    %205 = vst.msk [vmem:[%s4 + $0x8] sm:$0xff] %vm167, %v200
    %206 = vst.msk [vmem:[%s4 + $0x10] sm:$0xff] %vm167, %v201
    %207 = vst.msk [vmem:[%s4 + $0x18] sm:$0xff] %vm167, %v202
    %208 = vst.msk [vmem:[%s4 + $0x20] sm:$0x3] %vm172, %v203
  $region25: #{custom_clip_forward.42} parent=0 // pred_fallthru
    _
  // Predicated region
  $region26: #{custom_clip_forward.42} parent=0 // pred_check
    _
  $region27: #{custom_clip_forward.42} parent=0 // pred_check_branch
    %210 = sbr.rel (0) target = $region29
  $region28: #{custom_clip_forward.42} parent=0 // pred_region
    _
  $region29: #{custom_clip_forward.42} parent=0 // pred_fallthru
    _
  // Predicated region
  $region30: #{custom_clip_forward.42} parent=0 // pred_check
    _
  $region31: #{custom_clip_forward.42} parent=0 // pred_check_branch
    %212 = sbr.rel (0) target = $region33
  $region32: #{custom_clip_forward.42} parent=0 // pred_region
    _
  $region33: #{custom_clip_forward.42} parent=0 // pred_fallthru
    _

// kernel: custom_clip_forward.48
$region0: #{custom_clip_forward.48}
  #allocation0 [shape = 'u32[]', space=smem, size = 0x4, offset = 0x4, fixed_abs, tag = 'smem constant byte address 0x4 - core index']
  #allocation1 [shape = 'u32[144,128]{1,0:T(1,128)}', space=vmem, size = 0x12000, scoped, tag = 'internal scratch']
  %s0 = inlined_call_operand.vmem [shape: f32[2,32], index: 0, kind: input, shape index: {}]
  %s1 = inlined_call_operand.vmem [shape: f32[1,32], index: 1, kind: input, shape index: {}]
  %s2 = inlined_call_operand.vmem [shape: f32[1,32], index: 2, kind: input, shape index: {}]
  %s3 = inlined_call_operand.vmem [shape: bf16[32,32], index: 3, kind: input, shape index: {}]
  %s4 = inlined_call_operand.vmem [shape: f32[2,32], index: 4, kind: output, shape index: {}]
  %s5 = sld [smem:[#allocation0]]
  $region26: #{custom_clip_forward.48} parent=0
    _
  %s7 = ssub.s32 1, %s5
  %s8 = scalar_select 0, %s7, %s5
  // Predicated region
  $region2: #{custom_clip_forward.48} parent=0 // pred_check
    _
  $region3: #{custom_clip_forward.48} parent=0 // pred_check_branch
    %10 = sbr.rel (0) target = $region5
  $region4: #{custom_clip_forward.48} parent=0 // pred_region
    _
  $region5: #{custom_clip_forward.48} parent=0 // pred_fallthru
    _
  // Predicated region
  $region6: #{custom_clip_forward.48} parent=0 // pred_check
    _
  $region7: #{custom_clip_forward.48} parent=0 // pred_check_branch
    %12 = sbr.rel (0) target = $region9
  $region8: #{custom_clip_forward.48} parent=0 // pred_region
    _
  $region9: #{custom_clip_forward.48} parent=0 // pred_fallthru
    _
  // Predicated region
  $region10: #{custom_clip_forward.48} parent=0 // pred_check
    _
  $region11: #{custom_clip_forward.48} parent=0 // pred_check_branch
    %14 = sbr.rel (0) target = $region13
  $region12: #{custom_clip_forward.48} parent=0 // pred_region
    _
  $region13: #{custom_clip_forward.48} parent=0 // pred_fallthru
    _
  // Predicated region
  $region14: #{custom_clip_forward.48} parent=0 // pred_check
    _
  $region15: #{custom_clip_forward.48} parent=0 // pred_check_branch
    %16 = sbr.rel (0) target = $region17
  $region16: #{custom_clip_forward.48} parent=0 // pred_region
    _
  $region17: #{custom_clip_forward.48} parent=0 // pred_fallthru
    _
  %v18 = vld [vmem:[%s0] sm:$0x3]
  %vm19 = vcmask 254976
  %v20 = vsel %vm19, %v18, 0.0
  %21 = vadd.xlane.f32.xlu0 %v20
  %v22 = vpop.xlane.xlu0 %21
  %v23 = vrcp.pop 32.0
  %v24 = vmul.f32 %v22, %v23
  %v25 = vsub.f32 %v18, %v24
  %v26 = vmul.f32 %v25, %v25
  %v27 = vsel %vm19, %v26, 0.0
  %28 = vadd.xlane.f32.xlu0 %v27
  %v29 = vpop.xlane.xlu0 %28
  %v30 = vmul.f32 %v29, %v23
  %v31 = vadd.f32 %v30, 1e-05
  %v32 = vrsqrt.pop %v31
  %v33 = vmul.f32 %v25, %v32
  %v34 = vld [vmem:[%s1] sm:$0x1]
  %v36 = vlaneseq
  %v37 = vshrl.u32 %v36, 7
  %v38 = vsub.s32 0, %v37
  %v39 = vrot.slane %v34, %v38
  %v41 = vmul.f32 %v33, %v39
  %v42 = vld [vmem:[%s2] sm:$0x1]
  %v44 = vlaneseq
  %v45 = vshrl.u32 %v44, 7
  %v46 = vsub.s32 0, %v45
  %v47 = vrot.slane %v42, %v46
  %v49 = vadd.f32 %v41, %v47
  %v50 = vpack.c.bf16 %v49, %v49
  %v51 = vld [vmem:[%s3] sm:$0xf]
  %v52 = vld [vmem:[%s3 + $0x4] sm:$0xf]
  %v53 = vld [vmem:[%s3 + $0x8] sm:$0xf]
  %v54 = vld [vmem:[%s3 + $0xc] sm:$0xf]
  %v59 = vunpack.c.l.b16 %v51
  %v60 = vunpack.c.l.b16 %v52
  %v61 = vunpack.c.l.b16 %v53
  %v62 = vunpack.c.l.b16 %v54
  %v63 = vpack.c.b16 %v60, %v59
  %v64 = vpack.c.b16 %v62, %v61
  %vm67 = vcmask 261120
  %v69 = vsel %vm67, %v50, 0
  %71 = vmatprep.subr.bf16.mxu0 0
  %72 = vmatpush1.bf16.msra.mxu0 %v63
  %73 = vmatprep.subr.bf16.mxu0 0
  %74 = vmatpush1.bf16.msra.mxu0 %v64
  %75 = vmatprep.subr.bf16.mxu0 0
  %76 = vmatpush1.bf16.msra.mxu0 0
  %77 = vmatprep.subr.bf16.mxu0 0
  %78 = vmatpush1.bf16.msra.mxu0 0
  %79 = vmatprep.subr.bf16.mxu0 0
  %80 = vmatpush1.bf16.msra.mxu0 0
  %81 = vmatprep.subr.bf16.mxu0 0
  %82 = vmatpush1.bf16.msra.mxu0 0
  %83 = vmatprep.subr.bf16.mxu0 0
  %84 = vmatpush1.bf16.msra.mxu0 0
  %85 = vmatprep.subr.bf16.mxu0 0
  %86 = vmatpush1.bf16.msra.mxu0 0
  %87 = vmatprep.subr.bf16.mxu0 0
  %88 = vmatpush1.bf16.msra.mxu0 0
  %89 = vmatprep.subr.bf16.mxu0 0
  %90 = vmatpush1.bf16.msra.mxu0 0
  %91 = vmatprep.subr.bf16.mxu0 0
  %92 = vmatpush1.bf16.msra.mxu0 0
  %93 = vmatprep.subr.bf16.mxu0 0
  %94 = vmatpush1.bf16.msra.mxu0 0
  %95 = vmatprep.subr.bf16.mxu0 0
  %96 = vmatpush1.bf16.msra.mxu0 0
  %97 = vmatprep.subr.bf16.mxu0 0
  %98 = vmatpush1.bf16.msra.mxu0 0
  %99 = vmatprep.subr.bf16.mxu0 0
  %100 = vmatpush1.bf16.msra.mxu0 0
  %101 = vmatprep.subr.bf16.mxu0 0
  %102 = vmatpush1.bf16.msra.mxu0 0
  %103 = vmatprep.mubr.bf16.mxu0 0
  %104 = vmatmul.mubr.bf16.gmra.mrb[0].mxu0 %v69
  %v105 = vpop.f32.mrb[0].mxu0
  %v106 = vadd.f32 0.0, %v105
  %v107 = vpop.f32.mrb[0].mxu0
  %v108 = vpop.f32.mrb[0].mxu0
  %v109 = vpop.f32.mrb[0].mxu0
  %110 = vdwg.mxu0
  %111 = vst.msk [vmem:[%s4] sm:$0x3] %vm19, %v106
  // Predicated region
  $region18: #{custom_clip_forward.48} parent=0 // pred_check
    _
  $region19: #{custom_clip_forward.48} parent=0 // pred_check_branch
    %113 = sbr.rel (0) target = $region21
  $region20: #{custom_clip_forward.48} parent=0 // pred_region
    _
  $region21: #{custom_clip_forward.48} parent=0 // pred_fallthru
    _
  // Predicated region
  $region22: #{custom_clip_forward.48} parent=0 // pred_check
    _
  $region23: #{custom_clip_forward.48} parent=0 // pred_check_branch
    %115 = sbr.rel (0) target = $region25
  $region24: #{custom_clip_forward.48} parent=0 // pred_region
    _
  $region25: #{custom_clip_forward.48} parent=0 // pred_fallthru
    _

// kernel: custom_clip_forward.25
$region0: #{custom_clip_forward.25}
  #allocation0 [shape = 'u32[]', space=smem, size = 0x4, offset = 0x4, fixed_abs, tag = 'smem constant byte address 0x4 - core index']
  #allocation1 [shape = 'u32[144,128]{1,0:T(1,128)}', space=vmem, size = 0x12000, scoped, tag = 'internal scratch']
  %s0 = inlined_call_operand.vmem [shape: f32[24,32], index: 0, kind: input, shape index: {}]
  %s1 = inlined_call_operand.vmem [shape: f32[1,32], index: 1, kind: input, shape index: {}]
  %s2 = inlined_call_operand.vmem [shape: f32[1,32], index: 2, kind: input, shape index: {}]
  %s3 = inlined_call_operand.vmem [shape: bf16[32,96], index: 3, kind: input, shape index: {}]
  %s4 = inlined_call_operand.vmem [shape: f32[1,96], index: 4, kind: input, shape index: {}]
  %s5 = inlined_call_operand.vmem [shape: f32[24,96], index: 5, kind: output, shape index: {}]
  %s6 = sld [smem:[#allocation0]]
  $region30: #{custom_clip_forward.25} parent=0
    _
  %s8 = ssub.s32 1, %s6
  %s9 = scalar_select 0, %s8, %s6
  // Predicated region
  $region2: #{custom_clip_forward.25} parent=0 // pred_check
    _
  $region3: #{custom_clip_forward.25} parent=0 // pred_check_branch
    %11 = sbr.rel (0) target = $region5
  $region4: #{custom_clip_forward.25} parent=0 // pred_region
    _
  $region5: #{custom_clip_forward.25} parent=0 // pred_fallthru
    _
  // Predicated region
  $region6: #{custom_clip_forward.25} parent=0 // pred_check
    _
  $region7: #{custom_clip_forward.25} parent=0 // pred_check_branch
    %13 = sbr.rel (0) target = $region9
  $region8: #{custom_clip_forward.25} parent=0 // pred_region
    _
  $region9: #{custom_clip_forward.25} parent=0 // pred_fallthru
    _
  // Predicated region
  $region10: #{custom_clip_forward.25} parent=0 // pred_check
    _
  $region11: #{custom_clip_forward.25} parent=0 // pred_check_branch
    %15 = sbr.rel (0) target = $region13
  $region12: #{custom_clip_forward.25} parent=0 // pred_region
    _
  $region13: #{custom_clip_forward.25} parent=0 // pred_fallthru
    _
  // Predicated region
  $region14: #{custom_clip_forward.25} parent=0 // pred_check
    _
  $region15: #{custom_clip_forward.25} parent=0 // pred_check_branch
    %17 = sbr.rel (0) target = $region17
  $region16: #{custom_clip_forward.25} parent=0 // pred_region
    _
  $region17: #{custom_clip_forward.25} parent=0 // pred_fallthru
    _
  // Predicated region
  $region18: #{custom_clip_forward.25} parent=0 // pred_check
    _
  $region19: #{custom_clip_forward.25} parent=0 // pred_check_branch
    %19 = sbr.rel (0) target = $region21
  $region20: #{custom_clip_forward.25} parent=0 // pred_region
    _
  $region21: #{custom_clip_forward.25} parent=0 // pred_fallthru
    _
  %v21 = vld [vmem:[%s0] sm:$0xff]
  %v22 = vld [vmem:[%s0 + $0x8] sm:$0xff]
  %v23 = vld [vmem:[%s0 + $0x10] sm:$0xff]
  %vm24 = vcmask 261120
  %v25 = vsel %vm24, %v21, 0.0
  %26 = vadd.xlane.f32.xlu0 %v25
  %v27 = vpop.xlane.xlu0 %26
  %v28 = vsel %vm24, %v22, 0.0
  %29 = vadd.xlane.f32.xlu0 %v28
  %v30 = vpop.xlane.xlu0 %29
  %v31 = vsel %vm24, %v23, 0.0
  %32 = vadd.xlane.f32.xlu0 %v31
  %v33 = vpop.xlane.xlu0 %32
  %v34 = vrcp.pop 32.0
  %v35 = vmul.f32 %v27, %v34
  %v36 = vmul.f32 %v30, %v34
  %v37 = vmul.f32 %v33, %v34
  %v38 = vsub.f32 %v21, %v35
  %v39 = vsub.f32 %v22, %v36
  %v40 = vsub.f32 %v23, %v37
  %v41 = vmul.f32 %v38, %v38
  %v42 = vmul.f32 %v39, %v39
  %v43 = vmul.f32 %v40, %v40
  %v44 = vsel %vm24, %v41, 0.0
  %45 = vadd.xlane.f32.xlu0 %v44
  %v46 = vpop.xlane.xlu0 %45
  %v47 = vsel %vm24, %v42, 0.0
  %48 = vadd.xlane.f32.xlu0 %v47
  %v49 = vpop.xlane.xlu0 %48
  %v50 = vsel %vm24, %v43, 0.0
  %51 = vadd.xlane.f32.xlu0 %v50
  %v52 = vpop.xlane.xlu0 %51
  %v53 = vmul.f32 %v46, %v34
  %v54 = vmul.f32 %v49, %v34
  %v55 = vmul.f32 %v52, %v34
  %v56 = vadd.f32 %v53, 1e-05
  %v57 = vadd.f32 %v54, 1e-05
  %v58 = vadd.f32 %v55, 1e-05
  %v59 = vrsqrt.pop %v56
  %v60 = vrsqrt.pop %v57
  %v61 = vrsqrt.pop %v58
  %v62 = vmul.f32 %v38, %v59
  %v63 = vmul.f32 %v39, %v60
  %v64 = vmul.f32 %v40, %v61
  %v65 = vld [vmem:[%s1] sm:$0x1]
  %v67 = vlaneseq
  %v68 = vshrl.u32 %v67, 7
  %v69 = vsub.s32 0, %v68
  %v70 = vrot.slane %v65, %v69
  %v72 = vmul.f32 %v62, %v70
  %v73 = vmul.f32 %v63, %v70
  %v74 = vmul.f32 %v64, %v70
  %v75 = vld [vmem:[%s2] sm:$0x1]
  %v77 = vlaneseq
  %v78 = vshrl.u32 %v77, 7
  %v79 = vsub.s32 0, %v78
  %v80 = vrot.slane %v75, %v79
  %v82 = vadd.f32 %v72, %v80
  %v83 = vadd.f32 %v73, %v80
  %v84 = vadd.f32 %v74, %v80
  %v85 = vpack.c.bf16 %v83, %v82
  %v86 = vpack.c.bf16 %v84, %v84
  %v87 = vld [vmem:[%s3] sm:$0xf]
  %v88 = vld [vmem:[%s3 + $0x4] sm:$0xf]
  %v89 = vld [vmem:[%s3 + $0x8] sm:$0xf]
  %v90 = vld [vmem:[%s3 + $0xc] sm:$0xf]
  %v91 = vld [vmem:[%s4] sm:$0x1]
  %v93 = vlaneseq
  %v94 = vshrl.u32 %v93, 7
  %v95 = vsub.s32 0, %v94
  %v96 = vrot.slane %v91, %v95
  %v102 = vunpack.c.l.b16 %v87
  %v103 = vunpack.c.l.b16 %v88
  %v104 = vunpack.c.l.b16 %v89
  %v105 = vunpack.c.l.b16 %v90
  %v106 = vpack.c.b16 %v103, %v102
  %v107 = vpack.c.b16 %v105, %v104
  %v111 = vsel %vm24, %v85, 0
  %v114 = vsel %vm24, %v86, 0
  %116 = vmatprep.subr.bf16.mxu0 0
  %117 = vmatpush1.bf16.msra.mxu0 %v106
  %118 = vmatprep.subr.bf16.mxu0 0
  %119 = vmatpush1.bf16.msra.mxu0 %v107
  %120 = vmatprep.subr.bf16.mxu0 0
  %121 = vmatpush1.bf16.msra.mxu0 0
  %122 = vmatprep.subr.bf16.mxu0 0
  %123 = vmatpush1.bf16.msra.mxu0 0
  %124 = vmatprep.subr.bf16.mxu0 0
  %125 = vmatpush1.bf16.msra.mxu0 0
  %126 = vmatprep.subr.bf16.mxu0 0
  %127 = vmatpush1.bf16.msra.mxu0 0
  %128 = vmatprep.subr.bf16.mxu0 0
  %129 = vmatpush1.bf16.msra.mxu0 0
  %130 = vmatprep.subr.bf16.mxu0 0
  %131 = vmatpush1.bf16.msra.mxu0 0
  %132 = vmatprep.subr.bf16.mxu0 0
  %133 = vmatpush1.bf16.msra.mxu0 0
  %134 = vmatprep.subr.bf16.mxu0 0
  %135 = vmatpush1.bf16.msra.mxu0 0
  %136 = vmatprep.subr.bf16.mxu0 0
  %137 = vmatpush1.bf16.msra.mxu0 0
  %138 = vmatprep.subr.bf16.mxu0 0
  %139 = vmatpush1.bf16.msra.mxu0 0
  %140 = vmatprep.subr.bf16.mxu0 0
  %141 = vmatpush1.bf16.msra.mxu0 0
  %142 = vmatprep.subr.bf16.mxu0 0
  %143 = vmatpush1.bf16.msra.mxu0 0
  %144 = vmatprep.subr.bf16.mxu0 0
  %145 = vmatpush1.bf16.msra.mxu0 0
  %146 = vmatprep.subr.bf16.mxu0 0
  %147 = vmatpush1.bf16.msra.mxu0 0
  %148 = vmatprep.mubr.bf16.mxu0 0
  %149 = vmatmul.mubr.bf16.gmra.mrb[0].mxu0 %v111
  %v150 = vpop.f32.mrb[0].mxu0
  %v151 = vadd.f32 %v96, %v150
  %v152 = vpop.f32.mrb[0].mxu0
  %v153 = vpop.f32.mrb[0].mxu0
  %v154 = vadd.f32 %v96, %v153
  %v155 = vpop.f32.mrb[0].mxu0
  %156 = vmatprep.mubr.bf16.mxu0 0
  %157 = vmatmul.mubr.bf16.gmra.mrb[0].mxu0 %v114
  %v158 = vpop.f32.mrb[0].mxu0
  %v159 = vadd.f32 %v96, %v158
  %v160 = vpop.f32.mrb[0].mxu0
  %v161 = vpop.f32.mrb[0].mxu0
  %v162 = vpop.f32.mrb[0].mxu0
  %163 = vdwg.mxu0
  %vm164 = vcmask 785408
  %165 = vst.msk [vmem:[%s5] sm:$0xff] %vm164, %v151
  %166 = vst.msk [vmem:[%s5 + $0x8] sm:$0xff] %vm164, %v154
  %167 = vst.msk [vmem:[%s5 + $0x10] sm:$0xff] %vm164, %v159
  // Predicated region
  $region22: #{custom_clip_forward.25} parent=0 // pred_check
    _
  $region23: #{custom_clip_forward.25} parent=0 // pred_check_branch
    %169 = sbr.rel (0) target = $region25
  $region24: #{custom_clip_forward.25} parent=0 // pred_region
    _
  $region25: #{custom_clip_forward.25} parent=0 // pred_fallthru
    _
  // Predicated region
  $region26: #{custom_clip_forward.25} parent=0 // pred_check
    _
  $region27: #{custom_clip_forward.25} parent=0 // pred_check_branch
    %171 = sbr.rel (0) target = $region29
  $region28: #{custom_clip_forward.25} parent=0 // pred_region
    _
  $region29: #{custom_clip_forward.25} parent=0 // pred_fallthru
    _

// kernel: custom_clip_forward.27
$region0: #{custom_clip_forward.27}
  #allocation0 [shape = 'u32[]', space=smem, size = 0x4, offset = 0x4, fixed_abs, tag = 'smem constant byte address 0x4 - core index']
  #allocation1 [shape = 'u32[144,128]{1,0:T(1,128)}', space=vmem, size = 0x12000, scoped, tag = 'internal scratch']
  #allocation2 [shape = 'f32[24,32]{1,0:T(8,128)}', space=vmem, size = 0x3000, scoped, tag = 'scratch operand']
  %s0 = inlined_call_operand.vmem [shape: f32[24,32], index: 0, kind: input, shape index: {}]
  %s1 = inlined_call_operand.vmem [shape: bf16[32,32], index: 1, kind: input, shape index: {}]
  %s2 = inlined_call_operand.vmem [shape: f32[1,32], index: 2, kind: input, shape index: {}]
  %s3 = inlined_call_operand.vmem [shape: f32[24,32], index: 3, kind: input, shape index: {}]
  %s4 = inlined_call_operand.vmem [shape: f32[24,32], index: 4, kind: output, shape index: {}]
  %s5 = sld [smem:[#allocation0]]
  $region34: #{custom_clip_forward.27} parent=0
    _
  %s7 = ssub.s32 1, %s5
  %s8 = scalar_select 0, %s7, %s5
  // Predicated region
  $region2: #{custom_clip_forward.27} parent=0 // pred_check
    _
  $region3: #{custom_clip_forward.27} parent=0 // pred_check_branch
    %10 = sbr.rel (0) target = $region5
  $region4: #{custom_clip_forward.27} parent=0 // pred_region
    _
  $region5: #{custom_clip_forward.27} parent=0 // pred_fallthru
    _
  // Predicated region
  $region6: #{custom_clip_forward.27} parent=0 // pred_check
    _
  $region7: #{custom_clip_forward.27} parent=0 // pred_check_branch
    %12 = sbr.rel (0) target = $region9
  $region8: #{custom_clip_forward.27} parent=0 // pred_region
    _
  $region9: #{custom_clip_forward.27} parent=0 // pred_fallthru
    _
  // Predicated region
  $region10: #{custom_clip_forward.27} parent=0 // pred_check
    _
  $region11: #{custom_clip_forward.27} parent=0 // pred_check_branch
    %14 = sbr.rel (0) target = $region13
  $region12: #{custom_clip_forward.27} parent=0 // pred_region
    _
  $region13: #{custom_clip_forward.27} parent=0 // pred_fallthru
    _
  // Predicated region
  $region14: #{custom_clip_forward.27} parent=0 // pred_check
    _
  $region15: #{custom_clip_forward.27} parent=0 // pred_check_branch
    %16 = sbr.rel (0) target = $region17
  $region16: #{custom_clip_forward.27} parent=0 // pred_region
    _
  $region17: #{custom_clip_forward.27} parent=0 // pred_fallthru
    _
  %p18 = scmp.eq.s32.totalorder 0, 0
  // Predicated region
  $region18: #{custom_clip_forward.27} parent=0 // pred_check
    %p19 = pneg %p18
  $region19: #{custom_clip_forward.27} parent=0 // pred_check_branch
    %21 = sbr.rel (%p19) target = $region21
  $region20: #{custom_clip_forward.27} parent=0 // pred_region
    %vm22 = vcmask 261120
    %23 = vst.msk [vmem:[#allocation2] sm:$0xff] %vm22, 0.0
    %24 = vst.msk [vmem:[#allocation2 + $0x8] sm:$0xff] %vm22, 0.0
    %25 = vst.msk [vmem:[#allocation2 + $0x10] sm:$0xff] %vm22, 0.0
  $region21: #{custom_clip_forward.27} parent=0 // pred_fallthru
    _
  %v26 = vld [vmem:[#allocation2] sm:$0xff]
  %v27 = vld [vmem:[#allocation2 + $0x8] sm:$0xff]
  %v28 = vld [vmem:[#allocation2 + $0x10] sm:$0xff]
  %v29 = vld [vmem:[%s0] sm:$0xff]
  %v30 = vld [vmem:[%s0 + $0x8] sm:$0xff]
  %v31 = vld [vmem:[%s0 + $0x10] sm:$0xff]
  %v32 = vpack.c.bf16 %v30, %v29
  %v33 = vpack.c.bf16 %v31, %v31
  %v34 = vld [vmem:[%s1] sm:$0xf]
  %v35 = vld [vmem:[%s1 + $0x4] sm:$0xf]
  %v36 = vld [vmem:[%s1 + $0x8] sm:$0xf]
  %v37 = vld [vmem:[%s1 + $0xc] sm:$0xf]
  %v42 = vunpack.c.l.b16 %v34
  %v43 = vunpack.c.l.b16 %v35
  %v44 = vunpack.c.l.b16 %v36
  %v45 = vunpack.c.l.b16 %v37
  %v46 = vpack.c.b16 %v43, %v42
  %v47 = vpack.c.b16 %v45, %v44
  %vm50 = vcmask 261120
  %v52 = vsel %vm50, %v32, 0
  %v55 = vsel %vm50, %v33, 0
  %57 = vmatprep.subr.bf16.mxu0 0
  %58 = vmatpush1.bf16.msra.mxu0 %v46
  %59 = vmatprep.subr.bf16.mxu0 0
  %60 = vmatpush1.bf16.msra.mxu0 %v47
  %61 = vmatprep.subr.bf16.mxu0 0
  %62 = vmatpush1.bf16.msra.mxu0 0
  %63 = vmatprep.subr.bf16.mxu0 0
  %64 = vmatpush1.bf16.msra.mxu0 0
  %65 = vmatprep.subr.bf16.mxu0 0
  %66 = vmatpush1.bf16.msra.mxu0 0
  %67 = vmatprep.subr.bf16.mxu0 0
  %68 = vmatpush1.bf16.msra.mxu0 0
  %69 = vmatprep.subr.bf16.mxu0 0
  %70 = vmatpush1.bf16.msra.mxu0 0
  %71 = vmatprep.subr.bf16.mxu0 0
  %72 = vmatpush1.bf16.msra.mxu0 0
  %73 = vmatprep.subr.bf16.mxu0 0
  %74 = vmatpush1.bf16.msra.mxu0 0
  %75 = vmatprep.subr.bf16.mxu0 0
  %76 = vmatpush1.bf16.msra.mxu0 0
  %77 = vmatprep.subr.bf16.mxu0 0
  %78 = vmatpush1.bf16.msra.mxu0 0
  %79 = vmatprep.subr.bf16.mxu0 0
  %80 = vmatpush1.bf16.msra.mxu0 0
  %81 = vmatprep.subr.bf16.mxu0 0
  %82 = vmatpush1.bf16.msra.mxu0 0
  %83 = vmatprep.subr.bf16.mxu0 0
  %84 = vmatpush1.bf16.msra.mxu0 0
  %85 = vmatprep.subr.bf16.mxu0 0
  %86 = vmatpush1.bf16.msra.mxu0 0
  %87 = vmatprep.subr.bf16.mxu0 0
  %88 = vmatpush1.bf16.msra.mxu0 0
  %89 = vmatprep.mubr.bf16.mxu0 0
  %90 = vmatmul.mubr.bf16.gmra.mrb[0].mxu0 %v52
  %v91 = vpop.f32.mrb[0].mxu0
  %v92 = vadd.f32 0.0, %v91
  %v93 = vpop.f32.mrb[0].mxu0
  %v94 = vpop.f32.mrb[0].mxu0
  %v95 = vadd.f32 0.0, %v94
  %v96 = vpop.f32.mrb[0].mxu0
  %97 = vmatprep.mubr.bf16.mxu0 0
  %98 = vmatmul.mubr.bf16.gmra.mrb[0].mxu0 %v55
  %v99 = vpop.f32.mrb[0].mxu0
  %v100 = vadd.f32 0.0, %v99
  %v101 = vpop.f32.mrb[0].mxu0
  %v102 = vpop.f32.mrb[0].mxu0
  %v103 = vpop.f32.mrb[0].mxu0
  %104 = vdwg.mxu0
  %v105 = vadd.f32 %v26, %v92
  %v106 = vadd.f32 %v27, %v95
  %v107 = vadd.f32 %v28, %v100
  %108 = vst.msk [vmem:[#allocation2] sm:$0xff] %vm50, %v105
  %109 = vst.msk [vmem:[#allocation2 + $0x8] sm:$0xff] %vm50, %v106
  %110 = vst.msk [vmem:[#allocation2 + $0x10] sm:$0xff] %vm50, %v107
  // Predicated region
  $region22: #{custom_clip_forward.27} parent=0 // pred_check
    %p111 = pneg %p18
  $region23: #{custom_clip_forward.27} parent=0 // pred_check_branch
    %113 = sbr.rel (%p111) target = $region25
  $region24: #{custom_clip_forward.27} parent=0 // pred_region
    %v114 = vld [vmem:[#allocation2] sm:$0xff]
    %v115 = vld [vmem:[#allocation2 + $0x8] sm:$0xff]
    %v116 = vld [vmem:[#allocation2 + $0x10] sm:$0xff]
    %v117 = vld [vmem:[%s2] sm:$0x1]
    %v119 = vlaneseq
    %v120 = vshrl.u32 %v119, 7
    %v121 = vsub.s32 0, %v120
    %v122 = vrot.slane %v117, %v121
    %v124 = vadd.f32 %v114, %v122
    %v125 = vadd.f32 %v115, %v122
    %v126 = vadd.f32 %v116, %v122
    %v127 = vld [vmem:[%s3] sm:$0xff]
    %v128 = vld [vmem:[%s3 + $0x8] sm:$0xff]
    %v129 = vld [vmem:[%s3 + $0x10] sm:$0xff]
    %v130 = vadd.f32 %v124, %v127
    %v131 = vadd.f32 %v125, %v128
    %v132 = vadd.f32 %v126, %v129
    %133 = vst.msk [vmem:[%s4] sm:$0xff] %vm50, %v130
    %134 = vst.msk [vmem:[%s4 + $0x8] sm:$0xff] %vm50, %v131
    %135 = vst.msk [vmem:[%s4 + $0x10] sm:$0xff] %vm50, %v132
  $region25: #{custom_clip_forward.27} parent=0 // pred_fallthru
    _
  // Predicated region
  $region26: #{custom_clip_forward.27} parent=0 // pred_check
    _
  $region27: #{custom_clip_forward.27} parent=0 // pred_check_branch
    %137 = sbr.rel (0) target = $region29
  $region28: #{custom_clip_forward.27} parent=0 // pred_region
    _
  $region29: #{custom_clip_forward.27} parent=0 // pred_fallthru
    _
  // Predicated region
  $region30: #{custom_clip_forward.27} parent=0 // pred_check
    _
  $region31: #{custom_clip_forward.27} parent=0 // pred_check_branch
    %139 = sbr.rel (0) target = $region33
  $region32: #{custom_clip_forward.27} parent=0 // pred_region
    _
  $region33: #{custom_clip_forward.27} parent=0 // pred_fallthru
    _

// kernel: custom_clip_forward.28
$region0: #{custom_clip_forward.28}
  #allocation0 [shape = 'u32[]', space=smem, size = 0x4, offset = 0x4, fixed_abs, tag = 'smem constant byte address 0x4 - core index']
  #allocation1 [shape = 'u32[144,128]{1,0:T(1,128)}', space=vmem, size = 0x12000, scoped, tag = 'internal scratch']
  %s0 = inlined_call_operand.vmem [shape: f32[24,32], index: 0, kind: input, shape index: {}]
  %s1 = inlined_call_operand.vmem [shape: f32[1,32], index: 1, kind: input, shape index: {}]
  %s2 = inlined_call_operand.vmem [shape: f32[1,32], index: 2, kind: input, shape index: {}]
  %s3 = inlined_call_operand.vmem [shape: bf16[32,128], index: 3, kind: input, shape index: {}]
  %s4 = inlined_call_operand.vmem [shape: f32[1,128], index: 4, kind: input, shape index: {}]
  %s5 = inlined_call_operand.vmem [shape: f32[24,128], index: 5, kind: output, shape index: {}]
  %s6 = sld [smem:[#allocation0]]
  $region30: #{custom_clip_forward.28} parent=0
    _
  %s8 = ssub.s32 1, %s6
  %s9 = scalar_select 0, %s8, %s6
  // Predicated region
  $region2: #{custom_clip_forward.28} parent=0 // pred_check
    _
  $region3: #{custom_clip_forward.28} parent=0 // pred_check_branch
    %11 = sbr.rel (0) target = $region5
  $region4: #{custom_clip_forward.28} parent=0 // pred_region
    _
  $region5: #{custom_clip_forward.28} parent=0 // pred_fallthru
    _
  // Predicated region
  $region6: #{custom_clip_forward.28} parent=0 // pred_check
    _
  $region7: #{custom_clip_forward.28} parent=0 // pred_check_branch
    %13 = sbr.rel (0) target = $region9
  $region8: #{custom_clip_forward.28} parent=0 // pred_region
    _
  $region9: #{custom_clip_forward.28} parent=0 // pred_fallthru
    _
  // Predicated region
  $region10: #{custom_clip_forward.28} parent=0 // pred_check
    _
  $region11: #{custom_clip_forward.28} parent=0 // pred_check_branch
    %15 = sbr.rel (0) target = $region13
  $region12: #{custom_clip_forward.28} parent=0 // pred_region
    _
  $region13: #{custom_clip_forward.28} parent=0 // pred_fallthru
    _
  // Predicated region
  $region14: #{custom_clip_forward.28} parent=0 // pred_check
    _
  $region15: #{custom_clip_forward.28} parent=0 // pred_check_branch
    %17 = sbr.rel (0) target = $region17
  $region16: #{custom_clip_forward.28} parent=0 // pred_region
    _
  $region17: #{custom_clip_forward.28} parent=0 // pred_fallthru
    _
  // Predicated region
  $region18: #{custom_clip_forward.28} parent=0 // pred_check
    _
  $region19: #{custom_clip_forward.28} parent=0 // pred_check_branch
    %19 = sbr.rel (0) target = $region21
  $region20: #{custom_clip_forward.28} parent=0 // pred_region
    _
  $region21: #{custom_clip_forward.28} parent=0 // pred_fallthru
    _
  %v21 = vld [vmem:[%s0] sm:$0xff]
  %v22 = vld [vmem:[%s0 + $0x8] sm:$0xff]
  %v23 = vld [vmem:[%s0 + $0x10] sm:$0xff]
  %vm24 = vcmask 261120
  %v25 = vsel %vm24, %v21, 0.0
  %26 = vadd.xlane.f32.xlu0 %v25
  %v27 = vpop.xlane.xlu0 %26
  %v28 = vsel %vm24, %v22, 0.0
  %29 = vadd.xlane.f32.xlu0 %v28
  %v30 = vpop.xlane.xlu0 %29
  %v31 = vsel %vm24, %v23, 0.0
  %32 = vadd.xlane.f32.xlu0 %v31
  %v33 = vpop.xlane.xlu0 %32
  %v34 = vrcp.pop 32.0
  %v35 = vmul.f32 %v27, %v34
  %v36 = vmul.f32 %v30, %v34
  %v37 = vmul.f32 %v33, %v34
  %v38 = vsub.f32 %v21, %v35
  %v39 = vsub.f32 %v22, %v36
  %v40 = vsub.f32 %v23, %v37
  %v41 = vmul.f32 %v38, %v38
  %v42 = vmul.f32 %v39, %v39
  %v43 = vmul.f32 %v40, %v40
  %v44 = vsel %vm24, %v41, 0.0
  %45 = vadd.xlane.f32.xlu0 %v44
  %v46 = vpop.xlane.xlu0 %45
  %v47 = vsel %vm24, %v42, 0.0
  %48 = vadd.xlane.f32.xlu0 %v47
  %v49 = vpop.xlane.xlu0 %48
  %v50 = vsel %vm24, %v43, 0.0
  %51 = vadd.xlane.f32.xlu0 %v50
  %v52 = vpop.xlane.xlu0 %51
  %v53 = vmul.f32 %v46, %v34
  %v54 = vmul.f32 %v49, %v34
  %v55 = vmul.f32 %v52, %v34
  %v56 = vadd.f32 %v53, 1e-05
  %v57 = vadd.f32 %v54, 1e-05
  %v58 = vadd.f32 %v55, 1e-05
  %v59 = vrsqrt.pop %v56
  %v60 = vrsqrt.pop %v57
  %v61 = vrsqrt.pop %v58
  %v62 = vmul.f32 %v38, %v59
  %v63 = vmul.f32 %v39, %v60
  %v64 = vmul.f32 %v40, %v61
  %v65 = vld [vmem:[%s1] sm:$0x1]
  %v67 = vlaneseq
  %v68 = vshrl.u32 %v67, 7
  %v69 = vsub.s32 0, %v68
  %v70 = vrot.slane %v65, %v69
  %v72 = vmul.f32 %v62, %v70
  %v73 = vmul.f32 %v63, %v70
  %v74 = vmul.f32 %v64, %v70
  %v75 = vld [vmem:[%s2] sm:$0x1]
  %v77 = vlaneseq
  %v78 = vshrl.u32 %v77, 7
  %v79 = vsub.s32 0, %v78
  %v80 = vrot.slane %v75, %v79
  %v82 = vadd.f32 %v72, %v80
  %v83 = vadd.f32 %v73, %v80
  %v84 = vadd.f32 %v74, %v80
  %v85 = vpack.c.bf16 %v83, %v82
  %v86 = vpack.c.bf16 %v84, %v84
  %v87 = vld [vmem:[%s3] sm:$0xf]
  %v88 = vld [vmem:[%s3 + $0x4] sm:$0xf]
  %v89 = vld [vmem:[%s3 + $0x8] sm:$0xf]
  %v90 = vld [vmem:[%s3 + $0xc] sm:$0xf]
  %v91 = vld [vmem:[%s4] sm:$0x1]
  %v93 = vlaneseq
  %v94 = vshrl.u32 %v93, 7
  %v95 = vsub.s32 0, %v94
  %v96 = vrot.slane %v91, %v95
  %v102 = vunpack.c.l.b16 %v87
  %v103 = vunpack.c.l.b16 %v88
  %v104 = vunpack.c.l.b16 %v89
  %v105 = vunpack.c.l.b16 %v90
  %v106 = vpack.c.b16 %v103, %v102
  %v107 = vpack.c.b16 %v105, %v104
  %v111 = vsel %vm24, %v85, 0
  %v114 = vsel %vm24, %v86, 0
  %116 = vmatprep.subr.bf16.mxu0 0
  %117 = vmatpush1.bf16.msra.mxu0 %v106
  %118 = vmatprep.subr.bf16.mxu0 0
  %119 = vmatpush1.bf16.msra.mxu0 %v107
  %120 = vmatprep.subr.bf16.mxu0 0
  %121 = vmatpush1.bf16.msra.mxu0 0
  %122 = vmatprep.subr.bf16.mxu0 0
  %123 = vmatpush1.bf16.msra.mxu0 0
  %124 = vmatprep.subr.bf16.mxu0 0
  %125 = vmatpush1.bf16.msra.mxu0 0
  %126 = vmatprep.subr.bf16.mxu0 0
  %127 = vmatpush1.bf16.msra.mxu0 0
  %128 = vmatprep.subr.bf16.mxu0 0
  %129 = vmatpush1.bf16.msra.mxu0 0
  %130 = vmatprep.subr.bf16.mxu0 0
  %131 = vmatpush1.bf16.msra.mxu0 0
  %132 = vmatprep.subr.bf16.mxu0 0
  %133 = vmatpush1.bf16.msra.mxu0 0
  %134 = vmatprep.subr.bf16.mxu0 0
  %135 = vmatpush1.bf16.msra.mxu0 0
  %136 = vmatprep.subr.bf16.mxu0 0
  %137 = vmatpush1.bf16.msra.mxu0 0
  %138 = vmatprep.subr.bf16.mxu0 0
  %139 = vmatpush1.bf16.msra.mxu0 0
  %140 = vmatprep.subr.bf16.mxu0 0
  %141 = vmatpush1.bf16.msra.mxu0 0
  %142 = vmatprep.subr.bf16.mxu0 0
  %143 = vmatpush1.bf16.msra.mxu0 0
  %144 = vmatprep.subr.bf16.mxu0 0
  %145 = vmatpush1.bf16.msra.mxu0 0
  %146 = vmatprep.subr.bf16.mxu0 0
  %147 = vmatpush1.bf16.msra.mxu0 0
  %148 = vmatprep.mubr.bf16.mxu0 0
  %149 = vmatmul.mubr.bf16.gmra.mrb[0].mxu0 %v111
  %v150 = vpop.f32.mrb[0].mxu0
  %v151 = vadd.f32 %v96, %v150
  %v152 = vpop.f32.mrb[0].mxu0
  %v153 = vpop.f32.mrb[0].mxu0
  %v154 = vadd.f32 %v96, %v153
  %v155 = vpop.f32.mrb[0].mxu0
  %156 = vmatprep.mubr.bf16.mxu0 0
  %157 = vmatmul.mubr.bf16.gmra.mrb[0].mxu0 %v114
  %v158 = vpop.f32.mrb[0].mxu0
  %v159 = vadd.f32 %v96, %v158
  %v160 = vpop.f32.mrb[0].mxu0
  %v161 = vpop.f32.mrb[0].mxu0
  %v162 = vpop.f32.mrb[0].mxu0
  %163 = vdwg.mxu0
  %v164 = vmul.f32 %v151, 1.702
  %v165 = vmul.f32 %v154, 1.702
  %v166 = vmul.f32 %v159, 1.702
  %v167 = vxor.u32 %v164, 2147483648
  %v168 = vxor.u32 %v165, 2147483648
  %v169 = vxor.u32 %v166, 2147483648
  %v170 = vmul.f32 %v167, 1.442695
  %v171 = vpow.pop %v170
  %v172 = vmul.f32 %v168, 1.442695
  %v173 = vpow.pop %v172
  %v174 = vmul.f32 %v169, 1.442695
  %v175 = vpow.pop %v174
  %v176 = vadd.f32 %v171, 1.0
  %v177 = vadd.f32 %v173, 1.0
  %v178 = vadd.f32 %v175, 1.0
  %v179 = vrcp.pop %v176
  %v180 = vmul.f32 1.0, %v179
  %v181 = vrcp.pop %v177
  %v182 = vmul.f32 1.0, %v181
  %v183 = vrcp.pop %v178
  %v184 = vmul.f32 1.0, %v183
  %v185 = vmul.f32 %v151, %v180
  %v186 = vmul.f32 %v154, %v182
  %v187 = vmul.f32 %v159, %v184
  %188 = vst [vmem:[%s5] sm:$0xff] %v185
  %189 = vst [vmem:[%s5 + $0x8] sm:$0xff] %v186
  %190 = vst [vmem:[%s5 + $0x10] sm:$0xff] %v187
  // Predicated region
  $region22: #{custom_clip_forward.28} parent=0 // pred_check
    _
  $region23: #{custom_clip_forward.28} parent=0 // pred_check_branch
    %192 = sbr.rel (0) target = $region25
  $region24: #{custom_clip_forward.28} parent=0 // pred_region
    _
  $region25: #{custom_clip_forward.28} parent=0 // pred_fallthru
    _
  // Predicated region
  $region26: #{custom_clip_forward.28} parent=0 // pred_check
    _
  $region27: #{custom_clip_forward.28} parent=0 // pred_check_branch
    %194 = sbr.rel (0) target = $region29
  $region28: #{custom_clip_forward.28} parent=0 // pred_region
    _
  $region29: #{custom_clip_forward.28} parent=0 // pred_fallthru
    _

// kernel: custom_clip_forward.26
$region0: #{custom_clip_forward.26}
  #allocation0 [shape = 'u32[]', space=smem, size = 0x4, offset = 0x4, fixed_abs, tag = 'smem constant byte address 0x4 - core index']
  #allocation1 [shape = 'u32[144,128]{1,0:T(1,128)}', space=vmem, size = 0x12000, scoped, tag = 'internal scratch']
  %s0 = inlined_call_operand.vmem [shape: f32[8,8], index: 0, kind: input, shape index: {}]
  %s1 = inlined_call_operand.vmem [shape: f32[3,8,96], index: 1, kind: input, shape index: {}]
  %s2 = inlined_call_operand.vmem [shape: f32[3,8,32], index: 2, kind: output, shape index: {}]
  %s3 = sld [smem:[#allocation0]]
  $region41: #{custom_clip_forward.26} parent=0
    _
  %s5 = ssub.s32 1, %s3
  %s6 = scalar_select 0, %s5, %s3
  loop: start=0, step=1, limit=5
  $region2: #{custom_clip_forward.26} parent=0 // loop_pre_header
    _
  $region3: #{custom_clip_forward.26} parent=0 // loop_header
    %s8 = sphi 0, %s12
    %p9 = scmp.ge.s32.totalorder %s8, 5
    %s16 = sphi 0, %s16
    %s18 = sphi 0, %s16
    %s19 = sphi 0, %s18
    %s33 = sphi 0, %s19
    %s39 = sphi 0, %s41
    %s42 = sphi 0, %s39
    %s43 = sphi 0, %s42
    %s59 = sphi 0, %s43
    %s65 = sphi 0, %s67
    %s68 = sphi 0, %s65
    %s69 = sphi 0, %s68
    %s85 = sphi 0, %s69
  $region4: #{custom_clip_forward.26} parent=0 // loop_header_branch
    %11 = sbr.rel (%p9) target = $region8
  $region5: #{custom_clip_forward.26} parent=0 // loop_body
    %s13 = ssub.s32 %s8, 1
    %s14 = ssub.s32 %s8, 2
    %s15 = sadd.s32 %s8, 1
    %s17 = sadd.s32 %s16, 1
    %p20 = scmp.eq.s32.totalorder %s8, 2
    %p21 = scmp.ne.s32.totalorder %s16, %s18
    %p22 = scmp.eq.s32.totalorder %s8, 0
    %p23 = por %p21, %p22
    %p24 = scmp.ne.s32.totalorder %s16, %s18
    %p25 = scmp.eq.s32.totalorder %s13, 2
    %p26 = por %p24, %p25
    %p27 = scmp.ne.s32.totalorder %s18, %s19
    %p28 = scmp.eq.s32.totalorder %s13, 0
    %p29 = por %p27, %p28
    %p30 = scmp.ne.s32.totalorder %s18, %s19
    %p31 = scmp.eq.s32.totalorder %s14, 2
    %p32 = por %p30, %p31
    %p34 = scmp.ne.s32.totalorder %s19, %s33
    %p35 = scmp.eq.s32.totalorder %s14, 0
    %p36 = por %p34, %p35
    %s37 = ssub.s32 %s8, %s15
    %p38 = scmp.eq.s32.totalorder %s37, 0
    %s40 = sadd.s32 %s39, 1
    %s41 = scalar_select %p38, %s39, %s40
    %p44 = pneg %p38
    %p45 = scmp.eq.s32.totalorder %s8, 2
    %p46 = por %p44, %p45
    %p47 = scmp.ne.s32.totalorder %s39, %s42
    %p48 = scmp.eq.s32.totalorder %s8, 0
    %p49 = por %p47, %p48
    %p50 = scmp.ne.s32.totalorder %s39, %s42
    %p51 = scmp.eq.s32.totalorder %s13, 2
    %p52 = por %p50, %p51
    %p53 = scmp.ne.s32.totalorder %s42, %s43
    %p54 = scmp.eq.s32.totalorder %s13, 0
    %p55 = por %p53, %p54
    %p56 = scmp.ne.s32.totalorder %s42, %s43
    %p57 = scmp.eq.s32.totalorder %s14, 2
    %p58 = por %p56, %p57
    %p60 = scmp.ne.s32.totalorder %s43, %s59
    %p61 = scmp.eq.s32.totalorder %s14, 0
    %p62 = por %p60, %p61
    %s63 = ssub.s32 %s8, %s15
    %p64 = scmp.eq.s32.totalorder %s63, 0
    %s66 = sadd.s32 %s65, 1
    %s67 = scalar_select %p64, %s65, %s66
    %p70 = pneg %p64
    %p71 = scmp.eq.s32.totalorder %s8, 2
    %p72 = por %p70, %p71
    %p73 = scmp.ne.s32.totalorder %s65, %s68
    %p74 = scmp.eq.s32.totalorder %s8, 0
    %p75 = por %p73, %p74
    %p76 = scmp.ne.s32.totalorder %s65, %s68
    %p77 = scmp.eq.s32.totalorder %s13, 2
    %p78 = por %p76, %p77
    %p79 = scmp.ne.s32.totalorder %s68, %s69
    %p80 = scmp.eq.s32.totalorder %s13, 0
    %p81 = por %p79, %p80
    %p82 = scmp.ne.s32.totalorder %s68, %s69
    %p83 = scmp.eq.s32.totalorder %s14, 2
    %p84 = por %p82, %p83
    %p86 = scmp.ne.s32.totalorder %s69, %s85
    %p87 = scmp.eq.s32.totalorder %s14, 0
    %p88 = por %p86, %p87
    %p89 = scmp.le.s32.totalorder 1, %s8
    %p90 = scmp.lt.s32.totalorder %s8, 4
    %p91 = pnand %p89, %p90
    %p92 = pneg %p91
    // Predicated region
    $region9: #{custom_clip_forward.26} parent=5 // pred_check
      _
    $region10: #{custom_clip_forward.26} parent=5 // pred_check_branch
      %94 = sbr.rel (%p91) target = $region12
    $region11: #{custom_clip_forward.26} parent=5 // pred_region
      %s95 = ssub.s32 %s8, 1
      // Predicated region
      $region13: #{custom_clip_forward.26} parent=11 // pred_check
        %p96 = pneg %p29
      $region14: #{custom_clip_forward.26} parent=11 // pred_check_branch
        %98 = sbr.rel (%p96) target = $region16
      $region15: #{custom_clip_forward.26} parent=11 // pred_region
        _
      $region16: #{custom_clip_forward.26} parent=11 // pred_fallthru
        _
    $region12: #{custom_clip_forward.26} parent=5 // pred_fallthru
      _
    %p99 = scmp.lt.s32.totalorder %s8, 3
    // Predicated region
    $region17: #{custom_clip_forward.26} parent=5 // pred_check
      %p100 = pneg %p99
    $region18: #{custom_clip_forward.26} parent=5 // pred_check_branch
      %102 = sbr.rel (%p100) target = $region20
    $region19: #{custom_clip_forward.26} parent=5 // pred_region
      // Predicated region
      $region21: #{custom_clip_forward.26} parent=19 // pred_check
        %p103 = pneg %p49
      $region22: #{custom_clip_forward.26} parent=19 // pred_check_branch
        %105 = sbr.rel (%p103) target = $region24
      $region23: #{custom_clip_forward.26} parent=19 // pred_region
        %p106 = scmp.lt.s32.totalorder %s8, 2
        %s107 = scalar_select %p106, %s8, 2
        %s108 = smul.addr %s107, 8
        %s109 = scalar_lea.vmem %s1, %s108
      $region24: #{custom_clip_forward.26} parent=19 // pred_fallthru
        _
    $region20: #{custom_clip_forward.26} parent=5 // pred_fallthru
      _
    %p110 = scmp.le.s32.totalorder 1, %s8
    %p111 = scmp.lt.s32.totalorder %s8, 4
    %p112 = pnand %p110, %p111
    %p113 = pneg %p112
    // Predicated region
    $region25: #{custom_clip_forward.26} parent=5 // pred_check
      _
    $region26: #{custom_clip_forward.26} parent=5 // pred_check_branch
      %115 = sbr.rel (%p112) target = $region28
    $region27: #{custom_clip_forward.26} parent=5 // pred_region
      %s116 = ssub.s32 %s8, 1
      %p117 = pneg %p29
      %p118 = pneg %p26
      %p119 = scmp.lt.s32.totalorder %s13, 2
      %s120 = scalar_select %p119, %s13, 2
      %s121 = smul.addr %s120, 8
      %s122 = scalar_lea.vmem %s1, %s121
      %p123 = pneg %p55
      %p124 = pneg %p52
      %p125 = pneg %p81
      %p126 = pneg %p78
      %p127 = scmp.lt.s32.totalorder %s13, 2
      %s128 = scalar_select %p127, %s13, 2
      %s129 = smul.addr %s128, 8
      %s130 = scalar_lea.vmem %s2, %s129
      %p131 = scmp.lt.s32.totalorder %s13, 2
      %s132 = scalar_select %p131, %s13, 2
      %s133 = smul.addr %s132, 8
      %s134 = scalar_lea.vmem %s1, %s133
      %p135 = scmp.lt.s32.totalorder %s13, 2
      %s136 = scalar_select %p135, %s13, 2
      %s137 = smul.addr %s136, 8
      %s138 = scalar_lea.vmem %s2, %s137
      %v140 = vld [vmem:[%s0] sm:$0xff]
      %v141 = vld [vmem:[%s134] sm:$0xff]
      %v142 = vpack.c.bf16 %v141, %v141
      %144 = vrot.lane.b32.xlu0 %v142, 96
      %v145 = vpop.permute.xlu0 %144
      %vm146 = vcmask 64512
      %v148 = vsel %vm146, %v142, 0
      %v151 = vsel %vm146, %v145, 0
      %153 = vmatprep.subr.bf16.mxu0 0
      %154 = vmatpush1.bf16.xpose.msra.mxu0 %v151
      %155 = vmatprep.subr.bf16.mxu0 0
      %156 = vmatpush1.bf16.xpose.msra.mxu0 0
      %157 = vmatprep.subr.bf16.mxu0 0
      %158 = vmatpush1.bf16.xpose.msra.mxu0 0
      %159 = vmatprep.subr.bf16.mxu0 0
      %160 = vmatpush1.bf16.xpose.msra.mxu0 0
      %161 = vmatprep.subr.bf16.mxu0 0
      %162 = vmatpush1.bf16.xpose.msra.mxu0 0
      %163 = vmatprep.subr.bf16.mxu0 0
      %164 = vmatpush1.bf16.xpose.msra.mxu0 0
      %165 = vmatprep.subr.bf16.mxu0 0
      %166 = vmatpush1.bf16.xpose.msra.mxu0 0
      %167 = vmatprep.subr.bf16.mxu0 0
      %168 = vmatpush1.bf16.xpose.msra.mxu0 0
      %169 = vmatprep.subr.bf16.mxu0 0
      %170 = vmatpush1.bf16.xpose.msra.mxu0 0
      %171 = vmatprep.subr.bf16.mxu0 0
      %172 = vmatpush1.bf16.xpose.msra.mxu0 0
      %173 = vmatprep.subr.bf16.mxu0 0
      %174 = vmatpush1.bf16.xpose.msra.mxu0 0
      %175 = vmatprep.subr.bf16.mxu0 0
      %176 = vmatpush1.bf16.xpose.msra.mxu0 0
      %177 = vmatprep.subr.bf16.mxu0 0
      %178 = vmatpush1.bf16.xpose.msra.mxu0 0
      %179 = vmatprep.subr.bf16.mxu0 0
      %180 = vmatpush1.bf16.xpose.msra.mxu0 0
      %181 = vmatprep.subr.bf16.mxu0 0
      %182 = vmatpush1.bf16.xpose.msra.mxu0 0
      %183 = vmatprep.subr.bf16.mxu0 0
      %184 = vmatpush1.bf16.xpose.msra.mxu0 0
      %185 = vmatprep.mubr.bf16.mxu0 0
      %186 = vmatmul.mubr.bf16.gmra.mrb[0].mxu0 %v148
      %v187 = vpop.f32.mrb[0].mxu0
      %v188 = vadd.f32 0.0, %v187
      %v189 = vpop.f32.mrb[0].mxu0
      %v190 = vpop.f32.mrb[0].mxu0
      %v191 = vpop.f32.mrb[0].mxu0
      %192 = vdwg.mxu0
      %v193 = vmul.f32 %v188, 0.35355338
      %v194 = vadd.f32 %v193, %v140
      %v195 = vsel %vm146, %v194, -inf
      %196 = vmax.xlane.f32.xlu0 %v195
      %v197 = vpop.xlane.xlu0 %196
      %v198 = vsub.f32 %v194, %v197
      %v199 = vmul.f32 %v198, 1.442695
      %v200 = vpow.pop %v199
      %v201 = vsel %vm146, %v200, 0.0
      %202 = vadd.xlane.f32.xlu0 %v201
      %v203 = vpop.xlane.xlu0 %202
      %v204 = vrcp.pop %v203
      %v205 = vmul.f32 %v200, %v204
      %v206 = vpack.c.bf16 %v205, %v205
      %207 = vrot.lane.b32.xlu0 %v142, 64
      %v208 = vpop.permute.xlu0 %207
      %v210 = vsel %vm146, %v206, 0
      %vm212 = vcmask 1043456
      %v214 = vsel %vm212, %v208, 0
      %216 = vmatprep.subr.bf16.mxu0 0
      %217 = vmatpush1.bf16.msra.mxu0 %v214
      %218 = vmatprep.subr.bf16.mxu0 0
      %219 = vmatpush1.bf16.msra.mxu0 0
      %220 = vmatprep.subr.bf16.mxu0 0
      %221 = vmatpush1.bf16.msra.mxu0 0
      %222 = vmatprep.subr.bf16.mxu0 0
      %223 = vmatpush1.bf16.msra.mxu0 0
      %224 = vmatprep.subr.bf16.mxu0 0
      %225 = vmatpush1.bf16.msra.mxu0 0
      %226 = vmatprep.subr.bf16.mxu0 0
      %227 = vmatpush1.bf16.msra.mxu0 0
      %228 = vmatprep.subr.bf16.mxu0 0
      %229 = vmatpush1.bf16.msra.mxu0 0
      %230 = vmatprep.subr.bf16.mxu0 0
      %231 = vmatpush1.bf16.msra.mxu0 0
      %232 = vmatprep.subr.bf16.mxu0 0
      %233 = vmatpush1.bf16.msra.mxu0 0
      %234 = vmatprep.subr.bf16.mxu0 0
      %235 = vmatpush1.bf16.msra.mxu0 0
      %236 = vmatprep.subr.bf16.mxu0 0
      %237 = vmatpush1.bf16.msra.mxu0 0
      %238 = vmatprep.subr.bf16.mxu0 0
      %239 = vmatpush1.bf16.msra.mxu0 0
      %240 = vmatprep.subr.bf16.mxu0 0
      %241 = vmatpush1.bf16.msra.mxu0 0
      %242 = vmatprep.subr.bf16.mxu0 0
      %243 = vmatpush1.bf16.msra.mxu0 0
      %244 = vmatprep.subr.bf16.mxu0 0
      %245 = vmatpush1.bf16.msra.mxu0 0
      %246 = vmatprep.subr.bf16.mxu0 0
      %247 = vmatpush1.bf16.msra.mxu0 0
      %248 = vmatprep.mubr.bf16.mxu0 0
      %249 = vmatmul.mubr.bf16.gmra.mrb[0].mxu0 %v210
      %v250 = vpop.f32.mrb[0].mxu0
      %v251 = vadd.f32 0.0, %v250
      %v252 = vpop.f32.mrb[0].mxu0
      %v253 = vpop.f32.mrb[0].mxu0
      %v254 = vpop.f32.mrb[0].mxu0
      %255 = vdwg.mxu0
      %256 = vrot.lane.b32.xlu0 %v142, 120
      %v257 = vpop.permute.xlu0 %256
      %258 = vrot.lane.b32.xlu0 %v142, 88
      %v259 = vpop.permute.xlu0 %258
      %v261 = vsel %vm146, %v257, 0
      %v264 = vsel %vm146, %v259, 0
      %266 = vmatprep.subr.bf16.mxu0 0
      %267 = vmatpush1.bf16.xpose.msra.mxu0 %v264
      %268 = vmatprep.subr.bf16.mxu0 0
      %269 = vmatpush1.bf16.xpose.msra.mxu0 0
      %270 = vmatprep.subr.bf16.mxu0 0
      %271 = vmatpush1.bf16.xpose.msra.mxu0 0
      %272 = vmatprep.subr.bf16.mxu0 0
      %273 = vmatpush1.bf16.xpose.msra.mxu0 0
      %274 = vmatprep.subr.bf16.mxu0 0
      %275 = vmatpush1.bf16.xpose.msra.mxu0 0
      %276 = vmatprep.subr.bf16.mxu0 0
      %277 = vmatpush1.bf16.xpose.msra.mxu0 0
      %278 = vmatprep.subr.bf16.mxu0 0
      %279 = vmatpush1.bf16.xpose.msra.mxu0 0
      %280 = vmatprep.subr.bf16.mxu0 0
      %281 = vmatpush1.bf16.xpose.msra.mxu0 0
      %282 = vmatprep.subr.bf16.mxu0 0
      %283 = vmatpush1.bf16.xpose.msra.mxu0 0
      %284 = vmatprep.subr.bf16.mxu0 0
      %285 = vmatpush1.bf16.xpose.msra.mxu0 0
      %286 = vmatprep.subr.bf16.mxu0 0
      %287 = vmatpush1.bf16.xpose.msra.mxu0 0
      %288 = vmatprep.subr.bf16.mxu0 0
      %289 = vmatpush1.bf16.xpose.msra.mxu0 0
      %290 = vmatprep.subr.bf16.mxu0 0
      %291 = vmatpush1.bf16.xpose.msra.mxu0 0
      %292 = vmatprep.subr.bf16.mxu0 0
      %293 = vmatpush1.bf16.xpose.msra.mxu0 0
      %294 = vmatprep.subr.bf16.mxu0 0
      %295 = vmatpush1.bf16.xpose.msra.mxu0 0
      %296 = vmatprep.subr.bf16.mxu0 0
      %297 = vmatpush1.bf16.xpose.msra.mxu0 0
      %298 = vmatprep.mubr.bf16.mxu0 0
      %299 = vmatmul.mubr.bf16.gmra.mrb[0].mxu0 %v261
      %v300 = vpop.f32.mrb[0].mxu0
      %v301 = vadd.f32 0.0, %v300
      %v302 = vpop.f32.mrb[0].mxu0
      %v303 = vpop.f32.mrb[0].mxu0
      %v304 = vpop.f32.mrb[0].mxu0
      %305 = vdwg.mxu0
      %v306 = vmul.f32 %v301, 0.35355338
      %v307 = vadd.f32 %v306, %v140
      %v308 = vsel %vm146, %v307, -inf
      %309 = vmax.xlane.f32.xlu0 %v308
      %v310 = vpop.xlane.xlu0 %309
      %v311 = vsub.f32 %v307, %v310
      %v312 = vmul.f32 %v311, 1.442695
      %v313 = vpow.pop %v312
      %v314 = vsel %vm146, %v313, 0.0
      %315 = vadd.xlane.f32.xlu0 %v314
      %v316 = vpop.xlane.xlu0 %315
      %v317 = vrcp.pop %v316
      %v318 = vmul.f32 %v313, %v317
      %v319 = vpack.c.bf16 %v318, %v318
      %320 = vrot.lane.b32.xlu0 %v142, 56
      %v321 = vpop.permute.xlu0 %320
      %v323 = vsel %vm146, %v319, 0
      %v326 = vsel %vm212, %v321, 0
      %328 = vmatprep.subr.bf16.mxu0 0
      %329 = vmatpush1.bf16.msra.mxu0 %v326
      %330 = vmatprep.subr.bf16.mxu0 0
      %331 = vmatpush1.bf16.msra.mxu0 0
      %332 = vmatprep.subr.bf16.mxu0 0
      %333 = vmatpush1.bf16.msra.mxu0 0
      %334 = vmatprep.subr.bf16.mxu0 0
      %335 = vmatpush1.bf16.msra.mxu0 0
      %336 = vmatprep.subr.bf16.mxu0 0
      %337 = vmatpush1.bf16.msra.mxu0 0
      %338 = vmatprep.subr.bf16.mxu0 0
      %339 = vmatpush1.bf16.msra.mxu0 0
      %340 = vmatprep.subr.bf16.mxu0 0
      %341 = vmatpush1.bf16.msra.mxu0 0
      %342 = vmatprep.subr.bf16.mxu0 0
      %343 = vmatpush1.bf16.msra.mxu0 0
      %344 = vmatprep.subr.bf16.mxu0 0
      %345 = vmatpush1.bf16.msra.mxu0 0
      %346 = vmatprep.subr.bf16.mxu0 0
      %347 = vmatpush1.bf16.msra.mxu0 0
      %348 = vmatprep.subr.bf16.mxu0 0
      %349 = vmatpush1.bf16.msra.mxu0 0
      %350 = vmatprep.subr.bf16.mxu0 0
      %351 = vmatpush1.bf16.msra.mxu0 0
      %352 = vmatprep.subr.bf16.mxu0 0
      %353 = vmatpush1.bf16.msra.mxu0 0
      %354 = vmatprep.subr.bf16.mxu0 0
      %355 = vmatpush1.bf16.msra.mxu0 0
      %356 = vmatprep.subr.bf16.mxu0 0
      %357 = vmatpush1.bf16.msra.mxu0 0
      %358 = vmatprep.subr.bf16.mxu0 0
      %359 = vmatpush1.bf16.msra.mxu0 0
      %360 = vmatprep.mubr.bf16.mxu0 0
      %361 = vmatmul.mubr.bf16.gmra.mrb[0].mxu0 %v323
      %v362 = vpop.f32.mrb[0].mxu0
      %v363 = vadd.f32 0.0, %v362
      %v364 = vpop.f32.mrb[0].mxu0
      %v365 = vpop.f32.mrb[0].mxu0
      %v366 = vpop.f32.mrb[0].mxu0
      %367 = vdwg.mxu0
      %368 = vrot.lane.b32.xlu0 %v142, 112
      %v369 = vpop.permute.xlu0 %368
      %370 = vrot.lane.b32.xlu0 %v142, 80
      %v371 = vpop.permute.xlu0 %370
      %v373 = vsel %vm146, %v369, 0
      %v376 = vsel %vm146, %v371, 0
      %378 = vmatprep.subr.bf16.mxu0 0
      %379 = vmatpush1.bf16.xpose.msra.mxu0 %v376
      %380 = vmatprep.subr.bf16.mxu0 0
      %381 = vmatpush1.bf16.xpose.msra.mxu0 0
      %382 = vmatprep.subr.bf16.mxu0 0
      %383 = vmatpush1.bf16.xpose.msra.mxu0 0
      %384 = vmatprep.subr.bf16.mxu0 0
      %385 = vmatpush1.bf16.xpose.msra.mxu0 0
      %386 = vmatprep.subr.bf16.mxu0 0
      %387 = vmatpush1.bf16.xpose.msra.mxu0 0
      %388 = vmatprep.subr.bf16.mxu0 0
      %389 = vmatpush1.bf16.xpose.msra.mxu0 0
      %390 = vmatprep.subr.bf16.mxu0 0
      %391 = vmatpush1.bf16.xpose.msra.mxu0 0
      %392 = vmatprep.subr.bf16.mxu0 0
      %393 = vmatpush1.bf16.xpose.msra.mxu0 0
      %394 = vmatprep.subr.bf16.mxu0 0
      %395 = vmatpush1.bf16.xpose.msra.mxu0 0
      %396 = vmatprep.subr.bf16.mxu0 0
      %397 = vmatpush1.bf16.xpose.msra.mxu0 0
      %398 = vmatprep.subr.bf16.mxu0 0
      %399 = vmatpush1.bf16.xpose.msra.mxu0 0
      %400 = vmatprep.subr.bf16.mxu0 0
      %401 = vmatpush1.bf16.xpose.msra.mxu0 0
      %402 = vmatprep.subr.bf16.mxu0 0
      %403 = vmatpush1.bf16.xpose.msra.mxu0 0
      %404 = vmatprep.subr.bf16.mxu0 0
      %405 = vmatpush1.bf16.xpose.msra.mxu0 0
      %406 = vmatprep.subr.bf16.mxu0 0
      %407 = vmatpush1.bf16.xpose.msra.mxu0 0
      %408 = vmatprep.subr.bf16.mxu0 0
      %409 = vmatpush1.bf16.xpose.msra.mxu0 0
      %410 = vmatprep.mubr.bf16.mxu0 0
      %411 = vmatmul.mubr.bf16.gmra.mrb[0].mxu0 %v373
      %v412 = vpop.f32.mrb[0].mxu0
      %v413 = vadd.f32 0.0, %v412
      %v414 = vpop.f32.mrb[0].mxu0
      %v415 = vpop.f32.mrb[0].mxu0
      %v416 = vpop.f32.mrb[0].mxu0
      %417 = vdwg.mxu0
      %v418 = vmul.f32 %v413, 0.35355338
      %v419 = vadd.f32 %v418, %v140
      %v420 = vsel %vm146, %v419, -inf
      %421 = vmax.xlane.f32.xlu0 %v420
      %v422 = vpop.xlane.xlu0 %421
      %v423 = vsub.f32 %v419, %v422
      %v424 = vmul.f32 %v423, 1.442695
      %v425 = vpow.pop %v424
      %v426 = vsel %vm146, %v425, 0.0
      %427 = vadd.xlane.f32.xlu0 %v426
      %v428 = vpop.xlane.xlu0 %427
      %v429 = vrcp.pop %v428
      %v430 = vmul.f32 %v425, %v429
      %v431 = vpack.c.bf16 %v430, %v430
      %432 = vrot.lane.b32.xlu0 %v142, 48
      %v433 = vpop.permute.xlu0 %432
      %v435 = vsel %vm146, %v431, 0
      %v438 = vsel %vm212, %v433, 0
      %440 = vmatprep.subr.bf16.mxu0 0
      %441 = vmatpush1.bf16.msra.mxu0 %v438
      %442 = vmatprep.subr.bf16.mxu0 0
      %443 = vmatpush1.bf16.msra.mxu0 0
      %444 = vmatprep.subr.bf16.mxu0 0
      %445 = vmatpush1.bf16.msra.mxu0 0
      %446 = vmatprep.subr.bf16.mxu0 0
      %447 = vmatpush1.bf16.msra.mxu0 0
      %448 = vmatprep.subr.bf16.mxu0 0
      %449 = vmatpush1.bf16.msra.mxu0 0
      %450 = vmatprep.subr.bf16.mxu0 0
      %451 = vmatpush1.bf16.msra.mxu0 0
      %452 = vmatprep.subr.bf16.mxu0 0
      %453 = vmatpush1.bf16.msra.mxu0 0
      %454 = vmatprep.subr.bf16.mxu0 0
      %455 = vmatpush1.bf16.msra.mxu0 0
      %456 = vmatprep.subr.bf16.mxu0 0
      %457 = vmatpush1.bf16.msra.mxu0 0
      %458 = vmatprep.subr.bf16.mxu0 0
      %459 = vmatpush1.bf16.msra.mxu0 0
      %460 = vmatprep.subr.bf16.mxu0 0
      %461 = vmatpush1.bf16.msra.mxu0 0
      %462 = vmatprep.subr.bf16.mxu0 0
      %463 = vmatpush1.bf16.msra.mxu0 0
      %464 = vmatprep.subr.bf16.mxu0 0
      %465 = vmatpush1.bf16.msra.mxu0 0
      %466 = vmatprep.subr.bf16.mxu0 0
      %467 = vmatpush1.bf16.msra.mxu0 0
      %468 = vmatprep.subr.bf16.mxu0 0
      %469 = vmatpush1.bf16.msra.mxu0 0
      %470 = vmatprep.subr.bf16.mxu0 0
      %471 = vmatpush1.bf16.msra.mxu0 0
      %472 = vmatprep.mubr.bf16.mxu0 0
      %473 = vmatmul.mubr.bf16.gmra.mrb[0].mxu0 %v435
      %v474 = vpop.f32.mrb[0].mxu0
      %v475 = vadd.f32 0.0, %v474
      %v476 = vpop.f32.mrb[0].mxu0
      %v477 = vpop.f32.mrb[0].mxu0
      %v478 = vpop.f32.mrb[0].mxu0
      %479 = vdwg.mxu0
      %480 = vrot.lane.b32.xlu0 %v142, 104
      %v481 = vpop.permute.xlu0 %480
      %482 = vrot.lane.b32.xlu0 %v142, 72
      %v483 = vpop.permute.xlu0 %482
      %v485 = vsel %vm146, %v481, 0
      %v488 = vsel %vm146, %v483, 0
      %490 = vmatprep.subr.bf16.mxu0 0
      %491 = vmatpush1.bf16.xpose.msra.mxu0 %v488
      %492 = vmatprep.subr.bf16.mxu0 0
      %493 = vmatpush1.bf16.xpose.msra.mxu0 0
      %494 = vmatprep.subr.bf16.mxu0 0
      %495 = vmatpush1.bf16.xpose.msra.mxu0 0
      %496 = vmatprep.subr.bf16.mxu0 0
      %497 = vmatpush1.bf16.xpose.msra.mxu0 0
      %498 = vmatprep.subr.bf16.mxu0 0
      %499 = vmatpush1.bf16.xpose.msra.mxu0 0
      %500 = vmatprep.subr.bf16.mxu0 0
      %501 = vmatpush1.bf16.xpose.msra.mxu0 0
      %502 = vmatprep.subr.bf16.mxu0 0
      %503 = vmatpush1.bf16.xpose.msra.mxu0 0
      %504 = vmatprep.subr.bf16.mxu0 0
      %505 = vmatpush1.bf16.xpose.msra.mxu0 0
      %506 = vmatprep.subr.bf16.mxu0 0
      %507 = vmatpush1.bf16.xpose.msra.mxu0 0
      %508 = vmatprep.subr.bf16.mxu0 0
      %509 = vmatpush1.bf16.xpose.msra.mxu0 0
      %510 = vmatprep.subr.bf16.mxu0 0
      %511 = vmatpush1.bf16.xpose.msra.mxu0 0
      %512 = vmatprep.subr.bf16.mxu0 0
      %513 = vmatpush1.bf16.xpose.msra.mxu0 0
      %514 = vmatprep.subr.bf16.mxu0 0
      %515 = vmatpush1.bf16.xpose.msra.mxu0 0
      %516 = vmatprep.subr.bf16.mxu0 0
      %517 = vmatpush1.bf16.xpose.msra.mxu0 0
      %518 = vmatprep.subr.bf16.mxu0 0
      %519 = vmatpush1.bf16.xpose.msra.mxu0 0
      %520 = vmatprep.subr.bf16.mxu0 0
      %521 = vmatpush1.bf16.xpose.msra.mxu0 0
      %522 = vmatprep.mubr.bf16.mxu0 0
      %523 = vmatmul.mubr.bf16.gmra.mrb[0].mxu0 %v485
      %v524 = vpop.f32.mrb[0].mxu0
      %v525 = vadd.f32 0.0, %v524
      %v526 = vpop.f32.mrb[0].mxu0
      %v527 = vpop.f32.mrb[0].mxu0
      %v528 = vpop.f32.mrb[0].mxu0
      %529 = vdwg.mxu0
      %v530 = vmul.f32 %v525, 0.35355338
      %v531 = vadd.f32 %v530, %v140
      %v532 = vsel %vm146, %v531, -inf
      %533 = vmax.xlane.f32.xlu0 %v532
      %v534 = vpop.xlane.xlu0 %533
      %v535 = vsub.f32 %v531, %v534
      %v536 = vmul.f32 %v535, 1.442695
      %v537 = vpow.pop %v536
      %v538 = vsel %vm146, %v537, 0.0
      %539 = vadd.xlane.f32.xlu0 %v538
      %v540 = vpop.xlane.xlu0 %539
      %v541 = vrcp.pop %v540
      %v542 = vmul.f32 %v537, %v541
      %v543 = vpack.c.bf16 %v542, %v542
      %544 = vrot.lane.b32.xlu0 %v142, 40
      %v545 = vpop.permute.xlu0 %544
      %v547 = vsel %vm146, %v543, 0
      %v550 = vsel %vm212, %v545, 0
      %552 = vmatprep.subr.bf16.mxu0 0
      %553 = vmatpush1.bf16.msra.mxu0 %v550
      %554 = vmatprep.subr.bf16.mxu0 0
      %555 = vmatpush1.bf16.msra.mxu0 0
      %556 = vmatprep.subr.bf16.mxu0 0
      %557 = vmatpush1.bf16.msra.mxu0 0
      %558 = vmatprep.subr.bf16.mxu0 0
      %559 = vmatpush1.bf16.msra.mxu0 0
      %560 = vmatprep.subr.bf16.mxu0 0
      %561 = vmatpush1.bf16.msra.mxu0 0
      %562 = vmatprep.subr.bf16.mxu0 0
      %563 = vmatpush1.bf16.msra.mxu0 0
      %564 = vmatprep.subr.bf16.mxu0 0
      %565 = vmatpush1.bf16.msra.mxu0 0
      %566 = vmatprep.subr.bf16.mxu0 0
      %567 = vmatpush1.bf16.msra.mxu0 0
      %568 = vmatprep.subr.bf16.mxu0 0
      %569 = vmatpush1.bf16.msra.mxu0 0
      %570 = vmatprep.subr.bf16.mxu0 0
      %571 = vmatpush1.bf16.msra.mxu0 0
      %572 = vmatprep.subr.bf16.mxu0 0
      %573 = vmatpush1.bf16.msra.mxu0 0
      %574 = vmatprep.subr.bf16.mxu0 0
      %575 = vmatpush1.bf16.msra.mxu0 0
      %576 = vmatprep.subr.bf16.mxu0 0
      %577 = vmatpush1.bf16.msra.mxu0 0
      %578 = vmatprep.subr.bf16.mxu0 0
      %579 = vmatpush1.bf16.msra.mxu0 0
      %580 = vmatprep.subr.bf16.mxu0 0
      %581 = vmatpush1.bf16.msra.mxu0 0
      %582 = vmatprep.subr.bf16.mxu0 0
      %583 = vmatpush1.bf16.msra.mxu0 0
      %584 = vmatprep.mubr.bf16.mxu0 0
      %585 = vmatmul.mubr.bf16.gmra.mrb[0].mxu0 %v547
      %v586 = vpop.f32.mrb[0].mxu0
      %v587 = vadd.f32 0.0, %v586
      %v588 = vpop.f32.mrb[0].mxu0
      %v589 = vpop.f32.mrb[0].mxu0
      %v590 = vpop.f32.mrb[0].mxu0
      %591 = vdwg.mxu0
      %593 = vrot.lane.b32.xlu0 %v363, 8
      %v594 = vpop.permute.xlu0 %593
      %597 = vrot.lane.b32.xlu0 %v475, 16
      %v598 = vpop.permute.xlu0 %597
      %601 = vrot.lane.b32.xlu0 %v587, 24
      %v602 = vpop.permute.xlu0 %601
      %v604 = vsel %vm146, %v251, %v594
      %vm605 = vcmask 130048
      %v606 = vsel %vm605, %v604, %v598
      %vm607 = vcmask 195584
      %v608 = vsel %vm607, %v606, %v602
      %vm609 = vcmask 261120
      %610 = vst.msk [vmem:[%s138] sm:$0xff] %vm609, %v608
      %p611 = scmp.lt.s32.totalorder %s13, 2
      %s612 = scalar_select %p611, %s13, 2
      %s613 = smul.addr %s612, 8
      %s614 = scalar_lea.vmem %s2, %s613
      // Predicated region
      $region29: #{custom_clip_forward.26} parent=27 // pred_check
        %p615 = pneg %p78
      $region30: #{custom_clip_forward.26} parent=27 // pred_check_branch
        %617 = sbr.rel (%p615) target = $region32
      $region31: #{custom_clip_forward.26} parent=27 // pred_region
        _
      $region32: #{custom_clip_forward.26} parent=27 // pred_fallthru
        _
    $region28: #{custom_clip_forward.26} parent=5 // pred_fallthru
      _
    %p618 = scmp.le.s32.totalorder 2, %s8
    // Predicated region
    $region33: #{custom_clip_forward.26} parent=5 // pred_check
      %p619 = pneg %p618
    $region34: #{custom_clip_forward.26} parent=5 // pred_check_branch
      %621 = sbr.rel (%p619) target = $region36
    $region35: #{custom_clip_forward.26} parent=5 // pred_region
      %s622 = ssub.s32 %s8, 2
      // Predicated region
      $region37: #{custom_clip_forward.26} parent=35 // pred_check
        %p623 = pneg %p84
      $region38: #{custom_clip_forward.26} parent=35 // pred_check_branch
        %625 = sbr.rel (%p623) target = $region40
      $region39: #{custom_clip_forward.26} parent=35 // pred_region
        %p626 = scmp.lt.s32.totalorder %s14, 2
        %s627 = scalar_select %p626, %s14, 2
        %s628 = smul.addr %s627, 8
        %s629 = scalar_lea.vmem %s2, %s628
      $region40: #{custom_clip_forward.26} parent=35 // pred_fallthru
        _
    $region36: #{custom_clip_forward.26} parent=5 // pred_fallthru
      _
  $region6: #{custom_clip_forward.26} parent=0 // loop_footer
    %s12 = sadd.s32 1, %s8
  $region7: #{custom_clip_forward.26} parent=0 // loop_footer_branch
    %7 = sbr.rel target = $region3
  $region8: #{custom_clip_forward.26} parent=0 // loop_exit
    _

// kernel: custom_clip_forward.29
$region0: #{custom_clip_forward.29}
  #allocation0 [shape = 'u32[]', space=smem, size = 0x4, offset = 0x4, fixed_abs, tag = 'smem constant byte address 0x4 - core index']
  #allocation1 [shape = 'u32[144,128]{1,0:T(1,128)}', space=vmem, size = 0x12000, scoped, tag = 'internal scratch']
  #allocation2 [shape = 'f32[24,32]{1,0:T(8,128)}', space=vmem, size = 0x3000, scoped, tag = 'scratch operand']
  %s0 = inlined_call_operand.vmem [shape: f32[24,128], index: 0, kind: input, shape index: {}]
  %s1 = inlined_call_operand.vmem [shape: bf16[128,32], index: 1, kind: input, shape index: {}]
  %s2 = inlined_call_operand.vmem [shape: f32[1,32], index: 2, kind: input, shape index: {}]
  %s3 = inlined_call_operand.vmem [shape: f32[24,32], index: 3, kind: input, shape index: {}]
  %s4 = inlined_call_operand.vmem [shape: f32[24,32], index: 4, kind: output, shape index: {}]
  %s5 = sld [smem:[#allocation0]]
  $region34: #{custom_clip_forward.29} parent=0
    _
  %s7 = ssub.s32 1, %s5
  %s8 = scalar_select 0, %s7, %s5
  // Predicated region
  $region2: #{custom_clip_forward.29} parent=0 // pred_check
    _
  $region3: #{custom_clip_forward.29} parent=0 // pred_check_branch
    %10 = sbr.rel (0) target = $region5
  $region4: #{custom_clip_forward.29} parent=0 // pred_region
    _
  $region5: #{custom_clip_forward.29} parent=0 // pred_fallthru
    _
  // Predicated region
  $region6: #{custom_clip_forward.29} parent=0 // pred_check
    _
  $region7: #{custom_clip_forward.29} parent=0 // pred_check_branch
    %12 = sbr.rel (0) target = $region9
  $region8: #{custom_clip_forward.29} parent=0 // pred_region
    _
  $region9: #{custom_clip_forward.29} parent=0 // pred_fallthru
    _
  // Predicated region
  $region10: #{custom_clip_forward.29} parent=0 // pred_check
    _
  $region11: #{custom_clip_forward.29} parent=0 // pred_check_branch
    %14 = sbr.rel (0) target = $region13
  $region12: #{custom_clip_forward.29} parent=0 // pred_region
    _
  $region13: #{custom_clip_forward.29} parent=0 // pred_fallthru
    _
  // Predicated region
  $region14: #{custom_clip_forward.29} parent=0 // pred_check
    _
  $region15: #{custom_clip_forward.29} parent=0 // pred_check_branch
    %16 = sbr.rel (0) target = $region17
  $region16: #{custom_clip_forward.29} parent=0 // pred_region
    _
  $region17: #{custom_clip_forward.29} parent=0 // pred_fallthru
    _
  %p18 = scmp.eq.s32.totalorder 0, 0
  // Predicated region
  $region18: #{custom_clip_forward.29} parent=0 // pred_check
    %p19 = pneg %p18
  $region19: #{custom_clip_forward.29} parent=0 // pred_check_branch
    %21 = sbr.rel (%p19) target = $region21
  $region20: #{custom_clip_forward.29} parent=0 // pred_region
    %vm22 = vcmask 261120
    %23 = vst.msk [vmem:[#allocation2] sm:$0xff] %vm22, 0.0
    %24 = vst.msk [vmem:[#allocation2 + $0x8] sm:$0xff] %vm22, 0.0
    %25 = vst.msk [vmem:[#allocation2 + $0x10] sm:$0xff] %vm22, 0.0
  $region21: #{custom_clip_forward.29} parent=0 // pred_fallthru
    _
  %v26 = vld [vmem:[#allocation2] sm:$0xff]
  %v27 = vld [vmem:[#allocation2 + $0x8] sm:$0xff]
  %v28 = vld [vmem:[#allocation2 + $0x10] sm:$0xff]
  %v29 = vld [vmem:[%s0] sm:$0xff]
  %v30 = vld [vmem:[%s0 + $0x8] sm:$0xff]
  %v31 = vld [vmem:[%s0 + $0x10] sm:$0xff]
  %v32 = vpack.c.bf16 %v30, %v29
  %v33 = vpack.c.bf16 %v31, %v31
  %v34 = vld [vmem:[%s1] sm:$0xf]
  %v35 = vld [vmem:[%s1 + $0x4] sm:$0xf]
  %v36 = vld [vmem:[%s1 + $0x8] sm:$0xf]
  %v37 = vld [vmem:[%s1 + $0xc] sm:$0xf]
  %v38 = vld [vmem:[%s1 + $0x10] sm:$0xf]
  %v39 = vld [vmem:[%s1 + $0x14] sm:$0xf]
  %v40 = vld [vmem:[%s1 + $0x18] sm:$0xf]
  %v41 = vld [vmem:[%s1 + $0x1c] sm:$0xf]
  %v42 = vld [vmem:[%s1 + $0x20] sm:$0xf]
  %v43 = vld [vmem:[%s1 + $0x24] sm:$0xf]
  %v44 = vld [vmem:[%s1 + $0x28] sm:$0xf]
  %v45 = vld [vmem:[%s1 + $0x2c] sm:$0xf]
  %v46 = vld [vmem:[%s1 + $0x30] sm:$0xf]
  %v47 = vld [vmem:[%s1 + $0x34] sm:$0xf]
  %v48 = vld [vmem:[%s1 + $0x38] sm:$0xf]
  %v49 = vld [vmem:[%s1 + $0x3c] sm:$0xf]
  %v66 = vunpack.c.l.b16 %v34
  %v67 = vunpack.c.l.b16 %v35
  %v68 = vunpack.c.l.b16 %v36
  %v69 = vunpack.c.l.b16 %v37
  %v70 = vunpack.c.l.b16 %v38
  %v71 = vunpack.c.l.b16 %v39
  %v72 = vunpack.c.l.b16 %v40
  %v73 = vunpack.c.l.b16 %v41
  %v74 = vunpack.c.l.b16 %v42
  %v75 = vunpack.c.l.b16 %v43
  %v76 = vunpack.c.l.b16 %v44
  %v77 = vunpack.c.l.b16 %v45
  %v78 = vunpack.c.l.b16 %v46
  %v79 = vunpack.c.l.b16 %v47
  %v80 = vunpack.c.l.b16 %v48
  %v81 = vunpack.c.l.b16 %v49
  %v82 = vpack.c.b16 %v67, %v66
  %v83 = vpack.c.b16 %v69, %v68
  %v84 = vpack.c.b16 %v71, %v70
  %v85 = vpack.c.b16 %v73, %v72
  %v86 = vpack.c.b16 %v75, %v74
  %v87 = vpack.c.b16 %v77, %v76
  %v88 = vpack.c.b16 %v79, %v78
  %v89 = vpack.c.b16 %v81, %v80
  %98 = vmatprep.subr.bf16.mxu0 0
  %99 = vmatpush1.bf16.msra.mxu0 %v82
  %100 = vmatprep.subr.bf16.mxu0 0
  %101 = vmatpush1.bf16.msra.mxu0 %v83
  %102 = vmatprep.subr.bf16.mxu0 0
  %103 = vmatpush1.bf16.msra.mxu0 %v84
  %104 = vmatprep.subr.bf16.mxu0 0
  %105 = vmatpush1.bf16.msra.mxu0 %v85
  %106 = vmatprep.subr.bf16.mxu0 0
  %107 = vmatpush1.bf16.msra.mxu0 %v86
  %108 = vmatprep.subr.bf16.mxu0 0
  %109 = vmatpush1.bf16.msra.mxu0 %v87
  %110 = vmatprep.subr.bf16.mxu0 0
  %111 = vmatpush1.bf16.msra.mxu0 %v88
  %112 = vmatprep.subr.bf16.mxu0 0
  %113 = vmatpush1.bf16.msra.mxu0 %v89
  %114 = vmatprep.subr.bf16.mxu0 0
  %115 = vmatpush1.bf16.msra.mxu0 0
  %116 = vmatprep.subr.bf16.mxu0 0
  %117 = vmatpush1.bf16.msra.mxu0 0
  %118 = vmatprep.subr.bf16.mxu0 0
  %119 = vmatpush1.bf16.msra.mxu0 0
  %120 = vmatprep.subr.bf16.mxu0 0
  %121 = vmatpush1.bf16.msra.mxu0 0
  %122 = vmatprep.subr.bf16.mxu0 0
  %123 = vmatpush1.bf16.msra.mxu0 0
  %124 = vmatprep.subr.bf16.mxu0 0
  %125 = vmatpush1.bf16.msra.mxu0 0
  %126 = vmatprep.subr.bf16.mxu0 0
  %127 = vmatpush1.bf16.msra.mxu0 0
  %128 = vmatprep.subr.bf16.mxu0 0
  %129 = vmatpush1.bf16.msra.mxu0 0
  %130 = vmatprep.mubr.bf16.mxu0 0
  %131 = vmatmul.mubr.bf16.gmra.mrb[0].mxu0 %v32
  %v132 = vpop.f32.mrb[0].mxu0
  %v133 = vadd.f32 0.0, %v132
  %v134 = vpop.f32.mrb[0].mxu0
  %v135 = vpop.f32.mrb[0].mxu0
  %v136 = vadd.f32 0.0, %v135
  %v137 = vpop.f32.mrb[0].mxu0
  %138 = vmatprep.mubr.bf16.mxu0 0
  %139 = vmatmul.mubr.bf16.gmra.mrb[0].mxu0 %v33
  %v140 = vpop.f32.mrb[0].mxu0
  %v141 = vadd.f32 0.0, %v140
  %v142 = vpop.f32.mrb[0].mxu0
  %v143 = vpop.f32.mrb[0].mxu0
  %v144 = vpop.f32.mrb[0].mxu0
  %145 = vdwg.mxu0
  %v146 = vadd.f32 %v26, %v133
  %v147 = vadd.f32 %v27, %v136
  %v148 = vadd.f32 %v28, %v141
  %vm149 = vcmask 261120
  %150 = vst.msk [vmem:[#allocation2] sm:$0xff] %vm149, %v146
  %151 = vst.msk [vmem:[#allocation2 + $0x8] sm:$0xff] %vm149, %v147
  %152 = vst.msk [vmem:[#allocation2 + $0x10] sm:$0xff] %vm149, %v148
  // Predicated region
  $region22: #{custom_clip_forward.29} parent=0 // pred_check
    %p153 = pneg %p18
  $region23: #{custom_clip_forward.29} parent=0 // pred_check_branch
    %155 = sbr.rel (%p153) target = $region25
  $region24: #{custom_clip_forward.29} parent=0 // pred_region
    %v156 = vld [vmem:[#allocation2] sm:$0xff]
    %v157 = vld [vmem:[#allocation2 + $0x8] sm:$0xff]
    %v158 = vld [vmem:[#allocation2 + $0x10] sm:$0xff]
    %v159 = vld [vmem:[%s2] sm:$0x1]
    %v161 = vlaneseq
    %v162 = vshrl.u32 %v161, 7
    %v163 = vsub.s32 0, %v162
    %v164 = vrot.slane %v159, %v163
    %v166 = vadd.f32 %v156, %v164
    %v167 = vadd.f32 %v157, %v164
    %v168 = vadd.f32 %v158, %v164
    %v169 = vld [vmem:[%s3] sm:$0xff]
    %v170 = vld [vmem:[%s3 + $0x8] sm:$0xff]
    %v171 = vld [vmem:[%s3 + $0x10] sm:$0xff]
    %v172 = vadd.f32 %v166, %v169
    %v173 = vadd.f32 %v167, %v170
    %v174 = vadd.f32 %v168, %v171
    %175 = vst.msk [vmem:[%s4] sm:$0xff] %vm149, %v172
    %176 = vst.msk [vmem:[%s4 + $0x8] sm:$0xff] %vm149, %v173
    %177 = vst.msk [vmem:[%s4 + $0x10] sm:$0xff] %vm149, %v174
  $region25: #{custom_clip_forward.29} parent=0 // pred_fallthru
    _
  // Predicated region
  $region26: #{custom_clip_forward.29} parent=0 // pred_check
    _
  $region27: #{custom_clip_forward.29} parent=0 // pred_check_branch
    %179 = sbr.rel (0) target = $region29
  $region28: #{custom_clip_forward.29} parent=0 // pred_region
    _
  $region29: #{custom_clip_forward.29} parent=0 // pred_fallthru
    _
  // Predicated region
  $region30: #{custom_clip_forward.29} parent=0 // pred_check
    _
  $region31: #{custom_clip_forward.29} parent=0 // pred_check_branch
    %181 = sbr.rel (0) target = $region33
  $region32: #{custom_clip_forward.29} parent=0 // pred_region
    _
  $region33: #{custom_clip_forward.29} parent=0 // pred_fallthru
    _

// kernel: custom_clip_forward.35
$region0: #{custom_clip_forward.35}
  #allocation0 [shape = 'u32[]', space=smem, size = 0x4, offset = 0x4, fixed_abs, tag = 'smem constant byte address 0x4 - core index']
  #allocation1 [shape = 'u32[144,128]{1,0:T(1,128)}', space=vmem, size = 0x12000, scoped, tag = 'internal scratch']
  %s0 = inlined_call_operand.vmem [shape: f32[3,32], index: 0, kind: input, shape index: {}]
  %s1 = inlined_call_operand.vmem [shape: f32[1,32], index: 1, kind: input, shape index: {}]
  %s2 = inlined_call_operand.vmem [shape: f32[1,32], index: 2, kind: input, shape index: {}]
  %s3 = inlined_call_operand.vmem [shape: bf16[32,32], index: 3, kind: input, shape index: {}]
  %s4 = inlined_call_operand.vmem [shape: f32[3,32], index: 4, kind: output, shape index: {}]
  %s5 = sld [smem:[#allocation0]]
  $region26: #{custom_clip_forward.35} parent=0
    _
  %s7 = ssub.s32 1, %s5
  %s8 = scalar_select 0, %s7, %s5
  // Predicated region
  $region2: #{custom_clip_forward.35} parent=0 // pred_check
    _
  $region3: #{custom_clip_forward.35} parent=0 // pred_check_branch
    %10 = sbr.rel (0) target = $region5
  $region4: #{custom_clip_forward.35} parent=0 // pred_region
    _
  $region5: #{custom_clip_forward.35} parent=0 // pred_fallthru
    _
  // Predicated region
  $region6: #{custom_clip_forward.35} parent=0 // pred_check
    _
  $region7: #{custom_clip_forward.35} parent=0 // pred_check_branch
    %12 = sbr.rel (0) target = $region9
  $region8: #{custom_clip_forward.35} parent=0 // pred_region
    _
  $region9: #{custom_clip_forward.35} parent=0 // pred_fallthru
    _
  // Predicated region
  $region10: #{custom_clip_forward.35} parent=0 // pred_check
    _
  $region11: #{custom_clip_forward.35} parent=0 // pred_check_branch
    %14 = sbr.rel (0) target = $region13
  $region12: #{custom_clip_forward.35} parent=0 // pred_region
    _
  $region13: #{custom_clip_forward.35} parent=0 // pred_fallthru
    _
  // Predicated region
  $region14: #{custom_clip_forward.35} parent=0 // pred_check
    _
  $region15: #{custom_clip_forward.35} parent=0 // pred_check_branch
    %16 = sbr.rel (0) target = $region17
  $region16: #{custom_clip_forward.35} parent=0 // pred_region
    _
  $region17: #{custom_clip_forward.35} parent=0 // pred_fallthru
    _
  %v18 = vld [vmem:[%s0] sm:$0x7]
  %vm19 = vcmask 256000
  %v20 = vsel %vm19, %v18, 0.0
  %21 = vadd.xlane.f32.xlu0 %v20
  %v22 = vpop.xlane.xlu0 %21
  %v23 = vrcp.pop 32.0
  %v24 = vmul.f32 %v22, %v23
  %v25 = vsub.f32 %v18, %v24
  %v26 = vmul.f32 %v25, %v25
  %v27 = vsel %vm19, %v26, 0.0
  %28 = vadd.xlane.f32.xlu0 %v27
  %v29 = vpop.xlane.xlu0 %28
  %v30 = vmul.f32 %v29, %v23
  %v31 = vadd.f32 %v30, 1e-05
  %v32 = vrsqrt.pop %v31
  %v33 = vmul.f32 %v25, %v32
  %v34 = vld [vmem:[%s1] sm:$0x1]
  %v36 = vlaneseq
  %v37 = vshrl.u32 %v36, 7
  %v38 = vsub.s32 0, %v37
  %v39 = vrot.slane %v34, %v38
  %v41 = vmul.f32 %v33, %v39
  %v42 = vld [vmem:[%s2] sm:$0x1]
  %v44 = vlaneseq
  %v45 = vshrl.u32 %v44, 7
  %v46 = vsub.s32 0, %v45
  %v47 = vrot.slane %v42, %v46
  %v49 = vadd.f32 %v41, %v47
  %v50 = vpack.c.bf16 %v49, %v49
  %v51 = vld [vmem:[%s3] sm:$0xf]
  %v52 = vld [vmem:[%s3 + $0x4] sm:$0xf]
  %v53 = vld [vmem:[%s3 + $0x8] sm:$0xf]
  %v54 = vld [vmem:[%s3 + $0xc] sm:$0xf]
  %v59 = vunpack.c.l.b16 %v51
  %v60 = vunpack.c.l.b16 %v52
  %v61 = vunpack.c.l.b16 %v53
  %v62 = vunpack.c.l.b16 %v54
  %v63 = vpack.c.b16 %v60, %v59
  %v64 = vpack.c.b16 %v62, %v61
  %vm67 = vcmask 261120
  %v69 = vsel %vm67, %v50, 0
  %71 = vmatprep.subr.bf16.mxu0 0
  %72 = vmatpush1.bf16.msra.mxu0 %v63
  %73 = vmatprep.subr.bf16.mxu0 0
  %74 = vmatpush1.bf16.msra.mxu0 %v64
  %75 = vmatprep.subr.bf16.mxu0 0
  %76 = vmatpush1.bf16.msra.mxu0 0
  %77 = vmatprep.subr.bf16.mxu0 0
  %78 = vmatpush1.bf16.msra.mxu0 0
  %79 = vmatprep.subr.bf16.mxu0 0
  %80 = vmatpush1.bf16.msra.mxu0 0
  %81 = vmatprep.subr.bf16.mxu0 0
  %82 = vmatpush1.bf16.msra.mxu0 0
  %83 = vmatprep.subr.bf16.mxu0 0
  %84 = vmatpush1.bf16.msra.mxu0 0
  %85 = vmatprep.subr.bf16.mxu0 0
  %86 = vmatpush1.bf16.msra.mxu0 0
  %87 = vmatprep.subr.bf16.mxu0 0
  %88 = vmatpush1.bf16.msra.mxu0 0
  %89 = vmatprep.subr.bf16.mxu0 0
  %90 = vmatpush1.bf16.msra.mxu0 0
  %91 = vmatprep.subr.bf16.mxu0 0
  %92 = vmatpush1.bf16.msra.mxu0 0
  %93 = vmatprep.subr.bf16.mxu0 0
  %94 = vmatpush1.bf16.msra.mxu0 0
  %95 = vmatprep.subr.bf16.mxu0 0
  %96 = vmatpush1.bf16.msra.mxu0 0
  %97 = vmatprep.subr.bf16.mxu0 0
  %98 = vmatpush1.bf16.msra.mxu0 0
  %99 = vmatprep.subr.bf16.mxu0 0
  %100 = vmatpush1.bf16.msra.mxu0 0
  %101 = vmatprep.subr.bf16.mxu0 0
  %102 = vmatpush1.bf16.msra.mxu0 0
  %103 = vmatprep.mubr.bf16.mxu0 0
  %104 = vmatmul.mubr.bf16.gmra.mrb[0].mxu0 %v69
  %v105 = vpop.f32.mrb[0].mxu0
  %v106 = vadd.f32 0.0, %v105
  %v107 = vpop.f32.mrb[0].mxu0
  %v108 = vpop.f32.mrb[0].mxu0
  %v109 = vpop.f32.mrb[0].mxu0
  %110 = vdwg.mxu0
  %111 = vst.msk [vmem:[%s4] sm:$0x7] %vm19, %v106
  // Predicated region
  $region18: #{custom_clip_forward.35} parent=0 // pred_check
    _
  $region19: #{custom_clip_forward.35} parent=0 // pred_check_branch
    %113 = sbr.rel (0) target = $region21
  $region20: #{custom_clip_forward.35} parent=0 // pred_region
    _
  $region21: #{custom_clip_forward.35} parent=0 // pred_fallthru
    _
  // Predicated region
  $region22: #{custom_clip_forward.35} parent=0 // pred_check
    _
  $region23: #{custom_clip_forward.35} parent=0 // pred_check_branch
    %115 = sbr.rel (0) target = $region25
  $region24: #{custom_clip_forward.35} parent=0 // pred_region
    _
  $region25: #{custom_clip_forward.35} parent=0 // pred_fallthru
    _

// kernel: custom_clip_forward.49
$region0: #{custom_clip_forward.49}
  #allocation0 [shape = 'u32[]', space=smem, size = 0x4, offset = 0x4, fixed_abs, tag = 'smem constant byte address 0x4 - core index']
  #allocation1 [shape = 'u32[144,128]{1,0:T(1,128)}', space=vmem, size = 0x12000, scoped, tag = 'internal scratch']
  #allocation2 [shape = 'f32[1,1]{1,0:T(1,128)S(6)}', space=smem, size = 0x200, scoped, tag = 'scoped memory for custom_clip_forward.49']
  %s0 = inlined_call_operand.vmem [shape: f32[2,32], index: 0, kind: input, shape index: {}]
  %s1 = inlined_call_operand.vmem [shape: f32[3,32], index: 1, kind: input, shape index: {}]
  %s2 = inlined_call_operand.<no memory space> [shape: f32[1,1], index: 2, kind: input, shape index: {}]
  %s3 = inlined_call_operand.hbm [shape: f32[2,3], index: 3, kind: output, shape index: {}]
  %s4 = sld [smem:[#allocation0]]
  $region22: #{custom_clip_forward.49} parent=0
    _
  %s6 = ssub.s32 1, %s4
  %s7 = scalar_select 0, %s6, %s4
  %8 = sst [smem:[#allocation2]] %s2
  $region1: #{custom_clip_forward.49} parent=0
    #allocation3 [shape = 'u8[1024]{0}', space=vmem, size = 0x400, scoped, tag = 'output window, operand 0, single buffered']
    #allocation4 [shape = 's32[1]{0}', space=sflag, size = 0x4, scoped, tag = 'scoped memory for custom_clip_forward.49']
    %9 = vsyncpa [#allocation4], 0
    // Predicated region
    $region2: #{custom_clip_forward.49} parent=1 // pred_check
      _
    $region3: #{custom_clip_forward.49} parent=1 // pred_check_branch
      %11 = sbr.rel (0) target = $region5
    $region4: #{custom_clip_forward.49} parent=1 // pred_region
      _
    $region5: #{custom_clip_forward.49} parent=1 // pred_fallthru
      _
    // Predicated region
    $region6: #{custom_clip_forward.49} parent=1 // pred_check
      _
    $region7: #{custom_clip_forward.49} parent=1 // pred_check_branch
      %13 = sbr.rel (0) target = $region9
    $region8: #{custom_clip_forward.49} parent=1 // pred_region
      _
    $region9: #{custom_clip_forward.49} parent=1 // pred_fallthru
      _
    // Predicated region
    $region10: #{custom_clip_forward.49} parent=1 // pred_check
      _
    $region11: #{custom_clip_forward.49} parent=1 // pred_check_branch
      %15 = sbr.rel (0) target = $region13
    $region12: #{custom_clip_forward.49} parent=1 // pred_region
      _
    $region13: #{custom_clip_forward.49} parent=1 // pred_fallthru
      _
    %v16 = vld [vmem:[%s0] sm:$0x3]
    %v17 = vld [vmem:[%s1] sm:$0x7]
    %v18 = vmul.f32 %v16, %v16
    %vm19 = vcmask 254976
    %v20 = vsel %vm19, %v18, 0.0
    %21 = vadd.xlane.f32.xlu0 %v20
    %v22 = vpop.xlane.xlu0 %21
    %v23 = vrsqrt.pop %v22
    %v24 = vmul.f32 %v16, %v23
    %v25 = vmul.f32 %v17, %v17
    %vm26 = vcmask 256000
    %v27 = vsel %vm26, %v25, 0.0
    %28 = vadd.xlane.f32.xlu0 %v27
    %v29 = vpop.xlane.xlu0 %28
    %v30 = vrsqrt.pop %v29
    %v31 = vmul.f32 %v17, %v30
    %s32 = sld [smem:[#allocation2]]
    %vm33 = vcmask 261120
    %v35 = vsel %vm33, %v24, 0
    %v38 = vsel %vm33, %v31, 0
    %40 = vmatprep.subr.mxu0 0.0
    %41 = vmatpush1.xpose.msra.mxu0 %v38
    %42 = vmatprep.subr.mxu0 0.0
    %43 = vmatpush1.xpose.msra.mxu0 0.0
    %44 = vmatprep.subr.mxu0 0.0
    %45 = vmatpush1.xpose.msra.mxu0 0.0
    %46 = vmatprep.subr.mxu0 0.0
    %47 = vmatpush1.xpose.msra.mxu0 0.0
    %48 = vmatprep.subr.mxu0 0.0
    %49 = vmatpush1.xpose.msra.mxu0 0.0
    %50 = vmatprep.subr.mxu0 0.0
    %51 = vmatpush1.xpose.msra.mxu0 0.0
    %52 = vmatprep.subr.mxu0 0.0
    %53 = vmatpush1.xpose.msra.mxu0 0.0
    %54 = vmatprep.subr.mxu0 0.0
    %55 = vmatpush1.xpose.msra.mxu0 0.0
    %56 = vmatprep.subr.mxu0 0.0
    %57 = vmatpush1.xpose.msra.mxu0 0.0
    %58 = vmatprep.subr.mxu0 0.0
    %59 = vmatpush1.xpose.msra.mxu0 0.0
    %60 = vmatprep.subr.mxu0 0.0
    %61 = vmatpush1.xpose.msra.mxu0 0.0
    %62 = vmatprep.subr.mxu0 0.0
    %63 = vmatpush1.xpose.msra.mxu0 0.0
    %64 = vmatprep.subr.mxu0 0.0
    %65 = vmatpush1.xpose.msra.mxu0 0.0
    %66 = vmatprep.subr.mxu0 0.0
    %67 = vmatpush1.xpose.msra.mxu0 0.0
    %68 = vmatprep.subr.mxu0 0.0
    %69 = vmatpush1.xpose.msra.mxu0 0.0
    %70 = vmatprep.subr.mxu0 0.0
    %71 = vmatpush1.xpose.msra.mxu0 0.0
    %72 = vmatprep.subr.mxu0 0.0
    %73 = vmatpush1.xpose.msra.mxu0 0.0
    %74 = vmatprep.subr.mxu0 0.0
    %75 = vmatpush1.xpose.msra.mxu0 0.0
    %76 = vmatprep.subr.mxu0 0.0
    %77 = vmatpush1.xpose.msra.mxu0 0.0
    %78 = vmatprep.subr.mxu0 0.0
    %79 = vmatpush1.xpose.msra.mxu0 0.0
    %80 = vmatprep.subr.mxu0 0.0
    %81 = vmatpush1.xpose.msra.mxu0 0.0
    %82 = vmatprep.subr.mxu0 0.0
    %83 = vmatpush1.xpose.msra.mxu0 0.0
    %84 = vmatprep.subr.mxu0 0.0
    %85 = vmatpush1.xpose.msra.mxu0 0.0
    %86 = vmatprep.subr.mxu0 0.0
    %87 = vmatpush1.xpose.msra.mxu0 0.0
    %88 = vmatprep.subr.mxu0 0.0
    %89 = vmatpush1.xpose.msra.mxu0 0.0
    %90 = vmatprep.subr.mxu0 0.0
    %91 = vmatpush1.xpose.msra.mxu0 0.0
    %92 = vmatprep.subr.mxu0 0.0
    %93 = vmatpush1.xpose.msra.mxu0 0.0
    %94 = vmatprep.subr.mxu0 0.0
    %95 = vmatpush1.xpose.msra.mxu0 0.0
    %96 = vmatprep.subr.mxu0 0.0
    %97 = vmatpush1.xpose.msra.mxu0 0.0
    %98 = vmatprep.subr.mxu0 0.0
    %99 = vmatpush1.xpose.msra.mxu0 0.0
    %100 = vmatprep.subr.mxu0 0.0
    %101 = vmatpush1.xpose.msra.mxu0 0.0
    %102 = vmatprep.subr.mxu0 0.0
    %103 = vmatpush1.xpose.msra.mxu0 0.0
    %104 = vmatprep.mubr.f32.mxu0 0.0
    %105 = vmatmul.mubr.f32.gmra.mrb[0].mxu0 %v35
    %v106 = vpop.f32.mrb[0].mxu0
    %v107 = vadd.f32 0.0, %v106
    %v108 = vpop.f32.mrb[0].mxu0
    %109 = vdwg.mxu0
    %v110 = vstv %s32
    %v111 = vmul.f32 %v110, %v107
    %vm112 = vcmask 17408
    %113 = vst.msk [vmem:[#allocation3] sm:$0x3] %vm112, %v111
    // Predicated region
    $region14: #{custom_clip_forward.49} parent=1 // pred_check
      _
    $region15: #{custom_clip_forward.49} parent=1 // pred_check_branch
      %115 = sbr.rel (0) target = $region17
    $region16: #{custom_clip_forward.49} parent=1 // pred_region
      %s117 = ssub.s32 32, 32
      %118 = vsyncadd [#allocation4], %s117
      %s120 = sshll.u32 [#allocation3], 4
      %s121 = int_to_ptr.vmem [resolvable:$true] %s120
      %123 = dma.vmem_to_hbm [thread:$0]  %s121, 32, %s3, [#allocation4]
    $region17: #{custom_clip_forward.49} parent=1 // pred_fallthru
      _
    // Predicated region
    $region18: #{custom_clip_forward.49} parent=1 // pred_check
      _
    $region19: #{custom_clip_forward.49} parent=1 // pred_check_branch
      %125 = sbr.rel (0) target = $region21
    $region20: #{custom_clip_forward.49} parent=1 // pred_region
      %126 = dma.done [#allocation4], 32
    $region21: #{custom_clip_forward.49} parent=1 // pred_fallthru
      _
    %127 = vsyncpa [#allocation4], 1

</llo_original>
